<compile_context>
chip_gen: v5e
topology: v5e:2x2
jax: 0.10.0
libtpu: 0.0.40
codegen_flags: <defaults>
</compile_context>

<pallas_src>
import functools

import jax
import jax.numpy as jnp
from jax.experimental import pallas as pl
from jax.experimental.pallas import tpu as pltpu

VMEM_SPEC = pl.BlockSpec(memory_space=pltpu.MemorySpace.VMEM)
_VMEM_LIMIT = 64 * 1024 * 1024        # conservative for v7x (64 MiB); fine on v5e/v6e


def _row_tile(m, target=512):
    """Largest row tile <= target that divides m (multiple of 8), else full m."""
    if m <= target:
        return m
    for t in range(target, 7, -8):
        if m % t == 0:
            return t
    return m


def _stationary(shape):
    """Weight-stationary BlockSpec: constant index_map, single-buffered when the
    running JAX supports pipeline_mode (weights never change across the grid,
    so the second pipeline buffer is wasted VMEM — matters most on v7x)."""
    idx = lambda *_: (0,) * len(shape)
    try:
        return pl.BlockSpec(shape, idx, pipeline_mode=pl.Buffered(1))
    except Exception:  # older jax without pipeline_mode / Buffered
        return pl.BlockSpec(shape, idx)


def _cparams(*sems):
    return pltpu.CompilerParams(dimension_semantics=sems,
                                vmem_limit_bytes=_VMEM_LIMIT)


# ----------------------------------------------------------------------------
# Kernel: plain linear (fused QKV projection)
# ----------------------------------------------------------------------------
def _linear_kernel(x_ref, w_ref, b_ref, o_ref):
    y = jnp.dot(x_ref[...], w_ref[...], preferred_element_type=jnp.float32)
    y = y + b_ref[...]
    o_ref[...] = y.astype(o_ref.dtype)


def linear(x, w, b, out_dtype=jnp.bfloat16, row_tile=512):
    M, K = x.shape
    N = w.shape[1]
    tm = _row_tile(M, row_tile)
    return pl.pallas_call(
        _linear_kernel,
        out_shape=jax.ShapeDtypeStruct((M, N), out_dtype),
        grid_spec=pltpu.PrefetchScalarGridSpec(
            num_scalar_prefetch=0,
            grid=(M // tm,),
            in_specs=[
                pl.BlockSpec((tm, K), lambda i: (i, 0)),
                _stationary((K, N)),
                _stationary((1, N)),
            ],
            out_specs=pl.BlockSpec((tm, N), lambda i: (i, 0)),
        ),
        compiler_params=_cparams("parallel"),
    )(x, w, b)


# ----------------------------------------------------------------------------
# Kernel: LayerNorm (embedding LN)
# ----------------------------------------------------------------------------
def _layernorm_kernel(x_ref, g_ref, b_ref, o_ref, *, eps):
    x = x_ref[...].astype(jnp.float32)
    mu = jnp.mean(x, axis=-1, keepdims=True)
    xc = x - mu
    var = jnp.mean(xc * xc, axis=-1, keepdims=True)
    inv = jax.lax.rsqrt(var + eps)
    o_ref[...] = (xc * inv * g_ref[...] + b_ref[...]).astype(o_ref.dtype)


def layernorm(x, gamma, beta, eps=1e-12, out_dtype=jnp.bfloat16, row_tile=512):
    M, H = x.shape
    tm = _row_tile(M, row_tile)
    return pl.pallas_call(
        functools.partial(_layernorm_kernel, eps=eps),
        out_shape=jax.ShapeDtypeStruct((M, H), out_dtype),
        grid_spec=pltpu.PrefetchScalarGridSpec(
            num_scalar_prefetch=0,
            grid=(M // tm,),
            in_specs=[
                pl.BlockSpec((tm, H), lambda i: (i, 0)),
                _stationary((1, H)),
                _stationary((1, H)),
            ],
            out_specs=pl.BlockSpec((tm, H), lambda i: (i, 0)),
        ),
        compiler_params=_cparams("parallel"),
    )(x, gamma, beta)


# ----------------------------------------------------------------------------
# Kernel: fused  (x @ W + b) + residual  ->  LayerNorm
# ----------------------------------------------------------------------------
def _proj_residual_ln_kernel(x_ref, r_ref, w_ref, b_ref, g_ref, be_ref, o_ref, *, eps):
    y = jnp.dot(x_ref[...], w_ref[...], preferred_element_type=jnp.float32)
    y = y + b_ref[...] + r_ref[...].astype(jnp.float32)
    mu = jnp.mean(y, axis=-1, keepdims=True)
    yc = y - mu
    var = jnp.mean(yc * yc, axis=-1, keepdims=True)
    inv = jax.lax.rsqrt(var + eps)
    o_ref[...] = (yc * inv * g_ref[...] + be_ref[...]).astype(o_ref.dtype)


def proj_residual_ln(x, residual, w, b, gamma, beta, eps=1e-12, row_tile=512):
    M, K = x.shape
    N = w.shape[1]
    tm = _row_tile(M, row_tile)
    return pl.pallas_call(
        functools.partial(_proj_residual_ln_kernel, eps=eps),
        out_shape=jax.ShapeDtypeStruct((M, N), jnp.bfloat16),
        grid_spec=pltpu.PrefetchScalarGridSpec(
            num_scalar_prefetch=0,
            grid=(M // tm,),
            in_specs=[
                pl.BlockSpec((tm, K), lambda i: (i, 0)),
                pl.BlockSpec((tm, N), lambda i: (i, 0)),
                _stationary((K, N)),
                _stationary((1, N)),
                _stationary((1, N)),
                _stationary((1, N)),
            ],
            out_specs=pl.BlockSpec((tm, N), lambda i: (i, 0)),
        ),
        compiler_params=_cparams("parallel"),
    )(x, residual, w, b, gamma, beta)


# ----------------------------------------------------------------------------
# Kernel: fused FFN  W_in -> GELU(tanh) -> W_out -> +residual -> LayerNorm
# ----------------------------------------------------------------------------
def _ffn_kernel(x_ref, wi_ref, bi_ref, wo_ref, bo_ref, g_ref, be_ref, o_ref, *, eps):
    x = x_ref[...]
    h = jnp.dot(x, wi_ref[...], preferred_element_type=jnp.float32) + bi_ref[...]
    # tanh-GELU: goes to the EUP slot; ~1e-3 deviation vs. BERT's exact erf-GELU.
    h = jax.nn.gelu(h, approximate=True)
    y = jnp.dot(h.astype(x.dtype), wo_ref[...], preferred_element_type=jnp.float32)
    y = y + bo_ref[...] + x.astype(jnp.float32)
    mu = jnp.mean(y, axis=-1, keepdims=True)
    yc = y - mu
    var = jnp.mean(yc * yc, axis=-1, keepdims=True)
    inv = jax.lax.rsqrt(var + eps)
    o_ref[...] = (yc * inv * g_ref[...] + be_ref[...]).astype(o_ref.dtype)


def ffn_residual_ln(x, w_in, b_in, w_out, b_out, gamma, beta, eps=1e-12, row_tile=256):
    # row_tile stays at 256: (tm x I) f32 GELU intermediate + W_in/W_out must fit
    # v7x's 64 MiB VMEM.  Bump to 512 on v5e/v6e if profiling shows headroom.
    M, H = x.shape
    I = w_in.shape[1]
    tm = _row_tile(M, row_tile)
    return pl.pallas_call(
        functools.partial(_ffn_kernel, eps=eps),
        out_shape=jax.ShapeDtypeStruct((M, H), jnp.bfloat16),
        grid_spec=pltpu.PrefetchScalarGridSpec(
            num_scalar_prefetch=0,
            grid=(M // tm,),
            in_specs=[
                pl.BlockSpec((tm, H), lambda i: (i, 0)),
                _stationary((H, I)),
                _stationary((1, I)),
                _stationary((I, H)),
                _stationary((1, H)),
                _stationary((1, H)),
                _stationary((1, H)),
            ],
            out_specs=pl.BlockSpec((tm, H), lambda i: (i, 0)),
        ),
        compiler_params=_cparams("parallel"),
    )(x, w_in, b_in, w_out, b_out, gamma, beta)


# ----------------------------------------------------------------------------
# Kernel: attention reading Q/K/V directly from the fused [B, S, 3H] buffer.
# Grid = (B, S//tq); heads are looped inside the kernel; the per-head contexts
# are concatenated into a single lane-dense [tq, H] store (no masked vst, no
# post-kernel head-merge transpose).
# ----------------------------------------------------------------------------
def _attention_kernel(q_ref, k_ref, v_ref, bias_ref, o_ref, *,
                      num_heads, head_dim, scale):
    d = head_dim
    q_rows = q_ref[0]                         # [tq, H]  bf16 (Q columns of QKV)
    k_rows = k_ref[0]                         # [S,  H]  bf16 (K columns of QKV)
    v_rows = v_ref[0]                         # [S,  H]  bf16 (V columns of QKV)
    bias = bias_ref[0].astype(jnp.float32)    # [1,  S]  additive mask, broadcast

    outs = []
    for h in range(num_heads):                # static unroll over heads
        q = q_rows[:, h * d:(h + 1) * d]
        k = k_rows[:, h * d:(h + 1) * d]
        v = v_rows[:, h * d:(h + 1) * d]
        # QK^T contracting on d (no pre-transposed K needed).
        s = jax.lax.dot_general(q, k, (((1,), (1,)), ((), ())),
                                preferred_element_type=jnp.float32) * scale
        s = s + bias
        m = jnp.max(s, axis=-1, keepdims=True)
        p = jnp.exp(s - m)
        denom = jnp.sum(p, axis=-1, keepdims=True)   # >= 1 (max element contributes 1)
        p = p * pl.reciprocal(denom, approx=True)
        outs.append(jnp.dot(p.astype(v.dtype), v, preferred_element_type=jnp.float32))

    ctx = jnp.concatenate(outs, axis=-1)      # [tq, H] f32, single lane-dense store
    o_ref[0] = ctx.astype(o_ref.dtype)


def attention(qkv_bs3h, bias_b1s, num_heads, hidden):
    B, S, _ = qkv_bs3h.shape
    H = hidden
    d = H // num_heads
    scale = 1.0 / (d ** 0.5)
    tq = _row_tile(S, 256)                    # query-axis tiling bounds vreg pressure
    kernel = functools.partial(_attention_kernel, num_heads=num_heads,
                               head_dim=d, scale=scale)
    return pl.pallas_call(
        kernel,
        out_shape=jax.ShapeDtypeStruct((B, S, H), jnp.bfloat16),
        grid_spec=pltpu.PrefetchScalarGridSpec(
            num_scalar_prefetch=0,
            grid=(B, S // tq),
            in_specs=[
                # Same QKV buffer passed three times; column-block index selects Q/K/V.
                pl.BlockSpec((1, tq, H), lambda b, qi: (b, qi, 0)),   # Q rows (tiled)
                pl.BlockSpec((1, S, H), lambda b, qi: (b, 0, 1)),     # K rows (full)
                pl.BlockSpec((1, S, H), lambda b, qi: (b, 0, 2)),     # V rows (full)
                # [B, 1, S] additive mask — never materialized as [BH, S, S].
                pl.BlockSpec((1, 1, S), lambda b, qi: (b, 0, 0)),
            ],
            out_specs=pl.BlockSpec((1, tq, H), lambda b, qi: (b, qi, 0)),
        ),
        compiler_params=_cparams("parallel", "parallel"),
    )(qkv_bs3h, qkv_bs3h, qkv_bs3h, bias_b1s)


# ----------------------------------------------------------------------------
# Kernel: fused classifier head (lane-dense padded to 128-wide outputs)
# ----------------------------------------------------------------------------
def _classifier_kernel(x_ref, w1_ref, b1_ref, w2_ref, b2_ref, w3_ref, b3_ref, o_ref):
    # Linear(H,256) -> ReLU -> Dropout(0.3)[identity, eval] -> Linear(256,50pad)
    # -> ReLU -> Linear(50pad, 2pad)
    h = jnp.dot(x_ref[...], w1_ref[...], preferred_element_type=jnp.float32) + b1_ref[...]
    h = jnp.maximum(h, 0.0)
    h = jnp.dot(h.astype(w2_ref.dtype), w2_ref[...],
                preferred_element_type=jnp.float32) + b2_ref[...]
    h = jnp.maximum(h, 0.0)
    y = jnp.dot(h.astype(w3_ref.dtype), w3_ref[...],
                preferred_element_type=jnp.float32) + b3_ref[...]
    o_ref[...] = y.astype(o_ref.dtype)


def classifier_head(cls, p):
    B = cls.shape[0]
    Np = p["cls_w3"].shape[1]                 # padded output width (128)
    return pl.pallas_call(
        _classifier_kernel,
        out_shape=jax.ShapeDtypeStruct((B, Np), jnp.float32),
        in_specs=[VMEM_SPEC] * 7,
        out_specs=VMEM_SPEC,
        compiler_params=pltpu.CompilerParams(vmem_limit_bytes=_VMEM_LIMIT),
    )(cls, p["cls_w1"], p["cls_b1"], p["cls_w2"], p["cls_b2"],
      p["cls_w3"], p["cls_b3"])


# ----------------------------------------------------------------------------
# BERT encoder orchestration
# ----------------------------------------------------------------------------
def bert_layer(x2d, bias_b1s, lp, B, S, H, num_heads):
    # Fused QKV projection: single [H, 3H] matmul -> [B*S, 3H] bf16.
    qkv = linear(x2d, lp["wqkv"], lp["bqkv"])
    # Reshape is layout-preserving (no transpose); attention indexes Q/K/V column
    # blocks directly via BlockSpec index_map, so no head split/merge in XLA.
    ctx = attention(qkv.reshape(B, S, 3 * H), bias_b1s, num_heads, H)   # [B, S, H]
    ctx2d = ctx.reshape(B * S, H)

    # attention output projection + residual + LayerNorm, fused
    x2d = proj_residual_ln(ctx2d, x2d, lp["wo"], lp["bo"], lp["ln1_g"], lp["ln1_b"])
    # FFN (dense -> gelu -> dense) + residual + LayerNorm, fused
    x2d = ffn_residual_ln(x2d, lp["w_in"], lp["b_in"], lp["w_out"], lp["b_out"],
                          lp["ln2_g"], lp["ln2_b"])
    return x2d


def bert_classifier_forward(input_ids, attention_mask, params, cfg):
    B, S = input_ids.shape
    H, num_heads = cfg["hidden"], cfg["heads"]

    # --- embeddings (gathers are XLA glue; LayerNorm is a Pallas kernel) ---
    positions = jnp.arange(S)
    emb = (params["word_emb"][input_ids]
           + params["pos_emb"][positions][None, :, :]
           + params["type_emb"][0][None, None, :])                 # token_type_ids = 0
    x2d = layernorm(emb.reshape(B * S, H), params["emb_ln_g"], params["emb_ln_b"])

    # --- extended attention mask, kept tiny: [B, 1, S] additive bias ---
    bias_b1s = ((1.0 - attention_mask.astype(jnp.float32)) * -10000.0)[:, None, :]

    # --- transformer layers ---
    for lp in params["layers"]:
        x2d = bert_layer(x2d, bias_b1s, lp, B, S, H, num_heads)

    cls = x2d.reshape(B, S, H)[:, 0, :]                            # outputs[0][:, 0, :]

    # --- classifier head (fused, lane-dense-padded) ---
    logits_pad = classifier_head(cls, params)
    return logits_pad[:, :cfg["d_out"]]


# ----------------------------------------------------------------------------
# Deterministic parameter init (shapes follow the module, scaled-down BERT)
# ----------------------------------------------------------------------------
def init_params(key, cfg):
    H, I = cfg["hidden"], cfg["intermediate"]
    keys = iter(jax.random.split(key, 256))

    def w(shape, scale=0.02, dtype=jnp.bfloat16):
        return (scale * jax.random.normal(next(keys), shape, dtype=jnp.float32)).astype(dtype)

    p = {
        "word_emb": w((cfg["vocab"], H), dtype=jnp.float32),
        "pos_emb": w((cfg["max_pos"], H), dtype=jnp.float32),
        "type_emb": w((cfg["type_vocab"], H), dtype=jnp.float32),
        "emb_ln_g": jnp.ones((1, H), jnp.float32),
        "emb_ln_b": jnp.zeros((1, H), jnp.float32),
        "layers": [],
    }
    for _ in range(cfg["layers"]):
        p["layers"].append({
            # fused QKV weight: concat(Wq, Wk, Wv) along the output axis; per-head
            # columns inside each H-wide block follow the standard BERT head split.
            "wqkv": w((H, 3 * H)), "bqkv": jnp.zeros((1, 3 * H), jnp.float32),
            "wo": w((H, H)), "bo": jnp.zeros((1, H), jnp.float32),
            "ln1_g": jnp.ones((1, H), jnp.float32), "ln1_b": jnp.zeros((1, H), jnp.float32),
            "w_in": w((H, I)), "b_in": jnp.zeros((1, I), jnp.float32),
            "w_out": w((I, H)), "b_out": jnp.zeros((1, H), jnp.float32),
            "ln2_g": jnp.ones((1, H), jnp.float32), "ln2_b": jnp.zeros((1, H), jnp.float32),
        })

    # classifier: Linear(H,256) / Linear(256,50) / Linear(50,2), padded lane-dense.
    d1, d2, dout = cfg["d_cls1"], cfg["d_cls2"], cfg["d_out"]
    d2p, doutp = cfg["d_cls2_pad"], cfg["d_out_pad"]
    w2 = w((d1, d2))
    w3 = w((d2, dout))
    p["cls_w1"] = w((H, d1))
    p["cls_b1"] = jnp.zeros((1, d1), jnp.float32)
    p["cls_w2"] = jnp.zeros((d1, d2p), jnp.bfloat16).at[:, :d2].set(w2)
    p["cls_b2"] = jnp.zeros((1, d2p), jnp.float32)
    p["cls_w3"] = jnp.zeros((d2p, doutp), jnp.bfloat16).at[:d2, :dout].set(w3)
    p["cls_b3"] = jnp.zeros((1, doutp), jnp.float32)
    return p


if __name__ == "__main__":
    # Small config consistent with the module (BERT-base scaled down:
    # hidden 768->128, 12->2 layers, 12->2 heads; classifier 256/50/2 kept,
    # with the 50- and 2-wide layers zero-padded to 128 lanes).
    cfg = dict(vocab=100, max_pos=16, type_vocab=2,
               hidden=128, heads=2, layers=2, intermediate=512,
               d_cls1=256, d_cls2=50, d_out=2, d_cls2_pad=128, d_out_pad=128)
    B, S = 2, 8

    root = jax.random.PRNGKey(0)
    k_params, k_ids = jax.random.split(root)
    params = init_params(k_params, cfg)

    input_ids = jax.random.randint(k_ids, (B, S), 0, cfg["vocab"], dtype=jnp.int32)
    attention_mask = jnp.ones((B, S), dtype=jnp.int32).at[1, 6:].set(0)  # 2nd seq padded

    fwd = jax.jit(functools.partial(bert_classifier_forward, cfg=cfg))
    logits = fwd(input_ids, attention_mask, params)
    jax.block_until_ready(logits)
    assert logits.shape == (B, cfg["d_out"])
    print("KERNEL_OK")
</pallas_src>

<mosaic_0001>
module attributes {stable_mosaic.version = 11 : i64} {
  func.func @_layernorm_kernel(%arg0: i32, %arg1: memref<16x128xf32, #tpu.memory_space<vmem>>, %arg2: memref<1x128xf32, #tpu.memory_space<vmem>>, %arg3: memref<1x128xf32, #tpu.memory_space<vmem>>, %arg4: memref<16x128xbf16, #tpu.memory_space<vmem>>) attributes {dimension_semantics = [#tpu.dimension_semantics<parallel>], iteration_bounds = array<i64: 1>, scalar_prefetch = 0 : i64, scratch_operands = 0 : i64, tpu.core_type = #tpu.core_type<tc>, window_params = [{transform_indices = @transform_0, window_bounds = array<i64: 16, 128>}, {pipeline_mode = #tpu.pipeline_mode<synchronous>, transform_indices = @transform_1, window_bounds = array<i64: 1, 128>}, {pipeline_mode = #tpu.pipeline_mode<synchronous>, transform_indices = @transform_2, window_bounds = array<i64: 1, 128>}, {transform_indices = @transform_3, window_bounds = array<i64: 16, 128>}]} {
    %c0 = arith.constant 0 : index
    %c0_0 = arith.constant 0 : index
    %0 = vector.load %arg1[%c0, %c0_0] : memref<16x128xf32, #tpu.memory_space<vmem>>, vector<16x128xf32>
    %cst = arith.constant dense<0.000000e+00> : vector<16xf32>
    %1 = vector.multi_reduction <add>, %0, %cst [1] : vector<16x128xf32> to vector<16xf32>
    %2 = vector.shape_cast %1 : vector<16xf32> to vector<16x1xf32>
    %cst_1 = arith.constant 1.280000e+02 : f32
    %3 = vector.broadcast %cst_1 : f32 to vector<16x1xf32>
    %4 = arith.divf %2, %3 : vector<16x1xf32>
    %5 = vector.broadcast %4 : vector<16x1xf32> to vector<16x128xf32>
    %6 = arith.subf %0, %5 : vector<16x128xf32>
    %7 = arith.mulf %6, %6 : vector<16x128xf32>
    %cst_2 = arith.constant dense<0.000000e+00> : vector<16xf32>
    %8 = vector.multi_reduction <add>, %7, %cst_2 [1] : vector<16x128xf32> to vector<16xf32>
    %9 = vector.shape_cast %8 : vector<16xf32> to vector<16x1xf32>
    %cst_3 = arith.constant 1.280000e+02 : f32
    %10 = vector.broadcast %cst_3 : f32 to vector<16x1xf32>
    %11 = arith.divf %9, %10 : vector<16x1xf32>
    %cst_4 = arith.constant 9.99999996E-13 : f32
    %12 = vector.broadcast %cst_4 : f32 to vector<16x1xf32>
    %13 = arith.addf %11, %12 : vector<16x1xf32>
    %14 = math.rsqrt %13 : vector<16x1xf32>
    %15 = vector.broadcast %14 : vector<16x1xf32> to vector<16x128xf32>
    %16 = arith.mulf %6, %15 : vector<16x128xf32>
    %c0_5 = arith.constant 0 : index
    %c0_6 = arith.constant 0 : index
    %17 = vector.load %arg2[%c0_5, %c0_6] : memref<1x128xf32, #tpu.memory_space<vmem>>, vector<1x128xf32>
    %18 = vector.broadcast %17 : vector<1x128xf32> to vector<16x128xf32>
    %19 = arith.mulf %16, %18 : vector<16x128xf32>
    %c0_7 = arith.constant 0 : index
    %c0_8 = arith.constant 0 : index
    %20 = vector.load %arg3[%c0_7, %c0_8] : memref<1x128xf32, #tpu.memory_space<vmem>>, vector<1x128xf32>
    %21 = vector.broadcast %20 : vector<1x128xf32> to vector<16x128xf32>
    %22 = arith.addf %19, %21 : vector<16x128xf32>
    %23 = arith.truncf %22 : vector<16x128xf32> to vector<16x128xbf16>
    %c0_9 = arith.constant 0 : index
    %c0_10 = arith.constant 0 : index
    %24 = vector.load %arg4[%c0_9, %c0_10] : memref<16x128xbf16, #tpu.memory_space<vmem>>, vector<16x128xbf16>
    tpu.vector_store %arg4[%c0_9, %c0_10], %23 {strides = array<i32>} : memref<16x128xbf16, #tpu.memory_space<vmem>>, vector<16x128xbf16>,
    return
  }
  func.func @transform_0(%arg0: i32) -> (i32, i32) {
    %c0_i32 = arith.constant 0 : i32
    %c0_i32_0 = arith.constant 0 : i32
    return %arg0, %c0_i32 : i32, i32
  }
  func.func @transform_1(%arg0: i32) -> (i32, i32) {
    %c0_i32 = arith.constant 0 : i32
    %c0_i32_0 = arith.constant 0 : i32
    %c0_i32_1 = arith.constant 0 : i32
    return %c0_i32, %c0_i32_0 : i32, i32
  }
  func.func @transform_2(%arg0: i32) -> (i32, i32) {
    %c0_i32 = arith.constant 0 : i32
    %c0_i32_0 = arith.constant 0 : i32
    %c0_i32_1 = arith.constant 0 : i32
    return %c0_i32, %c0_i32_0 : i32, i32
  }
  func.func @transform_3(%arg0: i32) -> (i32, i32) {
    %c0_i32 = arith.constant 0 : i32
    %c0_i32_0 = arith.constant 0 : i32
    return %arg0, %c0_i32 : i32, i32
  }
}

module attributes {stable_mosaic.version = 11 : i64} {
  func.func @_proj_residual_ln_kernel(%arg0: i32, %arg1: memref<16x128xbf16, #tpu.memory_space<vmem>>, %arg2: memref<16x128xbf16, #tpu.memory_space<vmem>>, %arg3: memref<128x128xbf16, #tpu.memory_space<vmem>>, %arg4: memref<1x128xf32, #tpu.memory_space<vmem>>, %arg5: memref<1x128xf32, #tpu.memory_space<vmem>>, %arg6: memref<1x128xf32, #tpu.memory_space<vmem>>, %arg7: memref<16x128xbf16, #tpu.memory_space<vmem>>) attributes {dimension_semantics = [#tpu.dimension_semantics<parallel>], iteration_bounds = array<i64: 1>, scalar_prefetch = 0 : i64, scratch_operands = 0 : i64, tpu.core_type = #tpu.core_type<tc>, window_params = [{transform_indices = @transform_0, window_bounds = array<i64: 16, 128>}, {transform_indices = @transform_1, window_bounds = array<i64: 16, 128>}, {pipeline_mode = #tpu.pipeline_mode<synchronous>, transform_indices = @transform_2, window_bounds = array<i64: 128, 128>}, {pipeline_mode = #tpu.pipeline_mode<synchronous>, transform_indices = @transform_3, window_bounds = array<i64: 1, 128>}, {pipeline_mode = #tpu.pipeline_mode<synchronous>, transform_indices = @transform_4, window_bounds = array<i64: 1, 128>}, {pipeline_mode = #tpu.pipeline_mode<synchronous>, transform_indices = @transform_5, window_bounds = array<i64: 1, 128>}, {transform_indices = @transform_6, window_bounds = array<i64: 16, 128>}]} {
    %c0 = arith.constant 0 : index
    %c0_0 = arith.constant 0 : index
    %0 = vector.load %arg1[%c0, %c0_0] : memref<16x128xbf16, #tpu.memory_space<vmem>>, vector<16x128xbf16>
    %c0_1 = arith.constant 0 : index
    %c0_2 = arith.constant 0 : index
    %1 = vector.load %arg3[%c0_1, %c0_2] : memref<128x128xbf16, #tpu.memory_space<vmem>>, vector<128x128xbf16>
    %cst = arith.constant dense<0.000000e+00> : vector<16x128xf32>
    %2 = tpu.matmul %0, %1, %cst {dimension_numbers = #tpu.dot_dimension_numbers<[1], [0], [0], [1], [0, 0, 1, 1], [], []>} : vector<16x128xbf16>, vector<128x128xbf16>, vector<16x128xf32> -> vector<16x128xf32>
    %c0_3 = arith.constant 0 : index
    %c0_4 = arith.constant 0 : index
    %3 = vector.load %arg4[%c0_3, %c0_4] : memref<1x128xf32, #tpu.memory_space<vmem>>, vector<1x128xf32>
    %4 = vector.broadcast %3 : vector<1x128xf32> to vector<16x128xf32>
    %5 = arith.addf %2, %4 : vector<16x128xf32>
    %c0_5 = arith.constant 0 : index
    %c0_6 = arith.constant 0 : index
    %6 = vector.load %arg2[%c0_5, %c0_6] : memref<16x128xbf16, #tpu.memory_space<vmem>>, vector<16x128xbf16>
    %7 = arith.extf %6 : vector<16x128xbf16> to vector<16x128xf32>
    %8 = arith.addf %5, %7 : vector<16x128xf32>
    %cst_7 = arith.constant dense<0.000000e+00> : vector<16xf32>
    %9 = vector.multi_reduction <add>, %8, %cst_7 [1] : vector<16x128xf32> to vector<16xf32>
    %10 = vector.shape_cast %9 : vector<16xf32> to vector<16x1xf32>
    %cst_8 = arith.constant 1.280000e+02 : f32
    %11 = vector.broadcast %cst_8 : f32 to vector<16x1xf32>
    %12 = arith.divf %10, %11 : vector<16x1xf32>
    %13 = vector.broadcast %12 : vector<16x1xf32> to vector<16x128xf32>
    %14 = arith.subf %8, %13 : vector<16x128xf32>
    %15 = arith.mulf %14, %14 : vector<16x128xf32>
    %cst_9 = arith.constant dense<0.000000e+00> : vector<16xf32>
    %16 = vector.multi_reduction <add>, %15, %cst_9 [1] : vector<16x128xf32> to vector<16xf32>
    %17 = vector.shape_cast %16 : vector<16xf32> to vector<16x1xf32>
    %cst_10 = arith.constant 1.280000e+02 : f32
    %18 = vector.broadcast %cst_10 : f32 to vector<16x1xf32>
    %19 = arith.divf %17, %18 : vector<16x1xf32>
    %cst_11 = arith.constant 9.99999996E-13 : f32
    %20 = vector.broadcast %cst_11 : f32 to vector<16x1xf32>
    %21 = arith.addf %19, %20 : vector<16x1xf32>
    %22 = math.rsqrt %21 : vector<16x1xf32>
    %23 = vector.broadcast %22 : vector<16x1xf32> to vector<16x128xf32>
    %24 = arith.mulf %14, %23 : vector<16x128xf32>
    %c0_12 = arith.constant 0 : index
    %c0_13 = arith.constant 0 : index
    %25 = vector.load %arg5[%c0_12, %c0_13] : memref<1x128xf32, #tpu.memory_space<vmem>>, vector<1x128xf32>
    %26 = vector.broadcast %25 : vector<1x128xf32> to vector<16x128xf32>
    %27 = arith.mulf %24, %26 : vector<16x128xf32>
    %c0_14 = arith.constant 0 : index
    %c0_15 = arith.constant 0 : index
    %28 = vector.load %arg6[%c0_14, %c0_15] : memref<1x128xf32, #tpu.memory_space<vmem>>, vector<1x128xf32>
    %29 = vector.broadcast %28 : vector<1x128xf32> to vector<16x128xf32>
    %30 = arith.addf %27, %29 : vector<16x128xf32>
    %31 = arith.truncf %30 : vector<16x128xf32> to vector<16x128xbf16>
    %c0_16 = arith.constant 0 : index
    %c0_17 = arith.constant 0 : index
    %32 = vector.load %arg7[%c0_16, %c0_17] : memref<16x128xbf16, #tpu.memory_space<vmem>>, vector<16x128xbf16>
    tpu.vector_store %arg7[%c0_16, %c0_17], %31 {strides = array<i32>} : memref<16x128xbf16, #tpu.memory_space<vmem>>, vector<16x128xbf16>,
    return
  }
  func.func @transform_0(%arg0: i32) -> (i32, i32) {
    %c0_i32 = arith.constant 0 : i32
    %c0_i32_0 = arith.constant 0 : i32
    return %arg0, %c0_i32 : i32, i32
  }
  func.func @transform_1(%arg0: i32) -> (i32, i32) {
    %c0_i32 = arith.constant 0 : i32
    %c0_i32_0 = arith.constant 0 : i32
    return %arg0, %c0_i32 : i32, i32
  }
  func.func @transform_2(%arg0: i32) -> (i32, i32) {
    %c0_i32 = arith.constant 0 : i32
    %c0_i32_0 = arith.constant 0 : i32
    %c0_i32_1 = arith.constant 0 : i32
    return %c0_i32, %c0_i32_0 : i32, i32
  }
  func.func @transform_3(%arg0: i32) -> (i32, i32) {
    %c0_i32 = arith.constant 0 : i32
    %c0_i32_0 = arith.constant 0 : i32
    %c0_i32_1 = arith.constant 0 : i32
    return %c0_i32, %c0_i32_0 : i32, i32
  }
  func.func @transform_4(%arg0: i32) -> (i32, i32) {
    %c0_i32 = arith.constant 0 : i32
    %c0_i32_0 = arith.constant 0 : i32
    %c0_i32_1 = arith.constant 0 : i32
    return %c0_i32, %c0_i32_0 : i32, i32
  }
  func.func @transform_5(%arg0: i32) -> (i32, i32) {
    %c0_i32 = arith.constant 0 : i32
    %c0_i32_0 = arith.constant 0 : i32
    %c0_i32_1 = arith.constant 0 : i32
    return %c0_i32, %c0_i32_0 : i32, i32
  }
  func.func @transform_6(%arg0: i32) -> (i32, i32) {
    %c0_i32 = arith.constant 0 : i32
    %c0_i32_0 = arith.constant 0 : i32
    return %arg0, %c0_i32 : i32, i32
  }
}

module attributes {stable_mosaic.version = 11 : i64} {
  func.func @_linear_kernel(%arg0: i32, %arg1: memref<16x128xbf16, #tpu.memory_space<vmem>>, %arg2: memref<128x384xbf16, #tpu.memory_space<vmem>>, %arg3: memref<1x384xf32, #tpu.memory_space<vmem>>, %arg4: memref<16x384xbf16, #tpu.memory_space<vmem>>) attributes {dimension_semantics = [#tpu.dimension_semantics<parallel>], iteration_bounds = array<i64: 1>, scalar_prefetch = 0 : i64, scratch_operands = 0 : i64, tpu.core_type = #tpu.core_type<tc>, window_params = [{transform_indices = @transform_0, window_bounds = array<i64: 16, 128>}, {pipeline_mode = #tpu.pipeline_mode<synchronous>, transform_indices = @transform_1, window_bounds = array<i64: 128, 384>}, {pipeline_mode = #tpu.pipeline_mode<synchronous>, transform_indices = @transform_2, window_bounds = array<i64: 1, 384>}, {transform_indices = @transform_3, window_bounds = array<i64: 16, 384>}]} {
    %c0 = arith.constant 0 : index
    %c0_0 = arith.constant 0 : index
    %0 = vector.load %arg1[%c0, %c0_0] : memref<16x128xbf16, #tpu.memory_space<vmem>>, vector<16x128xbf16>
    %c0_1 = arith.constant 0 : index
    %c0_2 = arith.constant 0 : index
    %1 = vector.load %arg2[%c0_1, %c0_2] : memref<128x384xbf16, #tpu.memory_space<vmem>>, vector<128x384xbf16>
    %cst = arith.constant dense<0.000000e+00> : vector<16x384xf32>
    %2 = tpu.matmul %0, %1, %cst {dimension_numbers = #tpu.dot_dimension_numbers<[1], [0], [0], [1], [0, 0, 1, 1], [], []>} : vector<16x128xbf16>, vector<128x384xbf16>, vector<16x384xf32> -> vector<16x384xf32>
    %c0_3 = arith.constant 0 : index
    %c0_4 = arith.constant 0 : index
    %3 = vector.load %arg3[%c0_3, %c0_4] : memref<1x384xf32, #tpu.memory_space<vmem>>, vector<1x384xf32>
    %4 = vector.broadcast %3 : vector<1x384xf32> to vector<16x384xf32>
    %5 = arith.addf %2, %4 : vector<16x384xf32>
    %6 = arith.truncf %5 : vector<16x384xf32> to vector<16x384xbf16>
    %c0_5 = arith.constant 0 : index
    %c0_6 = arith.constant 0 : index
    %7 = vector.load %arg4[%c0_5, %c0_6] : memref<16x384xbf16, #tpu.memory_space<vmem>>, vector<16x384xbf16>
    tpu.vector_store %arg4[%c0_5, %c0_6], %6 {strides = array<i32>} : memref<16x384xbf16, #tpu.memory_space<vmem>>, vector<16x384xbf16>,
    return
  }
  func.func @transform_0(%arg0: i32) -> (i32, i32) {
    %c0_i32 = arith.constant 0 : i32
    %c0_i32_0 = arith.constant 0 : i32
    return %arg0, %c0_i32 : i32, i32
  }
  func.func @transform_1(%arg0: i32) -> (i32, i32) {
    %c0_i32 = arith.constant 0 : i32
    %c0_i32_0 = arith.constant 0 : i32
    %c0_i32_1 = arith.constant 0 : i32
    return %c0_i32, %c0_i32_0 : i32, i32
  }
  func.func @transform_2(%arg0: i32) -> (i32, i32) {
    %c0_i32 = arith.constant 0 : i32
    %c0_i32_0 = arith.constant 0 : i32
    %c0_i32_1 = arith.constant 0 : i32
    return %c0_i32, %c0_i32_0 : i32, i32
  }
  func.func @transform_3(%arg0: i32) -> (i32, i32) {
    %c0_i32 = arith.constant 0 : i32
    %c0_i32_0 = arith.constant 0 : i32
    return %arg0, %c0_i32 : i32, i32
  }
}

module attributes {stable_mosaic.version = 11 : i64} {
  func.func @_attention_kernel(%arg0: i32, %arg1: i32, %arg2: memref<1x8x128xbf16, #tpu.memory_space<vmem>>, %arg3: memref<1x8x128xbf16, #tpu.memory_space<vmem>>, %arg4: memref<1x8x128xbf16, #tpu.memory_space<vmem>>, %arg5: memref<1x1x8xf32, #tpu.memory_space<vmem>>, %arg6: memref<1x8x128xbf16, #tpu.memory_space<vmem>>) attributes {dimension_semantics = [#tpu.dimension_semantics<parallel>, #tpu.dimension_semantics<parallel>], iteration_bounds = array<i64: 2, 1>, scalar_prefetch = 0 : i64, scratch_operands = 0 : i64, tpu.core_type = #tpu.core_type<tc>, window_params = [{transform_indices = @transform_0, window_bounds = array<i64: 1, 8, 128>}, {transform_indices = @transform_1, window_bounds = array<i64: 1, 8, 128>}, {transform_indices = @transform_2, window_bounds = array<i64: 1, 8, 128>}, {transform_indices = @transform_3, window_bounds = array<i64: 1, 1, 8>}, {transform_indices = @transform_4, window_bounds = array<i64: 1, 8, 128>}]} {
    %c0 = arith.constant 0 : index
    %c0_0 = arith.constant 0 : index
    %c0_1 = arith.constant 0 : index
    %0 = vector.load %arg2[%c0, %c0_0, %c0_1] : memref<1x8x128xbf16, #tpu.memory_space<vmem>>, vector<1x8x128xbf16>
    %1 = vector.shape_cast %0 : vector<1x8x128xbf16> to vector<8x128xbf16>
    %c0_2 = arith.constant 0 : index
    %c0_3 = arith.constant 0 : index
    %c0_4 = arith.constant 0 : index
    %2 = vector.load %arg3[%c0_2, %c0_3, %c0_4] : memref<1x8x128xbf16, #tpu.memory_space<vmem>>, vector<1x8x128xbf16>
    %3 = vector.shape_cast %2 : vector<1x8x128xbf16> to vector<8x128xbf16>
    %c0_5 = arith.constant 0 : index
    %c0_6 = arith.constant 0 : index
    %c0_7 = arith.constant 0 : index
    %4 = vector.load %arg4[%c0_5, %c0_6, %c0_7] : memref<1x8x128xbf16, #tpu.memory_space<vmem>>, vector<1x8x128xbf16>
    %5 = vector.shape_cast %4 : vector<1x8x128xbf16> to vector<8x128xbf16>
    %c0_8 = arith.constant 0 : index
    %c0_9 = arith.constant 0 : index
    %c0_10 = arith.constant 0 : index
    %6 = vector.load %arg5[%c0_8, %c0_9, %c0_10] : memref<1x1x8xf32, #tpu.memory_space<vmem>>, vector<1x1x8xf32>
    %7 = vector.shape_cast %6 : vector<1x1x8xf32> to vector<1x8xf32>
    %8 = vector.extract_strided_slice %1 {offsets = [0, 0], sizes = [8, 64], strides = [1, 1]} : vector<8x128xbf16> to vector<8x64xbf16>
    %9 = vector.extract_strided_slice %3 {offsets = [0, 0], sizes = [8, 64], strides = [1, 1]} : vector<8x128xbf16> to vector<8x64xbf16>
    %10 = vector.extract_strided_slice %5 {offsets = [0, 0], sizes = [8, 64], strides = [1, 1]} : vector<8x128xbf16> to vector<8x64xbf16>
    %cst = arith.constant dense<0.000000e+00> : vector<8x8xf32>
    %11 = tpu.matmul %8, %9, %cst {dimension_numbers = #tpu.dot_dimension_numbers<[1], [1], [0], [0], [0, 0, 1, 0], [], []>} : vector<8x64xbf16>, vector<8x64xbf16>, vector<8x8xf32> -> vector<8x8xf32>
    %cst_11 = arith.constant 1.250000e-01 : f32
    %12 = vector.broadcast %cst_11 : f32 to vector<8x8xf32>
    %13 = arith.mulf %11, %12 : vector<8x8xf32>
    %14 = vector.broadcast %7 : vector<1x8xf32> to vector<8x8xf32>
    %15 = arith.addf %13, %14 : vector<8x8xf32>
    %cst_12 = arith.constant dense<0xFF800000> : vector<8xf32>
    %16 = vector.multi_reduction <maximumf>, %15, %cst_12 [1] : vector<8x8xf32> to vector<8xf32>
    %17 = vector.shape_cast %16 : vector<8xf32> to vector<8x1xf32>
    %18 = vector.broadcast %17 : vector<8x1xf32> to vector<8x8xf32>
    %19 = arith.subf %15, %18 : vector<8x8xf32>
    %20 = math.exp %19 : vector<8x8xf32>
    %cst_13 = arith.constant dense<0.000000e+00> : vector<8xf32>
    %21 = vector.multi_reduction <add>, %20, %cst_13 [1] : vector<8x8xf32> to vector<8xf32>
    %22 = vector.shape_cast %21 : vector<8xf32> to vector<8x1xf32>
    %23 = tpu.reciprocal %22 {approx = true} : vector<8x1xf32> -> vector<8x1xf32>
    %24 = vector.broadcast %23 : vector<8x1xf32> to vector<8x8xf32>
    %25 = arith.mulf %20, %24 : vector<8x8xf32>
    %26 = arith.truncf %25 : vector<8x8xf32> to vector<8x8xbf16>
    %cst_14 = arith.constant dense<0.000000e+00> : vector<8x64xf32>
    %27 = tpu.matmul %26, %10, %cst_14 {dimension_numbers = #tpu.dot_dimension_numbers<[1], [0], [0], [1], [0, 0, 1, 1], [], []>} : vector<8x8xbf16>, vector<8x64xbf16>, vector<8x64xf32> -> vector<8x64xf32>
    %28 = vector.extract_strided_slice %1 {offsets = [0, 64], sizes = [8, 64], strides = [1, 1]} : vector<8x128xbf16> to vector<8x64xbf16>
    %29 = vector.extract_strided_slice %3 {offsets = [0, 64], sizes = [8, 64], strides = [1, 1]} : vector<8x128xbf16> to vector<8x64xbf16>
    %30 = vector.extract_strided_slice %5 {offsets = [0, 64], sizes = [8, 64], strides = [1, 1]} : vector<8x128xbf16> to vector<8x64xbf16>
    %cst_15 = arith.constant dense<0.000000e+00> : vector<8x8xf32>
    %31 = tpu.matmul %28, %29, %cst_15 {dimension_numbers = #tpu.dot_dimension_numbers<[1], [1], [0], [0], [0, 0, 1, 0], [], []>} : vector<8x64xbf16>, vector<8x64xbf16>, vector<8x8xf32> -> vector<8x8xf32>
    %cst_16 = arith.constant 1.250000e-01 : f32
    %32 = vector.broadcast %cst_16 : f32 to vector<8x8xf32>
    %33 = arith.mulf %31, %32 : vector<8x8xf32>
    %34 = vector.broadcast %7 : vector<1x8xf32> to vector<8x8xf32>
    %35 = arith.addf %33, %34 : vector<8x8xf32>
    %cst_17 = arith.constant dense<0xFF800000> : vector<8xf32>
    %36 = vector.multi_reduction <maximumf>, %35, %cst_17 [1] : vector<8x8xf32> to vector<8xf32>
    %37 = vector.shape_cast %36 : vector<8xf32> to vector<8x1xf32>
    %38 = vector.broadcast %37 : vector<8x1xf32> to vector<8x8xf32>
    %39 = arith.subf %35, %38 : vector<8x8xf32>
    %40 = math.exp %39 : vector<8x8xf32>
    %cst_18 = arith.constant dense<0.000000e+00> : vector<8xf32>
    %41 = vector.multi_reduction <add>, %40, %cst_18 [1] : vector<8x8xf32> to vector<8xf32>
    %42 = vector.shape_cast %41 : vector<8xf32> to vector<8x1xf32>
    %43 = tpu.reciprocal %42 {approx = true} : vector<8x1xf32> -> vector<8x1xf32>
    %44 = vector.broadcast %43 : vector<8x1xf32> to vector<8x8xf32>
    %45 = arith.mulf %40, %44 : vector<8x8xf32>
    %46 = arith.truncf %45 : vector<8x8xf32> to vector<8x8xbf16>
    %cst_19 = arith.constant dense<0.000000e+00> : vector<8x64xf32>
    %47 = tpu.matmul %46, %30, %cst_19 {dimension_numbers = #tpu.dot_dimension_numbers<[1], [0], [0], [1], [0, 0, 1, 1], [], []>} : vector<8x8xbf16>, vector<8x64xbf16>, vector<8x64xf32> -> vector<8x64xf32>
    %48 = tpu.concatenate %27, %47 in 1 : vector<8x64xf32>, vector<8x64xf32> -> vector<8x128xf32>
    %49 = arith.truncf %48 : vector<8x128xf32> to vector<8x128xbf16>
    %c0_20 = arith.constant 0 : index
    %c0_21 = arith.constant 0 : index
    %c0_22 = arith.constant 0 : index
    %50 = vector.load %arg6[%c0_20, %c0_21, %c0_22] : memref<1x8x128xbf16, #tpu.memory_space<vmem>>, vector<1x8x128xbf16>
    %51 = vector.shape_cast %50 : vector<1x8x128xbf16> to vector<8x128xbf16>
    %52 = vector.shape_cast %49 : vector<8x128xbf16> to vector<1x8x128xbf16>
    tpu.vector_store %arg6[%c0_20, %c0_21, %c0_22], %52 {strides = array<i32>} : memref<1x8x128xbf16, #tpu.memory_space<vmem>>, vector<1x8x128xbf16>,
    return
  }
  func.func @transform_0(%arg0: i32, %arg1: i32) -> (i32, i32, i32) {
    %c0_i32 = arith.constant 0 : i32
    %c0_i32_0 = arith.constant 0 : i32
    return %arg0, %arg1, %c0_i32 : i32, i32, i32
  }
  func.func @transform_1(%arg0: i32, %arg1: i32) -> (i32, i32, i32) {
    %c0_i32 = arith.constant 0 : i32
    %c1_i32 = arith.constant 1 : i32
    %c0_i32_0 = arith.constant 0 : i32
    return %arg0, %c0_i32, %c1_i32 : i32, i32, i32
  }
  func.func @transform_2(%arg0: i32, %arg1: i32) -> (i32, i32, i32) {
    %c0_i32 = arith.constant 0 : i32
    %c2_i32 = arith.constant 2 : i32
    %c0_i32_0 = arith.constant 0 : i32
    return %arg0, %c0_i32, %c2_i32 : i32, i32, i32
  }
  func.func @transform_3(%arg0: i32, %arg1: i32) -> (i32, i32, i32) {
    %c0_i32 = arith.constant 0 : i32
    %c0_i32_0 = arith.constant 0 : i32
    %c0_i32_1 = arith.constant 0 : i32
    return %arg0, %c0_i32, %c0_i32_0 : i32, i32, i32
  }
  func.func @transform_4(%arg0: i32, %arg1: i32) -> (i32, i32, i32) {
    %c0_i32 = arith.constant 0 : i32
    %c0_i32_0 = arith.constant 0 : i32
    return %arg0, %arg1, %c0_i32 : i32, i32, i32
  }
}

module attributes {stable_mosaic.version = 11 : i64} {
  func.func @_ffn_kernel(%arg0: i32, %arg1: memref<16x128xbf16, #tpu.memory_space<vmem>>, %arg2: memref<128x512xbf16, #tpu.memory_space<vmem>>, %arg3: memref<1x512xf32, #tpu.memory_space<vmem>>, %arg4: memref<512x128xbf16, #tpu.memory_space<vmem>>, %arg5: memref<1x128xf32, #tpu.memory_space<vmem>>, %arg6: memref<1x128xf32, #tpu.memory_space<vmem>>, %arg7: memref<1x128xf32, #tpu.memory_space<vmem>>, %arg8: memref<16x128xbf16, #tpu.memory_space<vmem>>) attributes {dimension_semantics = [#tpu.dimension_semantics<parallel>], iteration_bounds = array<i64: 1>, scalar_prefetch = 0 : i64, scratch_operands = 0 : i64, tpu.core_type = #tpu.core_type<tc>, window_params = [{transform_indices = @transform_0, window_bounds = array<i64: 16, 128>}, {pipeline_mode = #tpu.pipeline_mode<synchronous>, transform_indices = @transform_1, window_bounds = array<i64: 128, 512>}, {pipeline_mode = #tpu.pipeline_mode<synchronous>, transform_indices = @transform_2, window_bounds = array<i64: 1, 512>}, {pipeline_mode = #tpu.pipeline_mode<synchronous>, transform_indices = @transform_3, window_bounds = array<i64: 512, 128>}, {pipeline_mode = #tpu.pipeline_mode<synchronous>, transform_indices = @transform_4, window_bounds = array<i64: 1, 128>}, {pipeline_mode = #tpu.pipeline_mode<synchronous>, transform_indices = @transform_5, window_bounds = array<i64: 1, 128>}, {pipeline_mode = #tpu.pipeline_mode<synchronous>, transform_indices = @transform_6, window_bounds = array<i64: 1, 128>}, {transform_indices = @transform_7, window_bounds = array<i64: 16, 128>}]} {
    %c0 = arith.constant 0 : index
    %c0_0 = arith.constant 0 : index
    %0 = vector.load %arg1[%c0, %c0_0] : memref<16x128xbf16, #tpu.memory_space<vmem>>, vector<16x128xbf16>
    %c0_1 = arith.constant 0 : index
    %c0_2 = arith.constant 0 : index
    %1 = vector.load %arg2[%c0_1, %c0_2] : memref<128x512xbf16, #tpu.memory_space<vmem>>, vector<128x512xbf16>
    %cst = arith.constant dense<0.000000e+00> : vector<16x512xf32>
    %2 = tpu.matmul %0, %1, %cst {dimension_numbers = #tpu.dot_dimension_numbers<[1], [0], [0], [1], [0, 0, 1, 1], [], []>} : vector<16x128xbf16>, vector<128x512xbf16>, vector<16x512xf32> -> vector<16x512xf32>
    %c0_3 = arith.constant 0 : index
    %c0_4 = arith.constant 0 : index
    %3 = vector.load %arg3[%c0_3, %c0_4] : memref<1x512xf32, #tpu.memory_space<vmem>>, vector<1x512xf32>
    %4 = vector.broadcast %3 : vector<1x512xf32> to vector<16x512xf32>
    %5 = arith.addf %2, %4 : vector<16x512xf32>
    %6 = arith.mulf %5, %5 : vector<16x512xf32>
    %7 = arith.mulf %5, %6 : vector<16x512xf32>
    %cst_5 = arith.constant 4.471500e-02 : f32
    %8 = vector.broadcast %cst_5 : f32 to vector<16x512xf32>
    %9 = arith.mulf %8, %7 : vector<16x512xf32>
    %10 = arith.addf %5, %9 : vector<16x512xf32>
    %cst_6 = arith.constant 0.797884583 : f32
    %11 = vector.broadcast %cst_6 : f32 to vector<16x512xf32>
    %12 = arith.mulf %11, %10 : vector<16x512xf32>
    %13 = math.tanh %12 : vector<16x512xf32>
    %cst_7 = arith.constant 1.000000e+00 : f32
    %14 = vector.broadcast %cst_7 : f32 to vector<16x512xf32>
    %15 = arith.addf %14, %13 : vector<16x512xf32>
    %cst_8 = arith.constant 5.000000e-01 : f32
    %16 = vector.broadcast %cst_8 : f32 to vector<16x512xf32>
    %17 = arith.mulf %16, %15 : vector<16x512xf32>
    %18 = arith.mulf %5, %17 : vector<16x512xf32>
    %19 = arith.truncf %18 : vector<16x512xf32> to vector<16x512xbf16>
    %c0_9 = arith.constant 0 : index
    %c0_10 = arith.constant 0 : index
    %20 = vector.load %arg4[%c0_9, %c0_10] : memref<512x128xbf16, #tpu.memory_space<vmem>>, vector<512x128xbf16>
    %cst_11 = arith.constant dense<0.000000e+00> : vector<16x128xf32>
    %21 = tpu.matmul %19, %20, %cst_11 {dimension_numbers = #tpu.dot_dimension_numbers<[1], [0], [0], [1], [0, 0, 1, 1], [], []>} : vector<16x512xbf16>, vector<512x128xbf16>, vector<16x128xf32> -> vector<16x128xf32>
    %c0_12 = arith.constant 0 : index
    %c0_13 = arith.constant 0 : index
    %22 = vector.load %arg5[%c0_12, %c0_13] : memref<1x128xf32, #tpu.memory_space<vmem>>, vector<1x128xf32>
    %23 = vector.broadcast %22 : vector<1x128xf32> to vector<16x128xf32>
    %24 = arith.addf %21, %23 : vector<16x128xf32>
    %25 = arith.extf %0 : vector<16x128xbf16> to vector<16x128xf32>
    %26 = arith.addf %24, %25 : vector<16x128xf32>
    %cst_14 = arith.constant dense<0.000000e+00> : vector<16xf32>
    %27 = vector.multi_reduction <add>, %26, %cst_14 [1] : vector<16x128xf32> to vector<16xf32>
    %28 = vector.shape_cast %27 : vector<16xf32> to vector<16x1xf32>
    %cst_15 = arith.constant 1.280000e+02 : f32
    %29 = vector.broadcast %cst_15 : f32 to vector<16x1xf32>
    %30 = arith.divf %28, %29 : vector<16x1xf32>
    %31 = vector.broadcast %30 : vector<16x1xf32> to vector<16x128xf32>
    %32 = arith.subf %26, %31 : vector<16x128xf32>
    %33 = arith.mulf %32, %32 : vector<16x128xf32>
    %cst_16 = arith.constant dense<0.000000e+00> : vector<16xf32>
    %34 = vector.multi_reduction <add>, %33, %cst_16 [1] : vector<16x128xf32> to vector<16xf32>
    %35 = vector.shape_cast %34 : vector<16xf32> to vector<16x1xf32>
    %cst_17 = arith.constant 1.280000e+02 : f32
    %36 = vector.broadcast %cst_17 : f32 to vector<16x1xf32>
    %37 = arith.divf %35, %36 : vector<16x1xf32>
    %cst_18 = arith.constant 9.99999996E-13 : f32
    %38 = vector.broadcast %cst_18 : f32 to vector<16x1xf32>
    %39 = arith.addf %37, %38 : vector<16x1xf32>
    %40 = math.rsqrt %39 : vector<16x1xf32>
    %41 = vector.broadcast %40 : vector<16x1xf32> to vector<16x128xf32>
    %42 = arith.mulf %32, %41 : vector<16x128xf32>
    %c0_19 = arith.constant 0 : index
    %c0_20 = arith.constant 0 : index
    %43 = vector.load %arg6[%c0_19, %c0_20] : memref<1x128xf32, #tpu.memory_space<vmem>>, vector<1x128xf32>
    %44 = vector.broadcast %43 : vector<1x128xf32> to vector<16x128xf32>
    %45 = arith.mulf %42, %44 : vector<16x128xf32>
    %c0_21 = arith.constant 0 : index
    %c0_22 = arith.constant 0 : index
    %46 = vector.load %arg7[%c0_21, %c0_22] : memref<1x128xf32, #tpu.memory_space<vmem>>, vector<1x128xf32>
    %47 = vector.broadcast %46 : vector<1x128xf32> to vector<16x128xf32>
    %48 = arith.addf %45, %47 : vector<16x128xf32>
    %49 = arith.truncf %48 : vector<16x128xf32> to vector<16x128xbf16>
    %c0_23 = arith.constant 0 : index
    %c0_24 = arith.constant 0 : index
    %50 = vector.load %arg8[%c0_23, %c0_24] : memref<16x128xbf16, #tpu.memory_space<vmem>>, vector<16x128xbf16>
    tpu.vector_store %arg8[%c0_23, %c0_24], %49 {strides = array<i32>} : memref<16x128xbf16, #tpu.memory_space<vmem>>, vector<16x128xbf16>,
    return
  }
  func.func @transform_0(%arg0: i32) -> (i32, i32) {
    %c0_i32 = arith.constant 0 : i32
    %c0_i32_0 = arith.constant 0 : i32
    return %arg0, %c0_i32 : i32, i32
  }
  func.func @transform_1(%arg0: i32) -> (i32, i32) {
    %c0_i32 = arith.constant 0 : i32
    %c0_i32_0 = arith.constant 0 : i32
    %c0_i32_1 = arith.constant 0 : i32
    return %c0_i32, %c0_i32_0 : i32, i32
  }
  func.func @transform_2(%arg0: i32) -> (i32, i32) {
    %c0_i32 = arith.constant 0 : i32
    %c0_i32_0 = arith.constant 0 : i32
    %c0_i32_1 = arith.constant 0 : i32
    return %c0_i32, %c0_i32_0 : i32, i32
  }
  func.func @transform_3(%arg0: i32) -> (i32, i32) {
    %c0_i32 = arith.constant 0 : i32
    %c0_i32_0 = arith.constant 0 : i32
    %c0_i32_1 = arith.constant 0 : i32
    return %c0_i32, %c0_i32_0 : i32, i32
  }
  func.func @transform_4(%arg0: i32) -> (i32, i32) {
    %c0_i32 = arith.constant 0 : i32
    %c0_i32_0 = arith.constant 0 : i32
    %c0_i32_1 = arith.constant 0 : i32
    return %c0_i32, %c0_i32_0 : i32, i32
  }
  func.func @transform_5(%arg0: i32) -> (i32, i32) {
    %c0_i32 = arith.constant 0 : i32
    %c0_i32_0 = arith.constant 0 : i32
    %c0_i32_1 = arith.constant 0 : i32
    return %c0_i32, %c0_i32_0 : i32, i32
  }
  func.func @transform_6(%arg0: i32) -> (i32, i32) {
    %c0_i32 = arith.constant 0 : i32
    %c0_i32_0 = arith.constant 0 : i32
    %c0_i32_1 = arith.constant 0 : i32
    return %c0_i32, %c0_i32_0 : i32, i32
  }
  func.func @transform_7(%arg0: i32) -> (i32, i32) {
    %c0_i32 = arith.constant 0 : i32
    %c0_i32_0 = arith.constant 0 : i32
    return %arg0, %c0_i32 : i32, i32
  }
}

module attributes {stable_mosaic.version = 11 : i64} {
  func.func @_ffn_kernel(%arg0: i32, %arg1: memref<16x128xbf16, #tpu.memory_space<vmem>>, %arg2: memref<128x512xbf16, #tpu.memory_space<vmem>>, %arg3: memref<1x512xf32, #tpu.memory_space<vmem>>, %arg4: memref<512x128xbf16, #tpu.memory_space<vmem>>, %arg5: memref<1x128xf32, #tpu.memory_space<vmem>>, %arg6: memref<1x128xf32, #tpu.memory_space<vmem>>, %arg7: memref<1x128xf32, #tpu.memory_space<vmem>>, %arg8: memref<16x128xbf16, #tpu.memory_space<vmem>>) attributes {dimension_semantics = [#tpu.dimension_semantics<parallel>], iteration_bounds = array<i64: 1>, scalar_prefetch = 0 : i64, scratch_operands = 0 : i64, tpu.core_type = #tpu.core_type<tc>, window_params = [{transform_indices = @transform_0, window_bounds = array<i64: 16, 128>}, {pipeline_mode = #tpu.pipeline_mode<synchronous>, transform_indices = @transform_1, window_bounds = array<i64: 128, 512>}, {pipeline_mode = #tpu.pipeline_mode<synchronous>, transform_indices = @transform_2, window_bounds = array<i64: 1, 512>}, {pipeline_mode = #tpu.pipeline_mode<synchronous>, transform_indices = @transform_3, window_bounds = array<i64: 512, 128>}, {pipeline_mode = #tpu.pipeline_mode<synchronous>, transform_indices = @transform_4, window_bounds = array<i64: 1, 128>}, {pipeline_mode = #tpu.pipeline_mode<synchronous>, transform_indices = @transform_5, window_bounds = array<i64: 1, 128>}, {pipeline_mode = #tpu.pipeline_mode<synchronous>, transform_indices = @transform_6, window_bounds = array<i64: 1, 128>}, {transform_indices = @transform_7, window_bounds = array<i64: 16, 128>}]} {
    %c0 = arith.constant 0 : index
    %c0_0 = arith.constant 0 : index
    %0 = vector.load %arg1[%c0, %c0_0] : memref<16x128xbf16, #tpu.memory_space<vmem>>, vector<16x128xbf16>
    %c0_1 = arith.constant 0 : index
    %c0_2 = arith.constant 0 : index
    %1 = vector.load %arg2[%c0_1, %c0_2] : memref<128x512xbf16, #tpu.memory_space<vmem>>, vector<128x512xbf16>
    %cst = arith.constant dense<0.000000e+00> : vector<16x512xf32>
    %2 = tpu.matmul %0, %1, %cst {dimension_numbers = #tpu.dot_dimension_numbers<[1], [0], [0], [1], [0, 0, 1, 1], [], []>} : vector<16x128xbf16>, vector<128x512xbf16>, vector<16x512xf32> -> vector<16x512xf32>
    %c0_3 = arith.constant 0 : index
    %c0_4 = arith.constant 0 : index
    %3 = vector.load %arg3[%c0_3, %c0_4] : memref<1x512xf32, #tpu.memory_space<vmem>>, vector<1x512xf32>
    %4 = vector.broadcast %3 : vector<1x512xf32> to vector<16x512xf32>
    %5 = arith.addf %2, %4 : vector<16x512xf32>
    %6 = arith.mulf %5, %5 : vector<16x512xf32>
    %7 = arith.mulf %5, %6 : vector<16x512xf32>
    %cst_5 = arith.constant 4.471500e-02 : f32
    %8 = vector.broadcast %cst_5 : f32 to vector<16x512xf32>
    %9 = arith.mulf %8, %7 : vector<16x512xf32>
    %10 = arith.addf %5, %9 : vector<16x512xf32>
    %cst_6 = arith.constant 0.797884583 : f32
    %11 = vector.broadcast %cst_6 : f32 to vector<16x512xf32>
    %12 = arith.mulf %11, %10 : vector<16x512xf32>
    %13 = math.tanh %12 : vector<16x512xf32>
    %cst_7 = arith.constant 1.000000e+00 : f32
    %14 = vector.broadcast %cst_7 : f32 to vector<16x512xf32>
    %15 = arith.addf %14, %13 : vector<16x512xf32>
    %cst_8 = arith.constant 5.000000e-01 : f32
    %16 = vector.broadcast %cst_8 : f32 to vector<16x512xf32>
    %17 = arith.mulf %16, %15 : vector<16x512xf32>
    %18 = arith.mulf %5, %17 : vector<16x512xf32>
    %19 = arith.truncf %18 : vector<16x512xf32> to vector<16x512xbf16>
    %c0_9 = arith.constant 0 : index
    %c0_10 = arith.constant 0 : index
    %20 = vector.load %arg4[%c0_9, %c0_10] : memref<512x128xbf16, #tpu.memory_space<vmem>>, vector<512x128xbf16>
    %cst_11 = arith.constant dense<0.000000e+00> : vector<16x128xf32>
    %21 = tpu.matmul %19, %20, %cst_11 {dimension_numbers = #tpu.dot_dimension_numbers<[1], [0], [0], [1], [0, 0, 1, 1], [], []>} : vector<16x512xbf16>, vector<512x128xbf16>, vector<16x128xf32> -> vector<16x128xf32>
    %c0_12 = arith.constant 0 : index
    %c0_13 = arith.constant 0 : index
    %22 = vector.load %arg5[%c0_12, %c0_13] : memref<1x128xf32, #tpu.memory_space<vmem>>, vector<1x128xf32>
    %23 = vector.broadcast %22 : vector<1x128xf32> to vector<16x128xf32>
    %24 = arith.addf %21, %23 : vector<16x128xf32>
    %25 = arith.extf %0 : vector<16x128xbf16> to vector<16x128xf32>
    %26 = arith.addf %24, %25 : vector<16x128xf32>
    %cst_14 = arith.constant dense<0.000000e+00> : vector<16xf32>
    %27 = vector.multi_reduction <add>, %26, %cst_14 [1] : vector<16x128xf32> to vector<16xf32>
    %28 = vector.shape_cast %27 : vector<16xf32> to vector<16x1xf32>
    %cst_15 = arith.constant 1.280000e+02 : f32
    %29 = vector.broadcast %cst_15 : f32 to vector<16x1xf32>
    %30 = arith.divf %28, %29 : vector<16x1xf32>
    %31 = vector.broadcast %30 : vector<16x1xf32> to vector<16x128xf32>
    %32 = arith.subf %26, %31 : vector<16x128xf32>
    %33 = arith.mulf %32, %32 : vector<16x128xf32>
    %cst_16 = arith.constant dense<0.000000e+00> : vector<16xf32>
    %34 = vector.multi_reduction <add>, %33, %cst_16 [1] : vector<16x128xf32> to vector<16xf32>
    %35 = vector.shape_cast %34 : vector<16xf32> to vector<16x1xf32>
    %cst_17 = arith.constant 1.280000e+02 : f32
    %36 = vector.broadcast %cst_17 : f32 to vector<16x1xf32>
    %37 = arith.divf %35, %36 : vector<16x1xf32>
    %cst_18 = arith.constant 9.99999996E-13 : f32
    %38 = vector.broadcast %cst_18 : f32 to vector<16x1xf32>
    %39 = arith.addf %37, %38 : vector<16x1xf32>
    %40 = math.rsqrt %39 : vector<16x1xf32>
    %41 = vector.broadcast %40 : vector<16x1xf32> to vector<16x128xf32>
    %42 = arith.mulf %32, %41 : vector<16x128xf32>
    %c0_19 = arith.constant 0 : index
    %c0_20 = arith.constant 0 : index
    %43 = vector.load %arg6[%c0_19, %c0_20] : memref<1x128xf32, #tpu.memory_space<vmem>>, vector<1x128xf32>
    %44 = vector.broadcast %43 : vector<1x128xf32> to vector<16x128xf32>
    %45 = arith.mulf %42, %44 : vector<16x128xf32>
    %c0_21 = arith.constant 0 : index
    %c0_22 = arith.constant 0 : index
    %46 = vector.load %arg7[%c0_21, %c0_22] : memref<1x128xf32, #tpu.memory_space<vmem>>, vector<1x128xf32>
    %47 = vector.broadcast %46 : vector<1x128xf32> to vector<16x128xf32>
    %48 = arith.addf %45, %47 : vector<16x128xf32>
    %49 = arith.truncf %48 : vector<16x128xf32> to vector<16x128xbf16>
    %c0_23 = arith.constant 0 : index
    %c0_24 = arith.constant 0 : index
    %50 = vector.load %arg8[%c0_23, %c0_24] : memref<16x128xbf16, #tpu.memory_space<vmem>>, vector<16x128xbf16>
    tpu.vector_store %arg8[%c0_23, %c0_24], %49 {strides = array<i32>} : memref<16x128xbf16, #tpu.memory_space<vmem>>, vector<16x128xbf16>,
    return
  }
  func.func @transform_0(%arg0: i32) -> (i32, i32) {
    %c0_i32 = arith.constant 0 : i32
    %c0_i32_0 = arith.constant 0 : i32
    return %arg0, %c0_i32 : i32, i32
  }
  func.func @transform_1(%arg0: i32) -> (i32, i32) {
    %c0_i32 = arith.constant 0 : i32
    %c0_i32_0 = arith.constant 0 : i32
    %c0_i32_1 = arith.constant 0 : i32
    return %c0_i32, %c0_i32_0 : i32, i32
  }
  func.func @transform_2(%arg0: i32) -> (i32, i32) {
    %c0_i32 = arith.constant 0 : i32
    %c0_i32_0 = arith.constant 0 : i32
    %c0_i32_1 = arith.constant 0 : i32
    return %c0_i32, %c0_i32_0 : i32, i32
  }
  func.func @transform_3(%arg0: i32) -> (i32, i32) {
    %c0_i32 = arith.constant 0 : i32
    %c0_i32_0 = arith.constant 0 : i32
    %c0_i32_1 = arith.constant 0 : i32
    return %c0_i32, %c0_i32_0 : i32, i32
  }
  func.func @transform_4(%arg0: i32) -> (i32, i32) {
    %c0_i32 = arith.constant 0 : i32
    %c0_i32_0 = arith.constant 0 : i32
    %c0_i32_1 = arith.constant 0 : i32
    return %c0_i32, %c0_i32_0 : i32, i32
  }
  func.func @transform_5(%arg0: i32) -> (i32, i32) {
    %c0_i32 = arith.constant 0 : i32
    %c0_i32_0 = arith.constant 0 : i32
    %c0_i32_1 = arith.constant 0 : i32
    return %c0_i32, %c0_i32_0 : i32, i32
  }
  func.func @transform_6(%arg0: i32) -> (i32, i32) {
    %c0_i32 = arith.constant 0 : i32
    %c0_i32_0 = arith.constant 0 : i32
    %c0_i32_1 = arith.constant 0 : i32
    return %c0_i32, %c0_i32_0 : i32, i32
  }
  func.func @transform_7(%arg0: i32) -> (i32, i32) {
    %c0_i32 = arith.constant 0 : i32
    %c0_i32_0 = arith.constant 0 : i32
    return %arg0, %c0_i32 : i32, i32
  }
}

module attributes {stable_mosaic.version = 11 : i64} {
  func.func @_classifier_kernel(%arg0: memref<2x128xbf16, #tpu.memory_space<vmem>>, %arg1: memref<128x256xbf16, #tpu.memory_space<vmem>>, %arg2: memref<1x256xf32, #tpu.memory_space<vmem>>, %arg3: memref<256x128xbf16, #tpu.memory_space<vmem>>, %arg4: memref<1x128xf32, #tpu.memory_space<vmem>>, %arg5: memref<128x128xbf16, #tpu.memory_space<vmem>>, %arg6: memref<1x128xf32, #tpu.memory_space<vmem>>, %arg7: memref<2x128xf32, #tpu.memory_space<vmem>>) attributes {dimension_semantics = [], scalar_prefetch = 0 : i64, scratch_operands = 0 : i64, tpu.core_type = #tpu.core_type<tc>} {
    %c0 = arith.constant 0 : index
    %c0_0 = arith.constant 0 : index
    %0 = vector.load %arg0[%c0, %c0_0] : memref<2x128xbf16, #tpu.memory_space<vmem>>, vector<2x128xbf16>
    %c0_1 = arith.constant 0 : index
    %c0_2 = arith.constant 0 : index
    %1 = vector.load %arg1[%c0_1, %c0_2] : memref<128x256xbf16, #tpu.memory_space<vmem>>, vector<128x256xbf16>
    %cst = arith.constant dense<0.000000e+00> : vector<2x256xf32>
    %2 = tpu.matmul %0, %1, %cst {dimension_numbers = #tpu.dot_dimension_numbers<[1], [0], [0], [1], [0, 0, 1, 1], [], []>} : vector<2x128xbf16>, vector<128x256xbf16>, vector<2x256xf32> -> vector<2x256xf32>
    %c0_3 = arith.constant 0 : index
    %c0_4 = arith.constant 0 : index
    %3 = vector.load %arg2[%c0_3, %c0_4] : memref<1x256xf32, #tpu.memory_space<vmem>>, vector<1x256xf32>
    %4 = vector.broadcast %3 : vector<1x256xf32> to vector<2x256xf32>
    %5 = arith.addf %2, %4 : vector<2x256xf32>
    %cst_5 = arith.constant 0.000000e+00 : f32
    %6 = vector.broadcast %cst_5 : f32 to vector<2x256xf32>
    %7 = arith.maximumf %5, %6 : vector<2x256xf32>
    %8 = arith.truncf %7 : vector<2x256xf32> to vector<2x256xbf16>
    %c0_6 = arith.constant 0 : index
    %c0_7 = arith.constant 0 : index
    %9 = vector.load %arg3[%c0_6, %c0_7] : memref<256x128xbf16, #tpu.memory_space<vmem>>, vector<256x128xbf16>
    %cst_8 = arith.constant dense<0.000000e+00> : vector<2x128xf32>
    %10 = tpu.matmul %8, %9, %cst_8 {dimension_numbers = #tpu.dot_dimension_numbers<[1], [0], [0], [1], [0, 0, 1, 1], [], []>} : vector<2x256xbf16>, vector<256x128xbf16>, vector<2x128xf32> -> vector<2x128xf32>
    %c0_9 = arith.constant 0 : index
    %c0_10 = arith.constant 0 : index
    %11 = vector.load %arg4[%c0_9, %c0_10] : memref<1x128xf32, #tpu.memory_space<vmem>>, vector<1x128xf32>
    %12 = vector.broadcast %11 : vector<1x128xf32> to vector<2x128xf32>
    %13 = arith.addf %10, %12 : vector<2x128xf32>
    %cst_11 = arith.constant 0.000000e+00 : f32
    %14 = vector.broadcast %cst_11 : f32 to vector<2x128xf32>
    %15 = arith.maximumf %13, %14 : vector<2x128xf32>
    %16 = arith.truncf %15 : vector<2x128xf32> to vector<2x128xbf16>
    %c0_12 = arith.constant 0 : index
    %c0_13 = arith.constant 0 : index
    %17 = vector.load %arg5[%c0_12, %c0_13] : memref<128x128xbf16, #tpu.memory_space<vmem>>, vector<128x128xbf16>
    %cst_14 = arith.constant dense<0.000000e+00> : vector<2x128xf32>
    %18 = tpu.matmul %16, %17, %cst_14 {dimension_numbers = #tpu.dot_dimension_numbers<[1], [0], [0], [1], [0, 0, 1, 1], [], []>} : vector<2x128xbf16>, vector<128x128xbf16>, vector<2x128xf32> -> vector<2x128xf32>
    %c0_15 = arith.constant 0 : index
    %c0_16 = arith.constant 0 : index
    %19 = vector.load %arg6[%c0_15, %c0_16] : memref<1x128xf32, #tpu.memory_space<vmem>>, vector<1x128xf32>
    %20 = vector.broadcast %19 : vector<1x128xf32> to vector<2x128xf32>
    %21 = arith.addf %18, %20 : vector<2x128xf32>
    %c0_17 = arith.constant 0 : index
    %c0_18 = arith.constant 0 : index
    %22 = vector.load %arg7[%c0_17, %c0_18] : memref<2x128xf32, #tpu.memory_space<vmem>>, vector<2x128xf32>
    tpu.vector_store %arg7[%c0_17, %c0_18], %21 {strides = array<i32>} : memref<2x128xf32, #tpu.memory_space<vmem>>, vector<2x128xf32>,
    return
  }
}

</mosaic_0001>

<llo_original>
// kernel: bert_classifier_forward.10
$region0: #{bert_classifier_forward.10}
  #allocation0 [shape = 'u32[]', space=smem, size = 0x4, offset = 0x4, fixed_abs, tag = 'smem constant byte address 0x4 - core index']
  #allocation1 [shape = 'u32[72,128]{1,0:T(1,128)}', space=vmem, size = 0x9000, scoped, tag = 'internal scratch']
  %s0 = inlined_call_operand.vmem [shape: f32[16,128], index: 0, kind: input, shape index: {}]
  %s1 = inlined_call_operand.vmem [shape: f32[1,128], index: 1, kind: input, shape index: {}]
  %s2 = inlined_call_operand.vmem [shape: f32[1,128], index: 2, kind: input, shape index: {}]
  %s3 = inlined_call_operand.vmem [shape: bf16[16,128], index: 3, kind: output, shape index: {}]
  %s4 = sld [smem:[#allocation0]]
  $region22: #{bert_classifier_forward.10} parent=0
    _
  %s6 = ssub.s32 1, %s4
  %s7 = scalar_select 0, %s6, %s4
  // Predicated region
  $region2: #{bert_classifier_forward.10} parent=0 // pred_check
    _
  $region3: #{bert_classifier_forward.10} parent=0 // pred_check_branch
    %9 = sbr.rel (0) target = $region5
  $region4: #{bert_classifier_forward.10} parent=0 // pred_region
    _
  $region5: #{bert_classifier_forward.10} parent=0 // pred_fallthru
    _
  // Predicated region
  $region6: #{bert_classifier_forward.10} parent=0 // pred_check
    _
  $region7: #{bert_classifier_forward.10} parent=0 // pred_check_branch
    %11 = sbr.rel (0) target = $region9
  $region8: #{bert_classifier_forward.10} parent=0 // pred_region
    _
  $region9: #{bert_classifier_forward.10} parent=0 // pred_fallthru
    _
  // Predicated region
  $region10: #{bert_classifier_forward.10} parent=0 // pred_check
    _
  $region11: #{bert_classifier_forward.10} parent=0 // pred_check_branch
    %13 = sbr.rel (0) target = $region13
  $region12: #{bert_classifier_forward.10} parent=0 // pred_region
    _
  $region13: #{bert_classifier_forward.10} parent=0 // pred_fallthru
    _
  %v14 = vld [vmem:[%s0] sm:$0xff]
  %v15 = vld [vmem:[%s0 + $0x8] sm:$0xff]
  %16 = vadd.xlane.f32.xlu0 %v14
  %v17 = vpop.xlane.xlu0 %16
  %18 = vadd.xlane.f32.xlu0 %v15
  %v19 = vpop.xlane.xlu0 %18
  %v20 = vrcp.pop 128.0
  %v21 = vmul.f32 128.0, %v20
  %v22 = vsub.f32 1.0, %v21
  %v23 = vmul.f32 %v20, %v22
  %v24 = vadd.f32 %v20, %v23
  %vm25 = vweird.f32 %v20
  %v26 = vsel %vm25, %v20, %v24
  %v27 = vmul.f32 %v17, %v26
  %v28 = vmul.f32 %v19, %v26
  %v29 = vsub.f32 %v14, %v27
  %v30 = vsub.f32 %v15, %v28
  %v31 = vmul.f32 %v29, %v29
  %v32 = vmul.f32 %v30, %v30
  %33 = vadd.xlane.f32.xlu0 %v31
  %v34 = vpop.xlane.xlu0 %33
  %35 = vadd.xlane.f32.xlu0 %v32
  %v36 = vpop.xlane.xlu0 %35
  %v37 = vmul.f32 %v34, %v26
  %v38 = vmul.f32 %v36, %v26
  %v39 = vadd.f32 %v37, 1e-12
  %v40 = vadd.f32 %v38, 1e-12
  %v41 = vrsqrt.pop %v39
  %v42 = vmul.f32 %v41, %v39
  %v43 = vmul.f32 %v42, %v41
  %v44 = vmul.f32 0.5, %v43
  %v45 = vsub.f32 1.5, %v44
  %v46 = vmul.f32 %v41, %v45
  %vm47 = vweird.f32 %v39
  %vm48 = vweird.f32 %v41
  %vm49 = vmor %vm47, %vm48
  %v50 = vsel %vm49, %v41, %v46
  %v51 = vrsqrt.pop %v40
  %v52 = vmul.f32 %v51, %v40
  %v53 = vmul.f32 %v52, %v51
  %v54 = vmul.f32 0.5, %v53
  %v55 = vsub.f32 1.5, %v54
  %v56 = vmul.f32 %v51, %v55
  %vm57 = vweird.f32 %v40
  %vm58 = vweird.f32 %v51
  %vm59 = vmor %vm57, %vm58
  %v60 = vsel %vm59, %v51, %v56
  %v61 = vmul.f32 %v29, %v50
  %v62 = vmul.f32 %v30, %v60
  %v63 = vld [vmem:[%s1] sm:$0x1]
  %v65 = vperm.slane %v63, 0
  %v67 = vmul.f32 %v61, %v65
  %v68 = vmul.f32 %v62, %v65
  %v69 = vld [vmem:[%s2] sm:$0x1]
  %v71 = vperm.slane %v69, 0
  %v73 = vadd.f32 %v67, %v71
  %v74 = vadd.f32 %v68, %v71
  %v75 = vpack.c.bf16 %v73, %v73
  %v76 = vpack.c.bf16 %v74, %v74
  %77 = vst [vmem:[%s3] sm:$0xf] %v75
  %78 = vst [vmem:[%s3 + $0x4] sm:$0xf] %v76
  // Predicated region
  $region14: #{bert_classifier_forward.10} parent=0 // pred_check
    _
  $region15: #{bert_classifier_forward.10} parent=0 // pred_check_branch
    %80 = sbr.rel (0) target = $region17
  $region16: #{bert_classifier_forward.10} parent=0 // pred_region
    _
  $region17: #{bert_classifier_forward.10} parent=0 // pred_fallthru
    _
  // Predicated region
  $region18: #{bert_classifier_forward.10} parent=0 // pred_check
    _
  $region19: #{bert_classifier_forward.10} parent=0 // pred_check_branch
    %82 = sbr.rel (0) target = $region21
  $region20: #{bert_classifier_forward.10} parent=0 // pred_region
    _
  $region21: #{bert_classifier_forward.10} parent=0 // pred_fallthru
    _

// kernel: bert_classifier_forward.13
$region0: #{bert_classifier_forward.13}
  #allocation0 [shape = 'u32[]', space=smem, size = 0x4, offset = 0x4, fixed_abs, tag = 'smem constant byte address 0x4 - core index']
  #allocation1 [shape = 'u32[72,128]{1,0:T(1,128)}', space=vmem, size = 0x9000, scoped, tag = 'internal scratch']
  %s0 = inlined_call_operand.vmem [shape: bf16[16,128], index: 0, kind: input, shape index: {}]
  %s1 = inlined_call_operand.vmem [shape: bf16[16,128], index: 1, kind: input, shape index: {}]
  %s2 = inlined_call_operand.hbm [shape: bf16[128,128], index: 2, kind: input, shape index: {}]
  %s3 = inlined_call_operand.vmem [shape: f32[1,128], index: 3, kind: input, shape index: {}]
  %s4 = inlined_call_operand.vmem [shape: f32[1,128], index: 4, kind: input, shape index: {}]
  %s5 = inlined_call_operand.vmem [shape: f32[1,128], index: 5, kind: input, shape index: {}]
  %s6 = inlined_call_operand.vmem [shape: bf16[16,128], index: 6, kind: output, shape index: {}]
  %s7 = sld [smem:[#allocation0]]
  $region38: #{bert_classifier_forward.13} parent=0
    _
  %s9 = ssub.s32 1, %s7
  %s10 = scalar_select 0, %s9, %s7
  $region1: #{bert_classifier_forward.13} parent=0
    #allocation2 [shape = 'u8[32768]{0}', space=vmem, size = 0x8000, scoped, tag = 'input window, operand 2, single buffered']
    #allocation3 [shape = 's32[1]{0}', space=sflag, size = 0x4, scoped, tag = 'scoped memory for bert_classifier_forward.13']
    %11 = vsyncpa [#allocation3], 0
    // Predicated region
    $region2: #{bert_classifier_forward.13} parent=1 // pred_check
      _
    $region3: #{bert_classifier_forward.13} parent=1 // pred_check_branch
      %13 = sbr.rel (0) target = $region5
    $region4: #{bert_classifier_forward.13} parent=1 // pred_region
      _
    $region5: #{bert_classifier_forward.13} parent=1 // pred_fallthru
      _
    // Predicated region
    $region6: #{bert_classifier_forward.13} parent=1 // pred_check
      _
    $region7: #{bert_classifier_forward.13} parent=1 // pred_check_branch
      %15 = sbr.rel (0) target = $region9
    $region8: #{bert_classifier_forward.13} parent=1 // pred_region
      _
    $region9: #{bert_classifier_forward.13} parent=1 // pred_fallthru
      _
    // Predicated region
    $region10: #{bert_classifier_forward.13} parent=1 // pred_check
      _
    $region11: #{bert_classifier_forward.13} parent=1 // pred_check_branch
      %17 = sbr.rel (0) target = $region13
    $region12: #{bert_classifier_forward.13} parent=1 // pred_region
      %19 = vsyncadd [#allocation3], 0
      %s20 = sshll.u32 %s2, 4
      %s21 = int_to_ptr.hbm [resolvable:$true] %s20
      %s22 = sshll.u32 [#allocation2], 4
      %s23 = int_to_ptr.vmem [resolvable:$true] %s22
      %28 = dma.hbm_to_vmem [thread:$0]  %s21, 1024, %s23, [#allocation3], 64, 64, 4
    $region13: #{bert_classifier_forward.13} parent=1 // pred_fallthru
      _
    // Predicated region
    $region14: #{bert_classifier_forward.13} parent=1 // pred_check
      _
    $region15: #{bert_classifier_forward.13} parent=1 // pred_check_branch
      %30 = sbr.rel (0) target = $region17
    $region16: #{bert_classifier_forward.13} parent=1 // pred_region
      _
    $region17: #{bert_classifier_forward.13} parent=1 // pred_fallthru
      _
    // Predicated region
    $region18: #{bert_classifier_forward.13} parent=1 // pred_check
      _
    $region19: #{bert_classifier_forward.13} parent=1 // pred_check_branch
      %32 = sbr.rel (0) target = $region21
    $region20: #{bert_classifier_forward.13} parent=1 // pred_region
      _
    $region21: #{bert_classifier_forward.13} parent=1 // pred_fallthru
      _
    // Predicated region
    $region22: #{bert_classifier_forward.13} parent=1 // pred_check
      _
    $region23: #{bert_classifier_forward.13} parent=1 // pred_check_branch
      %34 = sbr.rel (0) target = $region25
    $region24: #{bert_classifier_forward.13} parent=1 // pred_region
      _
    $region25: #{bert_classifier_forward.13} parent=1 // pred_fallthru
      _
    // Predicated region
    $region26: #{bert_classifier_forward.13} parent=1 // pred_check
      _
    $region27: #{bert_classifier_forward.13} parent=1 // pred_check_branch
      %36 = sbr.rel (0) target = $region29
    $region28: #{bert_classifier_forward.13} parent=1 // pred_region
      %38 = dma.done [#allocation3], 1024
    $region29: #{bert_classifier_forward.13} parent=1 // pred_fallthru
      _
    %v39 = vld [vmem:[%s0] sm:$0xf]
    %v40 = vld [vmem:[%s0 + $0x4] sm:$0xf]
    %v41 = vld [vmem:[#allocation2] sm:$0xf]
    %v42 = vld [vmem:[#allocation2 + $0x4] sm:$0xf]
    %v43 = vld [vmem:[#allocation2 + $0x8] sm:$0xf]
    %v44 = vld [vmem:[#allocation2 + $0xc] sm:$0xf]
    %v45 = vld [vmem:[#allocation2 + $0x10] sm:$0xf]
    %v46 = vld [vmem:[#allocation2 + $0x14] sm:$0xf]
    %v47 = vld [vmem:[#allocation2 + $0x18] sm:$0xf]
    %v48 = vld [vmem:[#allocation2 + $0x1c] sm:$0xf]
    %v49 = vld [vmem:[#allocation2 + $0x20] sm:$0xf]
    %v50 = vld [vmem:[#allocation2 + $0x24] sm:$0xf]
    %v51 = vld [vmem:[#allocation2 + $0x28] sm:$0xf]
    %v52 = vld [vmem:[#allocation2 + $0x2c] sm:$0xf]
    %v53 = vld [vmem:[#allocation2 + $0x30] sm:$0xf]
    %v54 = vld [vmem:[#allocation2 + $0x34] sm:$0xf]
    %v55 = vld [vmem:[#allocation2 + $0x38] sm:$0xf]
    %v56 = vld [vmem:[#allocation2 + $0x3c] sm:$0xf]
    %v57 = vld [vmem:[%s3] sm:$0x1]
    %v59 = vperm.slane %v57, 0
    %v63 = vunpack.c.l.b16 %v39
    %v64 = vunpack.c.l.b16 %v40
    %v65 = vpack.c.b16 %v64, %v63
    %v83 = vunpack.c.l.b16 %v41
    %v84 = vunpack.c.l.b16 %v42
    %v85 = vunpack.c.l.b16 %v43
    %v86 = vunpack.c.l.b16 %v44
    %v87 = vunpack.c.l.b16 %v45
    %v88 = vunpack.c.l.b16 %v46
    %v89 = vunpack.c.l.b16 %v47
    %v90 = vunpack.c.l.b16 %v48
    %v91 = vunpack.c.l.b16 %v49
    %v92 = vunpack.c.l.b16 %v50
    %v93 = vunpack.c.l.b16 %v51
    %v94 = vunpack.c.l.b16 %v52
    %v95 = vunpack.c.l.b16 %v53
    %v96 = vunpack.c.l.b16 %v54
    %v97 = vunpack.c.l.b16 %v55
    %v98 = vunpack.c.l.b16 %v56
    %v99 = vpack.c.b16 %v84, %v83
    %v100 = vpack.c.b16 %v86, %v85
    %v101 = vpack.c.b16 %v88, %v87
    %v102 = vpack.c.b16 %v90, %v89
    %v103 = vpack.c.b16 %v92, %v91
    %v104 = vpack.c.b16 %v94, %v93
    %v105 = vpack.c.b16 %v96, %v95
    %v106 = vpack.c.b16 %v98, %v97
    %115 = vmatpush.bf16.msra.mxu0 %v106
    %116 = vmatpush.bf16.msra.mxu0 %v105
    %117 = vmatpush.bf16.msra.mxu0 %v104
    %118 = vmatpush.bf16.msra.mxu0 %v103
    %119 = vmatpush.bf16.msra.mxu0 %v102
    %120 = vmatpush.bf16.msra.mxu0 %v101
    %121 = vmatpush.bf16.msra.mxu0 %v100
    %122 = vmatpush.bf16.msra.mxu0 %v99
    %123 = vmatmul.bf16.gmra.mxu0 %v65
    %v124 = vpop.f32.mrf.mxu0
    %v125 = vadd.f32 %v59, %v124
    %v126 = vpop.f32.mrf.mxu0
    %v127 = vadd.f32 %v59, %v126
    %128 = vdwg.mxu0
    %v129 = vld [vmem:[%s1] sm:$0xf]
    %v130 = vld [vmem:[%s1 + $0x4] sm:$0xf]
    %v131 = vunpack.c.l.bf16 %v129
    %v132 = vunpack.c.l.bf16 %v130
    %v133 = vadd.f32 %v125, %v131
    %v134 = vadd.f32 %v127, %v132
    %135 = vadd.xlane.f32.xlu0 %v133
    %v136 = vpop.xlane.xlu0 %135
    %137 = vadd.xlane.f32.xlu0 %v134
    %v138 = vpop.xlane.xlu0 %137
    %v139 = vrcp.pop 128.0
    %v140 = vmul.f32 128.0, %v139
    %v141 = vsub.f32 1.0, %v140
    %v142 = vmul.f32 %v139, %v141
    %v143 = vadd.f32 %v139, %v142
    %vm144 = vweird.f32 %v139
    %v145 = vsel %vm144, %v139, %v143
    %v146 = vmul.f32 %v136, %v145
    %v147 = vmul.f32 %v138, %v145
    %v148 = vsub.f32 %v133, %v146
    %v149 = vsub.f32 %v134, %v147
    %v150 = vmul.f32 %v148, %v148
    %v151 = vmul.f32 %v149, %v149
    %152 = vadd.xlane.f32.xlu0 %v150
    %v153 = vpop.xlane.xlu0 %152
    %154 = vadd.xlane.f32.xlu0 %v151
    %v155 = vpop.xlane.xlu0 %154
    %v156 = vmul.f32 %v153, %v145
    %v157 = vmul.f32 %v155, %v145
    %v158 = vadd.f32 %v156, 1e-12
    %v159 = vadd.f32 %v157, 1e-12
    %v160 = vrsqrt.pop %v158
    %v161 = vmul.f32 %v160, %v158
    %v162 = vmul.f32 %v161, %v160
    %v163 = vmul.f32 0.5, %v162
    %v164 = vsub.f32 1.5, %v163
    %v165 = vmul.f32 %v160, %v164
    %vm166 = vweird.f32 %v158
    %vm167 = vweird.f32 %v160
    %vm168 = vmor %vm166, %vm167
    %v169 = vsel %vm168, %v160, %v165
    %v170 = vrsqrt.pop %v159
    %v171 = vmul.f32 %v170, %v159
    %v172 = vmul.f32 %v171, %v170
    %v173 = vmul.f32 0.5, %v172
    %v174 = vsub.f32 1.5, %v173
    %v175 = vmul.f32 %v170, %v174
    %vm176 = vweird.f32 %v159
    %vm177 = vweird.f32 %v170
    %vm178 = vmor %vm176, %vm177
    %v179 = vsel %vm178, %v170, %v175
    %v180 = vmul.f32 %v148, %v169
    %v181 = vmul.f32 %v149, %v179
    %v182 = vld [vmem:[%s4] sm:$0x1]
    %v184 = vperm.slane %v182, 0
    %v186 = vmul.f32 %v180, %v184
    %v187 = vmul.f32 %v181, %v184
    %v188 = vld [vmem:[%s5] sm:$0x1]
    %v190 = vperm.slane %v188, 0
    %v192 = vadd.f32 %v186, %v190
    %v193 = vadd.f32 %v187, %v190
    %v194 = vpack.c.bf16 %v192, %v192
    %v195 = vpack.c.bf16 %v193, %v193
    %196 = vst [vmem:[%s6] sm:$0xf] %v194
    %197 = vst [vmem:[%s6 + $0x4] sm:$0xf] %v195
    // Predicated region
    $region30: #{bert_classifier_forward.13} parent=1 // pred_check
      _
    $region31: #{bert_classifier_forward.13} parent=1 // pred_check_branch
      %199 = sbr.rel (0) target = $region33
    $region32: #{bert_classifier_forward.13} parent=1 // pred_region
      _
    $region33: #{bert_classifier_forward.13} parent=1 // pred_fallthru
      _
    // Predicated region
    $region34: #{bert_classifier_forward.13} parent=1 // pred_check
      _
    $region35: #{bert_classifier_forward.13} parent=1 // pred_check_branch
      %201 = sbr.rel (0) target = $region37
    $region36: #{bert_classifier_forward.13} parent=1 // pred_region
      _
    $region37: #{bert_classifier_forward.13} parent=1 // pred_fallthru
      _
    %202 = vsyncpa [#allocation3], 1

// kernel: bert_classifier_forward.11
$region0: #{bert_classifier_forward.11}
  #allocation0 [shape = 'u32[]', space=smem, size = 0x4, offset = 0x4, fixed_abs, tag = 'smem constant byte address 0x4 - core index']
  #allocation1 [shape = 'u32[72,128]{1,0:T(1,128)}', space=vmem, size = 0x9000, scoped, tag = 'internal scratch']
  %s0 = inlined_call_operand.vmem [shape: bf16[16,128], index: 0, kind: input, shape index: {}]
  %s1 = inlined_call_operand.hbm [shape: bf16[128,384], index: 1, kind: input, shape index: {}]
  %s2 = inlined_call_operand.vmem [shape: f32[1,384], index: 2, kind: input, shape index: {}]
  %s3 = inlined_call_operand.vmem [shape: bf16[16,384], index: 3, kind: output, shape index: {}]
  %s4 = sld [smem:[#allocation0]]
  $region26: #{bert_classifier_forward.11} parent=0
    _
  %s6 = ssub.s32 1, %s4
  %s7 = scalar_select 0, %s6, %s4
  $region1: #{bert_classifier_forward.11} parent=0
    #allocation2 [shape = 'u8[98304]{0}', space=vmem, size = 0x18000, scoped, tag = 'input window, operand 1, single buffered']
    #allocation3 [shape = 's32[1]{0}', space=sflag, size = 0x4, scoped, tag = 'scoped memory for bert_classifier_forward.11']
    %8 = vsyncpa [#allocation3], 0
    // Predicated region
    $region2: #{bert_classifier_forward.11} parent=1 // pred_check
      _
    $region3: #{bert_classifier_forward.11} parent=1 // pred_check_branch
      %10 = sbr.rel (0) target = $region5
    $region4: #{bert_classifier_forward.11} parent=1 // pred_region
      _
    $region5: #{bert_classifier_forward.11} parent=1 // pred_fallthru
      _
    // Predicated region
    $region6: #{bert_classifier_forward.11} parent=1 // pred_check
      _
    $region7: #{bert_classifier_forward.11} parent=1 // pred_check_branch
      %12 = sbr.rel (0) target = $region9
    $region8: #{bert_classifier_forward.11} parent=1 // pred_region
      %14 = vsyncadd [#allocation3], 0
      %s15 = sshll.u32 %s1, 4
      %s16 = int_to_ptr.hbm [resolvable:$true] %s15
      %s17 = sshll.u32 [#allocation2], 4
      %s18 = int_to_ptr.vmem [resolvable:$true] %s17
      %23 = dma.hbm_to_vmem [thread:$0]  %s16, 3072, %s18, [#allocation3], 192, 192, 12
    $region9: #{bert_classifier_forward.11} parent=1 // pred_fallthru
      _
    // Predicated region
    $region10: #{bert_classifier_forward.11} parent=1 // pred_check
      _
    $region11: #{bert_classifier_forward.11} parent=1 // pred_check_branch
      %25 = sbr.rel (0) target = $region13
    $region12: #{bert_classifier_forward.11} parent=1 // pred_region
      _
    $region13: #{bert_classifier_forward.11} parent=1 // pred_fallthru
      _
    // Predicated region
    $region14: #{bert_classifier_forward.11} parent=1 // pred_check
      _
    $region15: #{bert_classifier_forward.11} parent=1 // pred_check_branch
      %27 = sbr.rel (0) target = $region17
    $region16: #{bert_classifier_forward.11} parent=1 // pred_region
      %29 = dma.done [#allocation3], 3072
    $region17: #{bert_classifier_forward.11} parent=1 // pred_fallthru
      _
    %v30 = vld [vmem:[%s0] sm:$0xf]
    %v31 = vld [vmem:[%s0 + $0x4] sm:$0xf]
    %v32 = vld [vmem:[#allocation2] sm:$0xff]
    %v33 = vld [vmem:[#allocation2 + $0x8] sm:$0xf]
    %v34 = vld [vmem:[#allocation2 + $0xc] sm:$0xff]
    %v35 = vld [vmem:[#allocation2 + $0x14] sm:$0xf]
    %v36 = vld [vmem:[#allocation2 + $0x18] sm:$0xff]
    %v37 = vld [vmem:[#allocation2 + $0x20] sm:$0xf]
    %v38 = vld [vmem:[#allocation2 + $0x24] sm:$0xff]
    %v39 = vld [vmem:[#allocation2 + $0x2c] sm:$0xf]
    %v40 = vld [vmem:[#allocation2 + $0x30] sm:$0xff]
    %v41 = vld [vmem:[#allocation2 + $0x38] sm:$0xf]
    %v42 = vld [vmem:[#allocation2 + $0x3c] sm:$0xff]
    %v43 = vld [vmem:[#allocation2 + $0x44] sm:$0xf]
    %v44 = vld [vmem:[#allocation2 + $0x48] sm:$0xff]
    %v45 = vld [vmem:[#allocation2 + $0x50] sm:$0xf]
    %v46 = vld [vmem:[#allocation2 + $0x54] sm:$0xff]
    %v47 = vld [vmem:[#allocation2 + $0x5c] sm:$0xf]
    %v48 = vld [vmem:[#allocation2 + $0x60] sm:$0xff]
    %v49 = vld [vmem:[#allocation2 + $0x68] sm:$0xf]
    %v50 = vld [vmem:[#allocation2 + $0x6c] sm:$0xff]
    %v51 = vld [vmem:[#allocation2 + $0x74] sm:$0xf]
    %v52 = vld [vmem:[#allocation2 + $0x78] sm:$0xff]
    %v53 = vld [vmem:[#allocation2 + $0x80] sm:$0xf]
    %v54 = vld [vmem:[#allocation2 + $0x84] sm:$0xff]
    %v55 = vld [vmem:[#allocation2 + $0x8c] sm:$0xf]
    %v56 = vld [vmem:[#allocation2 + $0x90] sm:$0xff]
    %v57 = vld [vmem:[#allocation2 + $0x98] sm:$0xf]
    %v58 = vld [vmem:[#allocation2 + $0x9c] sm:$0xff]
    %v59 = vld [vmem:[#allocation2 + $0xa4] sm:$0xf]
    %v60 = vld [vmem:[#allocation2 + $0xa8] sm:$0xff]
    %v61 = vld [vmem:[#allocation2 + $0xb0] sm:$0xf]
    %v62 = vld [vmem:[#allocation2 + $0xb4] sm:$0xff]
    %v63 = vld [vmem:[#allocation2 + $0xbc] sm:$0xf]
    %v64 = vld [vmem:[%s2] sm:$0x7]
    %v66 = vperm.slane %v64, 0
    %v67 = vperm.slane %v64, 1
    %v68 = vperm.slane %v64, 2
    %v74 = vunpack.c.l.b16 %v30
    %v75 = vunpack.c.l.b16 %v31
    %v76 = vpack.c.b16 %v75, %v74
    %v110 = vunpack.c.l.b16 %v32
    %v111 = vunpack.c.h.b16 %v32
    %v112 = vunpack.c.l.b16 %v33
    %v113 = vunpack.c.l.b16 %v34
    %v114 = vunpack.c.h.b16 %v34
    %v115 = vunpack.c.l.b16 %v35
    %v116 = vunpack.c.l.b16 %v36
    %v117 = vunpack.c.h.b16 %v36
    %v118 = vunpack.c.l.b16 %v37
    %v119 = vunpack.c.l.b16 %v38
    %v120 = vunpack.c.h.b16 %v38
    %v121 = vunpack.c.l.b16 %v39
    %v122 = vunpack.c.l.b16 %v40
    %v123 = vunpack.c.h.b16 %v40
    %v124 = vunpack.c.l.b16 %v41
    %v125 = vunpack.c.l.b16 %v42
    %v126 = vunpack.c.h.b16 %v42
    %v127 = vunpack.c.l.b16 %v43
    %v128 = vunpack.c.l.b16 %v44
    %v129 = vunpack.c.h.b16 %v44
    %v130 = vunpack.c.l.b16 %v45
    %v131 = vunpack.c.l.b16 %v46
    %v132 = vunpack.c.h.b16 %v46
    %v133 = vunpack.c.l.b16 %v47
    %v134 = vunpack.c.l.b16 %v48
    %v135 = vunpack.c.h.b16 %v48
    %v136 = vunpack.c.l.b16 %v49
    %v137 = vunpack.c.l.b16 %v50
    %v138 = vunpack.c.h.b16 %v50
    %v139 = vunpack.c.l.b16 %v51
    %v140 = vunpack.c.l.b16 %v52
    %v141 = vunpack.c.h.b16 %v52
    %v142 = vunpack.c.l.b16 %v53
    %v143 = vunpack.c.l.b16 %v54
    %v144 = vunpack.c.h.b16 %v54
    %v145 = vunpack.c.l.b16 %v55
    %v146 = vunpack.c.l.b16 %v56
    %v147 = vunpack.c.h.b16 %v56
    %v148 = vunpack.c.l.b16 %v57
    %v149 = vunpack.c.l.b16 %v58
    %v150 = vunpack.c.h.b16 %v58
    %v151 = vunpack.c.l.b16 %v59
    %v152 = vunpack.c.l.b16 %v60
    %v153 = vunpack.c.h.b16 %v60
    %v154 = vunpack.c.l.b16 %v61
    %v155 = vunpack.c.l.b16 %v62
    %v156 = vunpack.c.h.b16 %v62
    %v157 = vunpack.c.l.b16 %v63
    %v158 = vpack.c.b16 %v113, %v110
    %v159 = vpack.c.b16 %v114, %v111
    %v160 = vpack.c.b16 %v115, %v112
    %v161 = vpack.c.b16 %v119, %v116
    %v162 = vpack.c.b16 %v120, %v117
    %v163 = vpack.c.b16 %v121, %v118
    %v164 = vpack.c.b16 %v125, %v122
    %v165 = vpack.c.b16 %v126, %v123
    %v166 = vpack.c.b16 %v127, %v124
    %v167 = vpack.c.b16 %v131, %v128
    %v168 = vpack.c.b16 %v132, %v129
    %v169 = vpack.c.b16 %v133, %v130
    %v170 = vpack.c.b16 %v137, %v134
    %v171 = vpack.c.b16 %v138, %v135
    %v172 = vpack.c.b16 %v139, %v136
    %v173 = vpack.c.b16 %v143, %v140
    %v174 = vpack.c.b16 %v144, %v141
    %v175 = vpack.c.b16 %v145, %v142
    %v176 = vpack.c.b16 %v149, %v146
    %v177 = vpack.c.b16 %v150, %v147
    %v178 = vpack.c.b16 %v151, %v148
    %v179 = vpack.c.b16 %v155, %v152
    %v180 = vpack.c.b16 %v156, %v153
    %v181 = vpack.c.b16 %v157, %v154
    %206 = vmatpush.bf16.msra.mxu0 %v179
    %207 = vmatpush.bf16.msra.mxu0 %v176
    %208 = vmatpush.bf16.msra.mxu0 %v173
    %209 = vmatpush.bf16.msra.mxu0 %v170
    %210 = vmatpush.bf16.msra.mxu0 %v167
    %211 = vmatpush.bf16.msra.mxu0 %v164
    %212 = vmatpush.bf16.msra.mxu0 %v161
    %213 = vmatpush.bf16.msra.mxu0 %v158
    %214 = vmatmul.bf16.gmra.mxu0 %v76
    %v215 = vpop.f32.mrf.mxu0
    %v216 = vadd.f32 %v66, %v215
    %v217 = vpop.f32.mrf.mxu0
    %v218 = vadd.f32 %v66, %v217
    %219 = vdwg.mxu0
    %220 = vmatpush.bf16.msra.mxu0 %v180
    %221 = vmatpush.bf16.msra.mxu0 %v177
    %222 = vmatpush.bf16.msra.mxu0 %v174
    %223 = vmatpush.bf16.msra.mxu0 %v171
    %224 = vmatpush.bf16.msra.mxu0 %v168
    %225 = vmatpush.bf16.msra.mxu0 %v165
    %226 = vmatpush.bf16.msra.mxu0 %v162
    %227 = vmatpush.bf16.msra.mxu0 %v159
    %228 = vmatmul.bf16.gmra.mxu0 %v76
    %v229 = vpop.f32.mrf.mxu0
    %v230 = vadd.f32 %v67, %v229
    %v231 = vpop.f32.mrf.mxu0
    %v232 = vadd.f32 %v67, %v231
    %233 = vdwg.mxu0
    %234 = vmatpush.bf16.msra.mxu0 %v181
    %235 = vmatpush.bf16.msra.mxu0 %v178
    %236 = vmatpush.bf16.msra.mxu0 %v175
    %237 = vmatpush.bf16.msra.mxu0 %v172
    %238 = vmatpush.bf16.msra.mxu0 %v169
    %239 = vmatpush.bf16.msra.mxu0 %v166
    %240 = vmatpush.bf16.msra.mxu0 %v163
    %241 = vmatpush.bf16.msra.mxu0 %v160
    %242 = vmatmul.bf16.gmra.mxu0 %v76
    %v243 = vpop.f32.mrf.mxu0
    %v244 = vadd.f32 %v68, %v243
    %v245 = vpop.f32.mrf.mxu0
    %v246 = vadd.f32 %v68, %v245
    %247 = vdwg.mxu0
    %v248 = vpack.c.bf16 %v230, %v216
    %v249 = vpack.c.bf16 %v244, %v244
    %v250 = vpack.c.bf16 %v232, %v218
    %v251 = vpack.c.bf16 %v246, %v246
    %252 = vst [vmem:[%s3] sm:$0xff] %v248
    %253 = vst [vmem:[%s3 + $0x8] sm:$0xf] %v249
    %254 = vst [vmem:[%s3 + $0xc] sm:$0xff] %v250
    %255 = vst [vmem:[%s3 + $0x14] sm:$0xf] %v251
    // Predicated region
    $region18: #{bert_classifier_forward.11} parent=1 // pred_check
      _
    $region19: #{bert_classifier_forward.11} parent=1 // pred_check_branch
      %257 = sbr.rel (0) target = $region21
    $region20: #{bert_classifier_forward.11} parent=1 // pred_region
      _
    $region21: #{bert_classifier_forward.11} parent=1 // pred_fallthru
      _
    // Predicated region
    $region22: #{bert_classifier_forward.11} parent=1 // pred_check
      _
    $region23: #{bert_classifier_forward.11} parent=1 // pred_check_branch
      %259 = sbr.rel (0) target = $region25
    $region24: #{bert_classifier_forward.11} parent=1 // pred_region
      _
    $region25: #{bert_classifier_forward.11} parent=1 // pred_fallthru
      _
    %260 = vsyncpa [#allocation3], 1

// kernel: bert_classifier_forward.12
$region0: #{bert_classifier_forward.12}
  #allocation0 [shape = 'u32[]', space=smem, size = 0x4, offset = 0x4, fixed_abs, tag = 'smem constant byte address 0x4 - core index']
  #allocation1 [shape = 'u32[72,128]{1,0:T(1,128)}', space=vmem, size = 0x9000, scoped, tag = 'internal scratch']
  %s0 = inlined_call_operand.vmem [shape: bf16[2,8,384], index: 0, kind: input, shape index: {}, may-alias: {0,1,2}]
  %s1 = inlined_call_operand.vmem [shape: bf16[2,8,384], index: 1, kind: input, shape index: {}, may-alias: {0,1,2}]
  %s2 = inlined_call_operand.vmem [shape: bf16[2,8,384], index: 2, kind: input, shape index: {}, may-alias: {0,1,2}]
  %s3 = inlined_call_operand.vmem [shape: f32[2,1,8], index: 3, kind: input, shape index: {}]
  %s4 = inlined_call_operand.vmem [shape: bf16[2,8,128], index: 4, kind: output, shape index: {}]
  %s5 = sld [smem:[#allocation0]]
  $region49: #{bert_classifier_forward.12} parent=0
    _
  %s7 = ssub.s32 1, %s5
  %s8 = scalar_select 0, %s7, %s5
  loop: start=0, step=1, limit=4
  $region2: #{bert_classifier_forward.12} parent=0 // loop_pre_header
    _
  $region3: #{bert_classifier_forward.12} parent=0 // loop_header
    %s10 = sphi 0, %s14
    %p11 = scmp.ge.s32.totalorder %s10, 4
    %s17 = sphi 0, %s29
    %s18 = sphi 0, %s25
    %s19 = sphi 0, %s17
    %s20 = sphi 0, %s18
    %s21 = sphi 0, %s19
    %s22 = sphi 0, %s20
    %s34 = sphi 0, %s36
    %s37 = sphi 0, %s34
    %s38 = sphi 0, %s37
    %s54 = sphi 0, %s38
    %s60 = sphi 0, %s62
    %s63 = sphi 0, %s60
    %s64 = sphi 0, %s63
    %s80 = sphi 0, %s64
    %s86 = sphi 0, %s88
    %s89 = sphi 0, %s86
    %s90 = sphi 0, %s89
    %s106 = sphi 0, %s90
    %s112 = sphi 0, %s114
    %s115 = sphi 0, %s112
    %s116 = sphi 0, %s115
    %s132 = sphi 0, %s116
    %s140 = sphi 0, %s142
    %s143 = sphi 0, %s140
    %s144 = sphi 0, %s143
    %s160 = sphi 0, %s144
  $region4: #{bert_classifier_forward.12} parent=0 // loop_header_branch
    %13 = sbr.rel (%p11) target = $region8
  $region5: #{bert_classifier_forward.12} parent=0 // loop_body
    %s15 = ssub.s32 %s10, 1
    %s16 = ssub.s32 %s10, 2
    %s23 = sadd.s32 1, %s18
    %p24 = scmp.ge.s32.totalorder %s23, 1
    %s25 = scalar_select %p24, 0, %s23
    %s26 = sadd.s32 1, %s17
    %s27 = scalar_select %p24, %s26, %s17
    %p28 = scmp.ge.s32.totalorder %s27, 2
    %s29 = scalar_select %p28, 0, %s27
    %s30 = ssub.s32 %s17, %s29
    %s31 = ssub.s32 %s18, %s25
    %s32 = sor.u32 %s30, %s31
    %p33 = scmp.eq.s32.totalorder %s32, 0
    %s35 = sadd.s32 %s34, 1
    %s36 = scalar_select %p33, %s34, %s35
    %p39 = pneg %p33
    %p40 = scmp.eq.s32.totalorder %s10, 1
    %p41 = por %p39, %p40
    %p42 = scmp.ne.s32.totalorder %s34, %s37
    %p43 = scmp.eq.s32.totalorder %s10, 0
    %p44 = por %p42, %p43
    %p45 = scmp.ne.s32.totalorder %s34, %s37
    %p46 = scmp.eq.s32.totalorder %s15, 1
    %p47 = por %p45, %p46
    %p48 = scmp.ne.s32.totalorder %s37, %s38
    %p49 = scmp.eq.s32.totalorder %s15, 0
    %p50 = por %p48, %p49
    %p51 = scmp.ne.s32.totalorder %s37, %s38
    %p52 = scmp.eq.s32.totalorder %s16, 1
    %p53 = por %p51, %p52
    %p55 = scmp.ne.s32.totalorder %s38, %s54
    %p56 = scmp.eq.s32.totalorder %s16, 0
    %p57 = por %p55, %p56
    %s58 = ssub.s32 %s17, %s29
    %p59 = scmp.eq.s32.totalorder %s58, 0
    %s61 = sadd.s32 %s60, 1
    %s62 = scalar_select %p59, %s60, %s61
    %p65 = pneg %p59
    %p66 = scmp.eq.s32.totalorder %s10, 1
    %p67 = por %p65, %p66
    %p68 = scmp.ne.s32.totalorder %s60, %s63
    %p69 = scmp.eq.s32.totalorder %s10, 0
    %p70 = por %p68, %p69
    %p71 = scmp.ne.s32.totalorder %s60, %s63
    %p72 = scmp.eq.s32.totalorder %s15, 1
    %p73 = por %p71, %p72
    %p74 = scmp.ne.s32.totalorder %s63, %s64
    %p75 = scmp.eq.s32.totalorder %s15, 0
    %p76 = por %p74, %p75
    %p77 = scmp.ne.s32.totalorder %s63, %s64
    %p78 = scmp.eq.s32.totalorder %s16, 1
    %p79 = por %p77, %p78
    %p81 = scmp.ne.s32.totalorder %s64, %s80
    %p82 = scmp.eq.s32.totalorder %s16, 0
    %p83 = por %p81, %p82
    %s84 = ssub.s32 %s17, %s29
    %p85 = scmp.eq.s32.totalorder %s84, 0
    %s87 = sadd.s32 %s86, 1
    %s88 = scalar_select %p85, %s86, %s87
    %p91 = pneg %p85
    %p92 = scmp.eq.s32.totalorder %s10, 1
    %p93 = por %p91, %p92
    %p94 = scmp.ne.s32.totalorder %s86, %s89
    %p95 = scmp.eq.s32.totalorder %s10, 0
    %p96 = por %p94, %p95
    %p97 = scmp.ne.s32.totalorder %s86, %s89
    %p98 = scmp.eq.s32.totalorder %s15, 1
    %p99 = por %p97, %p98
    %p100 = scmp.ne.s32.totalorder %s89, %s90
    %p101 = scmp.eq.s32.totalorder %s15, 0
    %p102 = por %p100, %p101
    %p103 = scmp.ne.s32.totalorder %s89, %s90
    %p104 = scmp.eq.s32.totalorder %s16, 1
    %p105 = por %p103, %p104
    %p107 = scmp.ne.s32.totalorder %s90, %s106
    %p108 = scmp.eq.s32.totalorder %s16, 0
    %p109 = por %p107, %p108
    %s110 = ssub.s32 %s17, %s29
    %p111 = scmp.eq.s32.totalorder %s110, 0
    %s113 = sadd.s32 %s112, 1
    %s114 = scalar_select %p111, %s112, %s113
    %p117 = pneg %p111
    %p118 = scmp.eq.s32.totalorder %s10, 1
    %p119 = por %p117, %p118
    %p120 = scmp.ne.s32.totalorder %s112, %s115
    %p121 = scmp.eq.s32.totalorder %s10, 0
    %p122 = por %p120, %p121
    %p123 = scmp.ne.s32.totalorder %s112, %s115
    %p124 = scmp.eq.s32.totalorder %s15, 1
    %p125 = por %p123, %p124
    %p126 = scmp.ne.s32.totalorder %s115, %s116
    %p127 = scmp.eq.s32.totalorder %s15, 0
    %p128 = por %p126, %p127
    %p129 = scmp.ne.s32.totalorder %s115, %s116
    %p130 = scmp.eq.s32.totalorder %s16, 1
    %p131 = por %p129, %p130
    %p133 = scmp.ne.s32.totalorder %s116, %s132
    %p134 = scmp.eq.s32.totalorder %s16, 0
    %p135 = por %p133, %p134
    %s136 = ssub.s32 %s17, %s29
    %s137 = ssub.s32 %s18, %s25
    %s138 = sor.u32 %s136, %s137
    %p139 = scmp.eq.s32.totalorder %s138, 0
    %s141 = sadd.s32 %s140, 1
    %s142 = scalar_select %p139, %s140, %s141
    %p145 = pneg %p139
    %p146 = scmp.eq.s32.totalorder %s10, 1
    %p147 = por %p145, %p146
    %p148 = scmp.ne.s32.totalorder %s140, %s143
    %p149 = scmp.eq.s32.totalorder %s10, 0
    %p150 = por %p148, %p149
    %p151 = scmp.ne.s32.totalorder %s140, %s143
    %p152 = scmp.eq.s32.totalorder %s15, 1
    %p153 = por %p151, %p152
    %p154 = scmp.ne.s32.totalorder %s143, %s144
    %p155 = scmp.eq.s32.totalorder %s15, 0
    %p156 = por %p154, %p155
    %p157 = scmp.ne.s32.totalorder %s143, %s144
    %p158 = scmp.eq.s32.totalorder %s16, 1
    %p159 = por %p157, %p158
    %p161 = scmp.ne.s32.totalorder %s144, %s160
    %p162 = scmp.eq.s32.totalorder %s16, 0
    %p163 = por %p161, %p162
    %p164 = scmp.le.s32.totalorder 1, %s10
    %p165 = scmp.lt.s32.totalorder %s10, 3
    %p166 = pnand %p164, %p165
    %p167 = pneg %p166
    // Predicated region
    $region9: #{bert_classifier_forward.12} parent=5 // pred_check
      _
    $region10: #{bert_classifier_forward.12} parent=5 // pred_check_branch
      %169 = sbr.rel (%p166) target = $region12
    $region11: #{bert_classifier_forward.12} parent=5 // pred_region
      %s170 = ssub.s32 %s10, 1
    $region12: #{bert_classifier_forward.12} parent=5 // pred_fallthru
      _
    %p171 = scmp.lt.s32.totalorder %s10, 2
    // Predicated region
    $region13: #{bert_classifier_forward.12} parent=5 // pred_check
      %p172 = pneg %p171
    $region14: #{bert_classifier_forward.12} parent=5 // pred_check_branch
      %174 = sbr.rel (%p172) target = $region16
    $region15: #{bert_classifier_forward.12} parent=5 // pred_region
      // Predicated region
      $region17: #{bert_classifier_forward.12} parent=15 // pred_check
        %p175 = pneg %p44
      $region18: #{bert_classifier_forward.12} parent=15 // pred_check_branch
        %177 = sbr.rel (%p175) target = $region20
      $region19: #{bert_classifier_forward.12} parent=15 // pred_region
        %p178 = scmp.lt.s32.totalorder %s17, 1
        %s179 = scalar_select %p178, %s17, 1
        %p180 = scmp.lt.s32.totalorder %s18, 0
        %s181 = scalar_select %p180, %s18, 0
        %s182 = smul.addr %s181, 3
        %s183 = smul.addr %s179, 3
        %s184 = sadd.s32 %s182, %s183
        %s185 = smul.addr %s184, 4
        %s186 = scalar_lea.vmem %s0, %s185
      $region20: #{bert_classifier_forward.12} parent=15 // pred_fallthru
        _
      // Predicated region
      $region21: #{bert_classifier_forward.12} parent=15 // pred_check
        %p187 = pneg %p70
      $region22: #{bert_classifier_forward.12} parent=15 // pred_check_branch
        %189 = sbr.rel (%p187) target = $region24
      $region23: #{bert_classifier_forward.12} parent=15 // pred_region
        %p190 = scmp.lt.s32.totalorder %s17, 1
        %s191 = scalar_select %p190, %s17, 1
        %s192 = smul.addr %s191, 3
        %s193 = sadd.s32 1, %s192
        %s194 = smul.addr %s193, 4
        %s195 = scalar_lea.vmem %s1, %s194
      $region24: #{bert_classifier_forward.12} parent=15 // pred_fallthru
        _
      // Predicated region
      $region25: #{bert_classifier_forward.12} parent=15 // pred_check
        %p196 = pneg %p96
      $region26: #{bert_classifier_forward.12} parent=15 // pred_check_branch
        %198 = sbr.rel (%p196) target = $region28
      $region27: #{bert_classifier_forward.12} parent=15 // pred_region
        %p199 = scmp.lt.s32.totalorder %s17, 1
        %s200 = scalar_select %p199, %s17, 1
        %s201 = smul.addr %s200, 3
        %s202 = sadd.s32 2, %s201
        %s203 = smul.addr %s202, 4
        %s204 = scalar_lea.vmem %s2, %s203
      $region28: #{bert_classifier_forward.12} parent=15 // pred_fallthru
        _
      // Predicated region
      $region29: #{bert_classifier_forward.12} parent=15 // pred_check
        %p205 = pneg %p122
      $region30: #{bert_classifier_forward.12} parent=15 // pred_check_branch
        %207 = sbr.rel (%p205) target = $region32
      $region31: #{bert_classifier_forward.12} parent=15 // pred_region
        %p208 = scmp.lt.s32.totalorder %s17, 1
        %s209 = scalar_select %p208, %s17, 1
        %s210 = scalar_lea.vmem %s3, %s209
      $region32: #{bert_classifier_forward.12} parent=15 // pred_fallthru
        _
    $region16: #{bert_classifier_forward.12} parent=5 // pred_fallthru
      _
    %p211 = scmp.le.s32.totalorder 1, %s10
    %p212 = scmp.lt.s32.totalorder %s10, 3
    %p213 = pnand %p211, %p212
    %p214 = pneg %p213
    // Predicated region
    $region33: #{bert_classifier_forward.12} parent=5 // pred_check
      _
    $region34: #{bert_classifier_forward.12} parent=5 // pred_check_branch
      %216 = sbr.rel (%p213) target = $region36
    $region35: #{bert_classifier_forward.12} parent=5 // pred_region
      %s217 = ssub.s32 %s10, 1
      %p218 = scmp.lt.s32.totalorder %s19, 1
      %s219 = scalar_select %p218, %s19, 1
      %p220 = scmp.lt.s32.totalorder %s20, 0
      %s221 = scalar_select %p220, %s20, 0
      %s222 = smul.addr %s221, 3
      %s223 = smul.addr %s219, 3
      %s224 = sadd.s32 %s222, %s223
      %s225 = smul.addr %s224, 4
      %s226 = scalar_lea.vmem %s0, %s225
      %p227 = pneg %p50
      %p228 = pneg %p47
      %p229 = scmp.lt.s32.totalorder %s19, 1
      %s230 = scalar_select %p229, %s19, 1
      %s231 = smul.addr %s230, 3
      %s232 = sadd.s32 1, %s231
      %s233 = smul.addr %s232, 4
      %s234 = scalar_lea.vmem %s1, %s233
      %p235 = pneg %p76
      %p236 = pneg %p73
      %p237 = scmp.lt.s32.totalorder %s19, 1
      %s238 = scalar_select %p237, %s19, 1
      %s239 = smul.addr %s238, 3
      %s240 = sadd.s32 2, %s239
      %s241 = smul.addr %s240, 4
      %s242 = scalar_lea.vmem %s2, %s241
      %p243 = pneg %p102
      %p244 = pneg %p99
      %p245 = scmp.lt.s32.totalorder %s19, 1
      %s246 = scalar_select %p245, %s19, 1
      %s247 = scalar_lea.vmem %s3, %s246
      %p248 = pneg %p128
      %p249 = pneg %p125
      %p250 = pneg %p156
      %p251 = pneg %p153
      %p252 = scmp.lt.s32.totalorder %s19, 1
      %s253 = scalar_select %p252, %s19, 1
      %p254 = scmp.lt.s32.totalorder %s20, 0
      %s255 = scalar_select %p254, %s20, 0
      %s256 = sadd.s32 %s255, %s253
      %s257 = smul.addr %s256, 4
      %s258 = scalar_lea.vmem %s4, %s257
      %p259 = scmp.lt.s32.totalorder %s19, 1
      %s260 = scalar_select %p259, %s19, 1
      %p261 = scmp.lt.s32.totalorder %s20, 0
      %s262 = scalar_select %p261, %s20, 0
      %s263 = smul.addr %s262, 3
      %s264 = smul.addr %s260, 3
      %s265 = sadd.s32 %s263, %s264
      %s266 = smul.addr %s265, 4
      %s267 = scalar_lea.vmem %s0, %s266
      %p268 = scmp.lt.s32.totalorder %s19, 1
      %s269 = scalar_select %p268, %s19, 1
      %s270 = smul.addr %s269, 3
      %s271 = sadd.s32 1, %s270
      %s272 = smul.addr %s271, 4
      %s273 = scalar_lea.vmem %s1, %s272
      %p274 = scmp.lt.s32.totalorder %s19, 1
      %s275 = scalar_select %p274, %s19, 1
      %s276 = smul.addr %s275, 3
      %s277 = sadd.s32 2, %s276
      %s278 = smul.addr %s277, 4
      %s279 = scalar_lea.vmem %s2, %s278
      %p280 = scmp.lt.s32.totalorder %s19, 1
      %s281 = scalar_select %p280, %s19, 1
      %s282 = scalar_lea.vmem %s3, %s281
      %p283 = scmp.lt.s32.totalorder %s19, 1
      %s284 = scalar_select %p283, %s19, 1
      %p285 = scmp.lt.s32.totalorder %s20, 0
      %s286 = scalar_select %p285, %s20, 0
      %s287 = sadd.s32 %s286, %s284
      %s288 = smul.addr %s287, 4
      %s289 = scalar_lea.vmem %s4, %s288
      %v291 = vld [vmem:[%s267] sm:$0xf]
      %v292 = vld [vmem:[%s273] sm:$0xf]
      %v293 = vld [vmem:[%s279] sm:$0xf]
      %v294 = vld [vmem:[%s282] sm:$0x1]
      %vm295 = vcmask 523264
      %v297 = vsel %vm295, %v291, 0
      %v300 = vsel %vm295, %v292, 0
      %302 = vmatpush.bf16.xpose.msra.mxu0 0
      %303 = vmatpush.bf16.xpose.msra.mxu0 0
      %304 = vmatpush.bf16.xpose.msra.mxu0 0
      %305 = vmatpush.bf16.xpose.msra.mxu0 0
      %306 = vmatpush.bf16.xpose.msra.mxu0 0
      %307 = vmatpush.bf16.xpose.msra.mxu0 0
      %308 = vmatpush.bf16.xpose.msra.mxu0 0
      %309 = vmatpush.bf16.xpose.msra.mxu0 %v300
      %310 = vmatmul.bf16.gmra.mxu0 %v297
      %v311 = vpop.f32.mrf.mxu0
      %v312 = vadd.f32 0.0, %v311
      %v313 = vpop.f32.mrf.mxu0
      %314 = vdwg.mxu0
      %v315 = vmul.f32 %v312, 0.125
      %v317 = vperm.slane %v294, 0
      %v319 = vadd.f32 %v315, %v317
      %vm320 = vcmask 64512
      %v321 = vsel %vm320, %v319, -inf
      %322 = vmax.xlane.f32.xlu0 %v321
      %v323 = vpop.xlane.xlu0 %322
      %v324 = vsub.f32 %v319, %v323
      %v325 = vmul.f32 %v324, 1.442695
      %v326 = vpow.pop %v325
      %v327 = vsel %vm320, %v326, 0.0
      %328 = vadd.xlane.f32.xlu0 %v327
      %v329 = vpop.xlane.xlu0 %328
      %v330 = vrcp.pop %v329
      %v331 = vmul.f32 %v326, %v330
      %v332 = vpack.c.bf16 %v331, %v331
      %v334 = vsel %vm320, %v332, 0
      %vm336 = vcmask 1043456
      %v338 = vsel %vm336, %v293, 0
      %340 = vmatpush.bf16.msra.mxu0 0
      %341 = vmatpush.bf16.msra.mxu0 0
      %342 = vmatpush.bf16.msra.mxu0 0
      %343 = vmatpush.bf16.msra.mxu0 0
      %344 = vmatpush.bf16.msra.mxu0 0
      %345 = vmatpush.bf16.msra.mxu0 0
      %346 = vmatpush.bf16.msra.mxu0 0
      %347 = vmatpush.bf16.msra.mxu0 %v338
      %348 = vmatmul.bf16.gmra.mxu0 %v334
      %v349 = vpop.f32.mrf.mxu0
      %v350 = vadd.f32 0.0, %v349
      %v351 = vpop.f32.mrf.mxu0
      %352 = vdwg.mxu0
      %v354 = vunpack.c.l.b16 %v291
      %v355 = vpack.c.b16 %v354, %v354
      %356 = vrot.lane.b32.xlu0 %v355, 64
      %v357 = vpop.permute.xlu0 %356
      %v359 = vunpack.c.l.b16 %v292
      %v360 = vpack.c.b16 %v359, %v359
      %361 = vrot.lane.b32.xlu0 %v360, 64
      %v362 = vpop.permute.xlu0 %361
      %v364 = vsel %vm295, %v357, 0
      %v367 = vsel %vm295, %v362, 0
      %369 = vmatpush.bf16.xpose.msra.mxu0 0
      %370 = vmatpush.bf16.xpose.msra.mxu0 0
      %371 = vmatpush.bf16.xpose.msra.mxu0 0
      %372 = vmatpush.bf16.xpose.msra.mxu0 0
      %373 = vmatpush.bf16.xpose.msra.mxu0 0
      %374 = vmatpush.bf16.xpose.msra.mxu0 0
      %375 = vmatpush.bf16.xpose.msra.mxu0 0
      %376 = vmatpush.bf16.xpose.msra.mxu0 %v367
      %377 = vmatmul.bf16.gmra.mxu0 %v364
      %v378 = vpop.f32.mrf.mxu0
      %v379 = vadd.f32 0.0, %v378
      %v380 = vpop.f32.mrf.mxu0
      %381 = vdwg.mxu0
      %v382 = vmul.f32 %v379, 0.125
      %v383 = vadd.f32 %v382, %v317
      %v384 = vsel %vm320, %v383, -inf
      %385 = vmax.xlane.f32.xlu0 %v384
      %v386 = vpop.xlane.xlu0 %385
      %v387 = vsub.f32 %v383, %v386
      %v388 = vmul.f32 %v387, 1.442695
      %v389 = vpow.pop %v388
      %v390 = vsel %vm320, %v389, 0.0
      %391 = vadd.xlane.f32.xlu0 %v390
      %v392 = vpop.xlane.xlu0 %391
      %v393 = vrcp.pop %v392
      %v394 = vmul.f32 %v389, %v393
      %v395 = vpack.c.bf16 %v394, %v394
      %v397 = vunpack.c.l.b16 %v293
      %v398 = vpack.c.b16 %v397, %v397
      %399 = vrot.lane.b32.xlu0 %v398, 64
      %v400 = vpop.permute.xlu0 %399
      %v402 = vsel %vm320, %v395, 0
      %v405 = vsel %vm336, %v400, 0
      %407 = vmatpush.bf16.msra.mxu0 0
      %408 = vmatpush.bf16.msra.mxu0 0
      %409 = vmatpush.bf16.msra.mxu0 0
      %410 = vmatpush.bf16.msra.mxu0 0
      %411 = vmatpush.bf16.msra.mxu0 0
      %412 = vmatpush.bf16.msra.mxu0 0
      %413 = vmatpush.bf16.msra.mxu0 0
      %414 = vmatpush.bf16.msra.mxu0 %v405
      %415 = vmatmul.bf16.gmra.mxu0 %v402
      %v416 = vpop.f32.mrf.mxu0
      %v417 = vadd.f32 0.0, %v416
      %v418 = vpop.f32.mrf.mxu0
      %419 = vdwg.mxu0
      %421 = vrot.lane.b32.xlu0 %v417, 64
      %v422 = vpop.permute.xlu0 %421
      %v424 = vsel %vm295, %v350, %v422
      %v425 = vpack.c.bf16 %v424, %v424
      %426 = vst [vmem:[%s289] sm:$0xf] %v425
      %p427 = scmp.lt.s32.totalorder %s19, 1
      %s428 = scalar_select %p427, %s19, 1
      %p429 = scmp.lt.s32.totalorder %s20, 0
      %s430 = scalar_select %p429, %s20, 0
      %s431 = sadd.s32 %s430, %s428
      %s432 = smul.addr %s431, 4
      %s433 = scalar_lea.vmem %s4, %s432
      // Predicated region
      $region37: #{bert_classifier_forward.12} parent=35 // pred_check
        %p434 = pneg %p153
      $region38: #{bert_classifier_forward.12} parent=35 // pred_check_branch
        %436 = sbr.rel (%p434) target = $region40
      $region39: #{bert_classifier_forward.12} parent=35 // pred_region
        _
      $region40: #{bert_classifier_forward.12} parent=35 // pred_fallthru
        _
    $region36: #{bert_classifier_forward.12} parent=5 // pred_fallthru
      _
    %p437 = scmp.le.s32.totalorder 2, %s10
    // Predicated region
    $region41: #{bert_classifier_forward.12} parent=5 // pred_check
      %p438 = pneg %p437
    $region42: #{bert_classifier_forward.12} parent=5 // pred_check_branch
      %440 = sbr.rel (%p438) target = $region44
    $region43: #{bert_classifier_forward.12} parent=5 // pred_region
      %s441 = ssub.s32 %s10, 2
      // Predicated region
      $region45: #{bert_classifier_forward.12} parent=43 // pred_check
        %p442 = pneg %p159
      $region46: #{bert_classifier_forward.12} parent=43 // pred_check_branch
        %444 = sbr.rel (%p442) target = $region48
      $region47: #{bert_classifier_forward.12} parent=43 // pred_region
        %p445 = scmp.lt.s32.totalorder %s21, 1
        %s446 = scalar_select %p445, %s21, 1
        %p447 = scmp.lt.s32.totalorder %s22, 0
        %s448 = scalar_select %p447, %s22, 0
        %s449 = sadd.s32 %s448, %s446
        %s450 = smul.addr %s449, 4
        %s451 = scalar_lea.vmem %s4, %s450
      $region48: #{bert_classifier_forward.12} parent=43 // pred_fallthru
        _
    $region44: #{bert_classifier_forward.12} parent=5 // pred_fallthru
      _
  $region6: #{bert_classifier_forward.12} parent=0 // loop_footer
    %s14 = sadd.s32 1, %s10
  $region7: #{bert_classifier_forward.12} parent=0 // loop_footer_branch
    %9 = sbr.rel target = $region3
  $region8: #{bert_classifier_forward.12} parent=0 // loop_exit
    _

// kernel: bert_classifier_forward.19
$region0: #{bert_classifier_forward.19}
  #allocation0 [shape = 'u32[]', space=smem, size = 0x4, offset = 0x4, fixed_abs, tag = 'smem constant byte address 0x4 - core index']
  #allocation1 [shape = 'u32[72,128]{1,0:T(1,128)}', space=vmem, size = 0x9000, scoped, tag = 'internal scratch']
  %s0 = inlined_call_operand.vmem [shape: bf16[2,128], index: 0, kind: input, shape index: {}]
  %s1 = inlined_call_operand.hbm [shape: bf16[128,256], index: 1, kind: input, shape index: {}]
  %s2 = inlined_call_operand.vmem [shape: f32[1,256], index: 2, kind: input, shape index: {}]
  %s3 = inlined_call_operand.hbm [shape: bf16[256,128], index: 3, kind: input, shape index: {}]
  %s4 = inlined_call_operand.vmem [shape: f32[1,128], index: 4, kind: input, shape index: {}]
  %s5 = inlined_call_operand.hbm [shape: bf16[128,128], index: 5, kind: input, shape index: {}]
  %s6 = inlined_call_operand.vmem [shape: f32[1,128], index: 6, kind: input, shape index: {}]
  %s7 = inlined_call_operand.hbm [shape: f32[2,128], index: 7, kind: output, shape index: {}]
  %s8 = sld [smem:[#allocation0]]
  $region50: #{bert_classifier_forward.19} parent=0
    _
  %s10 = ssub.s32 1, %s8
  %s11 = scalar_select 0, %s10, %s8
  $region1: #{bert_classifier_forward.19} parent=0
    #allocation2 [shape = 'u8[65536]{0}', space=vmem, size = 0x10000, scoped, tag = 'input window, operand 1, single buffered']
    #allocation3 [shape = 's32[1]{0}', space=sflag, size = 0x4, scoped, tag = 'scoped memory for bert_classifier_forward.19']
    #allocation4 [shape = 's32[1]{0}', space=sflag, size = 0x4, scoped, tag = 'scoped memory for bert_classifier_forward.19']
    #allocation5 [shape = 'u8[65536]{0}', space=vmem, size = 0x10000, scoped, tag = 'input window, operand 3, single buffered']
    #allocation6 [shape = 's32[1]{0}', space=sflag, size = 0x4, scoped, tag = 'scoped memory for bert_classifier_forward.19']
    #allocation7 [shape = 'u8[32768]{0}', space=vmem, size = 0x8000, scoped, tag = 'input window, operand 5, single buffered']
    #allocation8 [shape = 'u8[1024]{0}', space=vmem, size = 0x400, scoped, tag = 'output window, operand 0, single buffered']
    %12 = vsyncpa [#allocation3], 0
    %13 = vsyncpa [#allocation6], 0
    %14 = vsyncpa [#allocation4], 0
    // Predicated region
    $region2: #{bert_classifier_forward.19} parent=1 // pred_check
      _
    $region3: #{bert_classifier_forward.19} parent=1 // pred_check_branch
      %16 = sbr.rel (0) target = $region5
    $region4: #{bert_classifier_forward.19} parent=1 // pred_region
      _
    $region5: #{bert_classifier_forward.19} parent=1 // pred_fallthru
      _
    // Predicated region
    $region6: #{bert_classifier_forward.19} parent=1 // pred_check
      _
    $region7: #{bert_classifier_forward.19} parent=1 // pred_check_branch
      %18 = sbr.rel (0) target = $region9
    $region8: #{bert_classifier_forward.19} parent=1 // pred_region
      %20 = vsyncadd [#allocation3], 0
      %s21 = sshll.u32 %s1, 4
      %s22 = int_to_ptr.hbm [resolvable:$true] %s21
      %s23 = sshll.u32 [#allocation2], 4
      %s24 = int_to_ptr.vmem [resolvable:$true] %s23
      %29 = dma.hbm_to_vmem [thread:$0]  %s22, 2048, %s24, [#allocation3], 128, 128, 8
    $region9: #{bert_classifier_forward.19} parent=1 // pred_fallthru
      _
    // Predicated region
    $region10: #{bert_classifier_forward.19} parent=1 // pred_check
      _
    $region11: #{bert_classifier_forward.19} parent=1 // pred_check_branch
      %31 = sbr.rel (0) target = $region13
    $region12: #{bert_classifier_forward.19} parent=1 // pred_region
      _
    $region13: #{bert_classifier_forward.19} parent=1 // pred_fallthru
      _
    // Predicated region
    $region14: #{bert_classifier_forward.19} parent=1 // pred_check
      _
    $region15: #{bert_classifier_forward.19} parent=1 // pred_check_branch
      %33 = sbr.rel (0) target = $region17
    $region16: #{bert_classifier_forward.19} parent=1 // pred_region
      %35 = vsyncadd [#allocation6], 0
      %s36 = sshll.u32 %s3, 4
      %s37 = int_to_ptr.hbm [resolvable:$true] %s36
      %s38 = sshll.u32 [#allocation5], 4
      %s39 = int_to_ptr.vmem [resolvable:$true] %s38
      %44 = dma.hbm_to_vmem [thread:$0]  %s37, 2048, %s39, [#allocation6], 64, 64, 4
    $region17: #{bert_classifier_forward.19} parent=1 // pred_fallthru
      _
    // Predicated region
    $region18: #{bert_classifier_forward.19} parent=1 // pred_check
      _
    $region19: #{bert_classifier_forward.19} parent=1 // pred_check_branch
      %46 = sbr.rel (0) target = $region21
    $region20: #{bert_classifier_forward.19} parent=1 // pred_region
      _
    $region21: #{bert_classifier_forward.19} parent=1 // pred_fallthru
      _
    // Predicated region
    $region22: #{bert_classifier_forward.19} parent=1 // pred_check
      _
    $region23: #{bert_classifier_forward.19} parent=1 // pred_check_branch
      %48 = sbr.rel (0) target = $region25
    $region24: #{bert_classifier_forward.19} parent=1 // pred_region
      %50 = vsyncadd [#allocation6], 0
      %s51 = sshll.u32 %s5, 4
      %s52 = int_to_ptr.hbm [resolvable:$true] %s51
      %s53 = sshll.u32 [#allocation7], 4
      %s54 = int_to_ptr.vmem [resolvable:$true] %s53
      %59 = dma.hbm_to_vmem [thread:$0]  %s52, 1024, %s54, [#allocation6], 64, 64, 4
    $region25: #{bert_classifier_forward.19} parent=1 // pred_fallthru
      _
    // Predicated region
    $region26: #{bert_classifier_forward.19} parent=1 // pred_check
      _
    $region27: #{bert_classifier_forward.19} parent=1 // pred_check_branch
      %61 = sbr.rel (0) target = $region29
    $region28: #{bert_classifier_forward.19} parent=1 // pred_region
      _
    $region29: #{bert_classifier_forward.19} parent=1 // pred_fallthru
      _
    // Predicated region
    $region30: #{bert_classifier_forward.19} parent=1 // pred_check
      _
    $region31: #{bert_classifier_forward.19} parent=1 // pred_check_branch
      %63 = sbr.rel (0) target = $region33
    $region32: #{bert_classifier_forward.19} parent=1 // pred_region
      %65 = dma.done [#allocation3], 2048
    $region33: #{bert_classifier_forward.19} parent=1 // pred_fallthru
      _
    // Predicated region
    $region34: #{bert_classifier_forward.19} parent=1 // pred_check
      _
    $region35: #{bert_classifier_forward.19} parent=1 // pred_check_branch
      %67 = sbr.rel (0) target = $region37
    $region36: #{bert_classifier_forward.19} parent=1 // pred_region
      %69 = dma.done [#allocation6], 2048
    $region37: #{bert_classifier_forward.19} parent=1 // pred_fallthru
      _
    // Predicated region
    $region38: #{bert_classifier_forward.19} parent=1 // pred_check
      _
    $region39: #{bert_classifier_forward.19} parent=1 // pred_check_branch
      %71 = sbr.rel (0) target = $region41
    $region40: #{bert_classifier_forward.19} parent=1 // pred_region
      %73 = dma.done [#allocation6], 1024
    $region41: #{bert_classifier_forward.19} parent=1 // pred_fallthru
      _
    %v74 = vld [vmem:[%s0] sm:$0x1]
    %v75 = vld [vmem:[#allocation2] sm:$0xff]
    %v76 = vld [vmem:[#allocation2 + $0x8] sm:$0xff]
    %v77 = vld [vmem:[#allocation2 + $0x10] sm:$0xff]
    %v78 = vld [vmem:[#allocation2 + $0x18] sm:$0xff]
    %v79 = vld [vmem:[#allocation2 + $0x20] sm:$0xff]
    %v80 = vld [vmem:[#allocation2 + $0x28] sm:$0xff]
    %v81 = vld [vmem:[#allocation2 + $0x30] sm:$0xff]
    %v82 = vld [vmem:[#allocation2 + $0x38] sm:$0xff]
    %v83 = vld [vmem:[#allocation2 + $0x40] sm:$0xff]
    %v84 = vld [vmem:[#allocation2 + $0x48] sm:$0xff]
    %v85 = vld [vmem:[#allocation2 + $0x50] sm:$0xff]
    %v86 = vld [vmem:[#allocation2 + $0x58] sm:$0xff]
    %v87 = vld [vmem:[#allocation2 + $0x60] sm:$0xff]
    %v88 = vld [vmem:[#allocation2 + $0x68] sm:$0xff]
    %v89 = vld [vmem:[#allocation2 + $0x70] sm:$0xff]
    %v90 = vld [vmem:[#allocation2 + $0x78] sm:$0xff]
    %v91 = vld [vmem:[%s2] sm:$0x3]
    %v93 = vperm.slane %v91, 0
    %v94 = vperm.slane %v91, 1
    %v113 = vunpack.c.l.b16 %v75
    %v114 = vunpack.c.h.b16 %v75
    %v115 = vunpack.c.l.b16 %v76
    %v116 = vunpack.c.h.b16 %v76
    %v117 = vunpack.c.l.b16 %v77
    %v118 = vunpack.c.h.b16 %v77
    %v119 = vunpack.c.l.b16 %v78
    %v120 = vunpack.c.h.b16 %v78
    %v121 = vunpack.c.l.b16 %v79
    %v122 = vunpack.c.h.b16 %v79
    %v123 = vunpack.c.l.b16 %v80
    %v124 = vunpack.c.h.b16 %v80
    %v125 = vunpack.c.l.b16 %v81
    %v126 = vunpack.c.h.b16 %v81
    %v127 = vunpack.c.l.b16 %v82
    %v128 = vunpack.c.h.b16 %v82
    %v129 = vunpack.c.l.b16 %v83
    %v130 = vunpack.c.h.b16 %v83
    %v131 = vunpack.c.l.b16 %v84
    %v132 = vunpack.c.h.b16 %v84
    %v133 = vunpack.c.l.b16 %v85
    %v134 = vunpack.c.h.b16 %v85
    %v135 = vunpack.c.l.b16 %v86
    %v136 = vunpack.c.h.b16 %v86
    %v137 = vunpack.c.l.b16 %v87
    %v138 = vunpack.c.h.b16 %v87
    %v139 = vunpack.c.l.b16 %v88
    %v140 = vunpack.c.h.b16 %v88
    %v141 = vunpack.c.l.b16 %v89
    %v142 = vunpack.c.h.b16 %v89
    %v143 = vunpack.c.l.b16 %v90
    %v144 = vunpack.c.h.b16 %v90
    %v145 = vpack.c.b16 %v115, %v113
    %v146 = vpack.c.b16 %v116, %v114
    %v147 = vpack.c.b16 %v119, %v117
    %v148 = vpack.c.b16 %v120, %v118
    %v149 = vpack.c.b16 %v123, %v121
    %v150 = vpack.c.b16 %v124, %v122
    %v151 = vpack.c.b16 %v127, %v125
    %v152 = vpack.c.b16 %v128, %v126
    %v153 = vpack.c.b16 %v131, %v129
    %v154 = vpack.c.b16 %v132, %v130
    %v155 = vpack.c.b16 %v135, %v133
    %v156 = vpack.c.b16 %v136, %v134
    %v157 = vpack.c.b16 %v139, %v137
    %v158 = vpack.c.b16 %v140, %v138
    %v159 = vpack.c.b16 %v143, %v141
    %v160 = vpack.c.b16 %v144, %v142
    %177 = vmatpush.bf16.msra.mxu0 %v159
    %178 = vmatpush.bf16.msra.mxu0 %v157
    %179 = vmatpush.bf16.msra.mxu0 %v155
    %180 = vmatpush.bf16.msra.mxu0 %v153
    %181 = vmatpush.bf16.msra.mxu0 %v151
    %182 = vmatpush.bf16.msra.mxu0 %v149
    %183 = vmatpush.bf16.msra.mxu0 %v147
    %184 = vmatpush.bf16.msra.mxu0 %v145
    %185 = vmatmul.bf16.gmra.mxu0 %v74
    %v186 = vpop.f32.mrf.mxu0
    %v187 = vadd.f32 %v93, %v186
    %v188 = vpop.f32.mrf.mxu0
    %189 = vdwg.mxu0
    %190 = vmatpush.bf16.msra.mxu0 %v160
    %191 = vmatpush.bf16.msra.mxu0 %v158
    %192 = vmatpush.bf16.msra.mxu0 %v156
    %193 = vmatpush.bf16.msra.mxu0 %v154
    %194 = vmatpush.bf16.msra.mxu0 %v152
    %195 = vmatpush.bf16.msra.mxu0 %v150
    %196 = vmatpush.bf16.msra.mxu0 %v148
    %197 = vmatpush.bf16.msra.mxu0 %v146
    %198 = vmatmul.bf16.gmra.mxu0 %v74
    %v199 = vpop.f32.mrf.mxu0
    %v200 = vadd.f32 %v94, %v199
    %v201 = vpop.f32.mrf.mxu0
    %202 = vdwg.mxu0
    %v203 = vmax.f32 %v187, 0.0
    %v204 = vmax.f32 %v200, 0.0
    %v205 = vpack.c.bf16 %v203, %v203
    %v206 = vpack.c.bf16 %v204, %v204
    %v207 = vld [vmem:[#allocation5] sm:$0xf]
    %v208 = vld [vmem:[#allocation5 + $0x4] sm:$0xf]
    %v209 = vld [vmem:[#allocation5 + $0x8] sm:$0xf]
    %v210 = vld [vmem:[#allocation5 + $0xc] sm:$0xf]
    %v211 = vld [vmem:[#allocation5 + $0x10] sm:$0xf]
    %v212 = vld [vmem:[#allocation5 + $0x14] sm:$0xf]
    %v213 = vld [vmem:[#allocation5 + $0x18] sm:$0xf]
    %v214 = vld [vmem:[#allocation5 + $0x1c] sm:$0xf]
    %v215 = vld [vmem:[#allocation5 + $0x20] sm:$0xf]
    %v216 = vld [vmem:[#allocation5 + $0x24] sm:$0xf]
    %v217 = vld [vmem:[#allocation5 + $0x28] sm:$0xf]
    %v218 = vld [vmem:[#allocation5 + $0x2c] sm:$0xf]
    %v219 = vld [vmem:[#allocation5 + $0x30] sm:$0xf]
    %v220 = vld [vmem:[#allocation5 + $0x34] sm:$0xf]
    %v221 = vld [vmem:[#allocation5 + $0x38] sm:$0xf]
    %v222 = vld [vmem:[#allocation5 + $0x3c] sm:$0xf]
    %v223 = vld [vmem:[#allocation5 + $0x40] sm:$0xf]
    %v224 = vld [vmem:[#allocation5 + $0x44] sm:$0xf]
    %v225 = vld [vmem:[#allocation5 + $0x48] sm:$0xf]
    %v226 = vld [vmem:[#allocation5 + $0x4c] sm:$0xf]
    %v227 = vld [vmem:[#allocation5 + $0x50] sm:$0xf]
    %v228 = vld [vmem:[#allocation5 + $0x54] sm:$0xf]
    %v229 = vld [vmem:[#allocation5 + $0x58] sm:$0xf]
    %v230 = vld [vmem:[#allocation5 + $0x5c] sm:$0xf]
    %v231 = vld [vmem:[#allocation5 + $0x60] sm:$0xf]
    %v232 = vld [vmem:[#allocation5 + $0x64] sm:$0xf]
    %v233 = vld [vmem:[#allocation5 + $0x68] sm:$0xf]
    %v234 = vld [vmem:[#allocation5 + $0x6c] sm:$0xf]
    %v235 = vld [vmem:[#allocation5 + $0x70] sm:$0xf]
    %v236 = vld [vmem:[#allocation5 + $0x74] sm:$0xf]
    %v237 = vld [vmem:[#allocation5 + $0x78] sm:$0xf]
    %v238 = vld [vmem:[#allocation5 + $0x7c] sm:$0xf]
    %v239 = vld [vmem:[%s4] sm:$0x1]
    %v241 = vperm.slane %v239, 0
    %v275 = vunpack.c.l.b16 %v207
    %v276 = vunpack.c.l.b16 %v208
    %v277 = vunpack.c.l.b16 %v209
    %v278 = vunpack.c.l.b16 %v210
    %v279 = vunpack.c.l.b16 %v211
    %v280 = vunpack.c.l.b16 %v212
    %v281 = vunpack.c.l.b16 %v213
    %v282 = vunpack.c.l.b16 %v214
    %v283 = vunpack.c.l.b16 %v215
    %v284 = vunpack.c.l.b16 %v216
    %v285 = vunpack.c.l.b16 %v217
    %v286 = vunpack.c.l.b16 %v218
    %v287 = vunpack.c.l.b16 %v219
    %v288 = vunpack.c.l.b16 %v220
    %v289 = vunpack.c.l.b16 %v221
    %v290 = vunpack.c.l.b16 %v222
    %v291 = vunpack.c.l.b16 %v223
    %v292 = vunpack.c.l.b16 %v224
    %v293 = vunpack.c.l.b16 %v225
    %v294 = vunpack.c.l.b16 %v226
    %v295 = vunpack.c.l.b16 %v227
    %v296 = vunpack.c.l.b16 %v228
    %v297 = vunpack.c.l.b16 %v229
    %v298 = vunpack.c.l.b16 %v230
    %v299 = vunpack.c.l.b16 %v231
    %v300 = vunpack.c.l.b16 %v232
    %v301 = vunpack.c.l.b16 %v233
    %v302 = vunpack.c.l.b16 %v234
    %v303 = vunpack.c.l.b16 %v235
    %v304 = vunpack.c.l.b16 %v236
    %v305 = vunpack.c.l.b16 %v237
    %v306 = vunpack.c.l.b16 %v238
    %v307 = vpack.c.b16 %v276, %v275
    %v308 = vpack.c.b16 %v278, %v277
    %v309 = vpack.c.b16 %v280, %v279
    %v310 = vpack.c.b16 %v282, %v281
    %v311 = vpack.c.b16 %v284, %v283
    %v312 = vpack.c.b16 %v286, %v285
    %v313 = vpack.c.b16 %v288, %v287
    %v314 = vpack.c.b16 %v290, %v289
    %v315 = vpack.c.b16 %v292, %v291
    %v316 = vpack.c.b16 %v294, %v293
    %v317 = vpack.c.b16 %v296, %v295
    %v318 = vpack.c.b16 %v298, %v297
    %v319 = vpack.c.b16 %v300, %v299
    %v320 = vpack.c.b16 %v302, %v301
    %v321 = vpack.c.b16 %v304, %v303
    %v322 = vpack.c.b16 %v306, %v305
    %339 = vmatpush.bf16.msra.mxu0 %v314
    %340 = vmatpush.bf16.msra.mxu0 %v313
    %341 = vmatpush.bf16.msra.mxu0 %v312
    %342 = vmatpush.bf16.msra.mxu0 %v311
    %343 = vmatpush.bf16.msra.mxu0 %v310
    %344 = vmatpush.bf16.msra.mxu0 %v309
    %345 = vmatpush.bf16.msra.mxu0 %v308
    %346 = vmatpush.bf16.msra.mxu0 %v307
    %347 = vmatmul.bf16.gmra.mxu0 %v205
    %v348 = vpop.f32.mrf.mxu0
    %v349 = vadd.f32 %v241, %v348
    %v350 = vpop.f32.mrf.mxu0
    %351 = vdwg.mxu0
    %352 = vmatpush.bf16.msra.mxu0 %v322
    %353 = vmatpush.bf16.msra.mxu0 %v321
    %354 = vmatpush.bf16.msra.mxu0 %v320
    %355 = vmatpush.bf16.msra.mxu0 %v319
    %356 = vmatpush.bf16.msra.mxu0 %v318
    %357 = vmatpush.bf16.msra.mxu0 %v317
    %358 = vmatpush.bf16.msra.mxu0 %v316
    %359 = vmatpush.bf16.msra.mxu0 %v315
    %360 = vmatmul.bf16.gmra.mxu0 %v206
    %v361 = vpop.f32.mrf.mxu0
    %v362 = vadd.f32 %v349, %v361
    %v363 = vpop.f32.mrf.mxu0
    %364 = vdwg.mxu0
    %v365 = vmax.f32 %v362, 0.0
    %v366 = vpack.c.bf16 %v365, %v365
    %v367 = vld [vmem:[#allocation7] sm:$0xf]
    %v368 = vld [vmem:[#allocation7 + $0x4] sm:$0xf]
    %v369 = vld [vmem:[#allocation7 + $0x8] sm:$0xf]
    %v370 = vld [vmem:[#allocation7 + $0xc] sm:$0xf]
    %v371 = vld [vmem:[#allocation7 + $0x10] sm:$0xf]
    %v372 = vld [vmem:[#allocation7 + $0x14] sm:$0xf]
    %v373 = vld [vmem:[#allocation7 + $0x18] sm:$0xf]
    %v374 = vld [vmem:[#allocation7 + $0x1c] sm:$0xf]
    %v375 = vld [vmem:[#allocation7 + $0x20] sm:$0xf]
    %v376 = vld [vmem:[#allocation7 + $0x24] sm:$0xf]
    %v377 = vld [vmem:[#allocation7 + $0x28] sm:$0xf]
    %v378 = vld [vmem:[#allocation7 + $0x2c] sm:$0xf]
    %v379 = vld [vmem:[#allocation7 + $0x30] sm:$0xf]
    %v380 = vld [vmem:[#allocation7 + $0x34] sm:$0xf]
    %v381 = vld [vmem:[#allocation7 + $0x38] sm:$0xf]
    %v382 = vld [vmem:[#allocation7 + $0x3c] sm:$0xf]
    %v383 = vld [vmem:[%s6] sm:$0x1]
    %v385 = vperm.slane %v383, 0
    %v403 = vunpack.c.l.b16 %v367
    %v404 = vunpack.c.l.b16 %v368
    %v405 = vunpack.c.l.b16 %v369
    %v406 = vunpack.c.l.b16 %v370
    %v407 = vunpack.c.l.b16 %v371
    %v408 = vunpack.c.l.b16 %v372
    %v409 = vunpack.c.l.b16 %v373
    %v410 = vunpack.c.l.b16 %v374
    %v411 = vunpack.c.l.b16 %v375
    %v412 = vunpack.c.l.b16 %v376
    %v413 = vunpack.c.l.b16 %v377
    %v414 = vunpack.c.l.b16 %v378
    %v415 = vunpack.c.l.b16 %v379
    %v416 = vunpack.c.l.b16 %v380
    %v417 = vunpack.c.l.b16 %v381
    %v418 = vunpack.c.l.b16 %v382
    %v419 = vpack.c.b16 %v404, %v403
    %v420 = vpack.c.b16 %v406, %v405
    %v421 = vpack.c.b16 %v408, %v407
    %v422 = vpack.c.b16 %v410, %v409
    %v423 = vpack.c.b16 %v412, %v411
    %v424 = vpack.c.b16 %v414, %v413
    %v425 = vpack.c.b16 %v416, %v415
    %v426 = vpack.c.b16 %v418, %v417
    %435 = vmatpush.bf16.msra.mxu0 %v426
    %436 = vmatpush.bf16.msra.mxu0 %v425
    %437 = vmatpush.bf16.msra.mxu0 %v424
    %438 = vmatpush.bf16.msra.mxu0 %v423
    %439 = vmatpush.bf16.msra.mxu0 %v422
    %440 = vmatpush.bf16.msra.mxu0 %v421
    %441 = vmatpush.bf16.msra.mxu0 %v420
    %442 = vmatpush.bf16.msra.mxu0 %v419
    %443 = vmatmul.bf16.gmra.mxu0 %v366
    %v444 = vpop.f32.mrf.mxu0
    %v445 = vadd.f32 %v385, %v444
    %v446 = vpop.f32.mrf.mxu0
    %447 = vdwg.mxu0
    %448 = vst [vmem:[#allocation8] sm:$0x3] %v445
    // Predicated region
    $region42: #{bert_classifier_forward.19} parent=1 // pred_check
      _
    $region43: #{bert_classifier_forward.19} parent=1 // pred_check_branch
      %450 = sbr.rel (0) target = $region45
    $region44: #{bert_classifier_forward.19} parent=1 // pred_region
      %452 = vsyncadd [#allocation4], 0
      %s454 = sshll.u32 [#allocation8], 4
      %s455 = int_to_ptr.vmem [resolvable:$true] %s454
      %s456 = sshll.u32 %s7, 4
      %s457 = int_to_ptr.hbm [resolvable:$true] %s456
      %459 = dma.vmem_to_hbm [thread:$0]  %s455, 32, %s457, [#allocation4]
    $region45: #{bert_classifier_forward.19} parent=1 // pred_fallthru
      _
    // Predicated region
    $region46: #{bert_classifier_forward.19} parent=1 // pred_check
      _
    $region47: #{bert_classifier_forward.19} parent=1 // pred_check_branch
      %461 = sbr.rel (0) target = $region49
    $region48: #{bert_classifier_forward.19} parent=1 // pred_region
      %463 = dma.done [#allocation4], 32
    $region49: #{bert_classifier_forward.19} parent=1 // pred_fallthru
      _
    %464 = vsyncpa [#allocation3], 1
    %465 = vsyncpa [#allocation6], 1
    %466 = vsyncpa [#allocation4], 1

// kernel: bert_classifier_forward.14
$region0: #{bert_classifier_forward.14}
  #allocation0 [shape = 'u32[]', space=smem, size = 0x4, offset = 0x4, fixed_abs, tag = 'smem constant byte address 0x4 - core index']
  #allocation1 [shape = 'u32[72,128]{1,0:T(1,128)}', space=vmem, size = 0x9000, scoped, tag = 'internal scratch']
  %s0 = inlined_call_operand.vmem [shape: bf16[16,128], index: 0, kind: input, shape index: {}]
  %s1 = inlined_call_operand.vmem [shape: bf16[128,512], index: 1, kind: input, shape index: {}]
  %s2 = inlined_call_operand.vmem [shape: f32[1,512], index: 2, kind: input, shape index: {}]
  %s3 = inlined_call_operand.hbm [shape: bf16[512,128], index: 3, kind: input, shape index: {}]
  %s4 = inlined_call_operand.vmem [shape: f32[1,128], index: 4, kind: input, shape index: {}]
  %s5 = inlined_call_operand.vmem [shape: f32[1,128], index: 5, kind: input, shape index: {}]
  %s6 = inlined_call_operand.vmem [shape: f32[1,128], index: 6, kind: input, shape index: {}]
  %s7 = inlined_call_operand.vmem [shape: bf16[16,128], index: 7, kind: output, shape index: {}]
  %s8 = sld [smem:[#allocation0]]
  $region42: #{bert_classifier_forward.14} parent=0
    _
  %s10 = ssub.s32 1, %s8
  %s11 = scalar_select 0, %s10, %s8
  $region1: #{bert_classifier_forward.14} parent=0
    #allocation2 [shape = 'u8[131072]{0}', space=vmem, size = 0x20000, scoped, tag = 'input window, operand 3, single buffered']
    #allocation3 [shape = 's32[1]{0}', space=sflag, size = 0x4, scoped, tag = 'scoped memory for bert_classifier_forward.14']
    %12 = vsyncpa [#allocation3], 0
    // Predicated region
    $region2: #{bert_classifier_forward.14} parent=1 // pred_check
      _
    $region3: #{bert_classifier_forward.14} parent=1 // pred_check_branch
      %14 = sbr.rel (0) target = $region5
    $region4: #{bert_classifier_forward.14} parent=1 // pred_region
      _
    $region5: #{bert_classifier_forward.14} parent=1 // pred_fallthru
      _
    // Predicated region
    $region6: #{bert_classifier_forward.14} parent=1 // pred_check
      _
    $region7: #{bert_classifier_forward.14} parent=1 // pred_check_branch
      %16 = sbr.rel (0) target = $region9
    $region8: #{bert_classifier_forward.14} parent=1 // pred_region
      _
    $region9: #{bert_classifier_forward.14} parent=1 // pred_fallthru
      _
    // Predicated region
    $region10: #{bert_classifier_forward.14} parent=1 // pred_check
      _
    $region11: #{bert_classifier_forward.14} parent=1 // pred_check_branch
      %18 = sbr.rel (0) target = $region13
    $region12: #{bert_classifier_forward.14} parent=1 // pred_region
      _
    $region13: #{bert_classifier_forward.14} parent=1 // pred_fallthru
      _
    // Predicated region
    $region14: #{bert_classifier_forward.14} parent=1 // pred_check
      _
    $region15: #{bert_classifier_forward.14} parent=1 // pred_check_branch
      %20 = sbr.rel (0) target = $region17
    $region16: #{bert_classifier_forward.14} parent=1 // pred_region
      %22 = vsyncadd [#allocation3], 0
      %s23 = sshll.u32 %s3, 4
      %s24 = int_to_ptr.hbm [resolvable:$true] %s23
      %s25 = sshll.u32 [#allocation2], 4
      %s26 = int_to_ptr.vmem [resolvable:$true] %s25
      %31 = dma.hbm_to_vmem [thread:$0]  %s24, 4096, %s26, [#allocation3], 64, 64, 4
    $region17: #{bert_classifier_forward.14} parent=1 // pred_fallthru
      _
    // Predicated region
    $region18: #{bert_classifier_forward.14} parent=1 // pred_check
      _
    $region19: #{bert_classifier_forward.14} parent=1 // pred_check_branch
      %33 = sbr.rel (0) target = $region21
    $region20: #{bert_classifier_forward.14} parent=1 // pred_region
      _
    $region21: #{bert_classifier_forward.14} parent=1 // pred_fallthru
      _
    // Predicated region
    $region22: #{bert_classifier_forward.14} parent=1 // pred_check
      _
    $region23: #{bert_classifier_forward.14} parent=1 // pred_check_branch
      %35 = sbr.rel (0) target = $region25
    $region24: #{bert_classifier_forward.14} parent=1 // pred_region
      _
    $region25: #{bert_classifier_forward.14} parent=1 // pred_fallthru
      _
    // Predicated region
    $region26: #{bert_classifier_forward.14} parent=1 // pred_check
      _
    $region27: #{bert_classifier_forward.14} parent=1 // pred_check_branch
      %37 = sbr.rel (0) target = $region29
    $region28: #{bert_classifier_forward.14} parent=1 // pred_region
      _
    $region29: #{bert_classifier_forward.14} parent=1 // pred_fallthru
      _
    // Predicated region
    $region30: #{bert_classifier_forward.14} parent=1 // pred_check
      _
    $region31: #{bert_classifier_forward.14} parent=1 // pred_check_branch
      %39 = sbr.rel (0) target = $region33
    $region32: #{bert_classifier_forward.14} parent=1 // pred_region
      %41 = dma.done [#allocation3], 4096
    $region33: #{bert_classifier_forward.14} parent=1 // pred_fallthru
      _
    %v42 = vld [vmem:[%s0] sm:$0xf]
    %v43 = vld [vmem:[%s0 + $0x4] sm:$0xf]
    %v44 = vld [vmem:[%s1] sm:$0xff]
    %v45 = vld [vmem:[%s1 + $0x8] sm:$0xff]
    %v46 = vld [vmem:[%s1 + $0x10] sm:$0xff]
    %v47 = vld [vmem:[%s1 + $0x18] sm:$0xff]
    %v48 = vld [vmem:[%s1 + $0x20] sm:$0xff]
    %v49 = vld [vmem:[%s1 + $0x28] sm:$0xff]
    %v50 = vld [vmem:[%s1 + $0x30] sm:$0xff]
    %v51 = vld [vmem:[%s1 + $0x38] sm:$0xff]
    %v52 = vld [vmem:[%s1 + $0x40] sm:$0xff]
    %v53 = vld [vmem:[%s1 + $0x48] sm:$0xff]
    %v54 = vld [vmem:[%s1 + $0x50] sm:$0xff]
    %v55 = vld [vmem:[%s1 + $0x58] sm:$0xff]
    %v56 = vld [vmem:[%s1 + $0x60] sm:$0xff]
    %v57 = vld [vmem:[%s1 + $0x68] sm:$0xff]
    %v58 = vld [vmem:[%s1 + $0x70] sm:$0xff]
    %v59 = vld [vmem:[%s1 + $0x78] sm:$0xff]
    %v60 = vld [vmem:[%s1 + $0x80] sm:$0xff]
    %v61 = vld [vmem:[%s1 + $0x88] sm:$0xff]
    %v62 = vld [vmem:[%s1 + $0x90] sm:$0xff]
    %v63 = vld [vmem:[%s1 + $0x98] sm:$0xff]
    %v64 = vld [vmem:[%s1 + $0xa0] sm:$0xff]
    %v65 = vld [vmem:[%s1 + $0xa8] sm:$0xff]
    %v66 = vld [vmem:[%s1 + $0xb0] sm:$0xff]
    %v67 = vld [vmem:[%s1 + $0xb8] sm:$0xff]
    %v68 = vld [vmem:[%s1 + $0xc0] sm:$0xff]
    %v69 = vld [vmem:[%s1 + $0xc8] sm:$0xff]
    %v70 = vld [vmem:[%s1 + $0xd0] sm:$0xff]
    %v71 = vld [vmem:[%s1 + $0xd8] sm:$0xff]
    %v72 = vld [vmem:[%s1 + $0xe0] sm:$0xff]
    %v73 = vld [vmem:[%s1 + $0xe8] sm:$0xff]
    %v74 = vld [vmem:[%s1 + $0xf0] sm:$0xff]
    %v75 = vld [vmem:[%s1 + $0xf8] sm:$0xff]
    %v76 = vld [vmem:[%s2] sm:$0xf]
    %v78 = vperm.slane %v76, 0
    %v79 = vperm.slane %v76, 1
    %v80 = vperm.slane %v76, 2
    %v81 = vperm.slane %v76, 3
    %v88 = vunpack.c.l.b16 %v42
    %v89 = vunpack.c.l.b16 %v43
    %v90 = vpack.c.b16 %v89, %v88
    %v124 = vunpack.c.l.b16 %v44
    %v125 = vunpack.c.h.b16 %v44
    %v126 = vunpack.c.l.b16 %v45
    %v127 = vunpack.c.h.b16 %v45
    %v128 = vunpack.c.l.b16 %v46
    %v129 = vunpack.c.h.b16 %v46
    %v130 = vunpack.c.l.b16 %v47
    %v131 = vunpack.c.h.b16 %v47
    %v132 = vunpack.c.l.b16 %v48
    %v133 = vunpack.c.h.b16 %v48
    %v134 = vunpack.c.l.b16 %v49
    %v135 = vunpack.c.h.b16 %v49
    %v136 = vunpack.c.l.b16 %v50
    %v137 = vunpack.c.h.b16 %v50
    %v138 = vunpack.c.l.b16 %v51
    %v139 = vunpack.c.h.b16 %v51
    %v140 = vunpack.c.l.b16 %v52
    %v141 = vunpack.c.h.b16 %v52
    %v142 = vunpack.c.l.b16 %v53
    %v143 = vunpack.c.h.b16 %v53
    %v144 = vunpack.c.l.b16 %v54
    %v145 = vunpack.c.h.b16 %v54
    %v146 = vunpack.c.l.b16 %v55
    %v147 = vunpack.c.h.b16 %v55
    %v148 = vunpack.c.l.b16 %v56
    %v149 = vunpack.c.h.b16 %v56
    %v150 = vunpack.c.l.b16 %v57
    %v151 = vunpack.c.h.b16 %v57
    %v152 = vunpack.c.l.b16 %v58
    %v153 = vunpack.c.h.b16 %v58
    %v154 = vunpack.c.l.b16 %v59
    %v155 = vunpack.c.h.b16 %v59
    %v156 = vunpack.c.l.b16 %v60
    %v157 = vunpack.c.h.b16 %v60
    %v158 = vunpack.c.l.b16 %v61
    %v159 = vunpack.c.h.b16 %v61
    %v160 = vunpack.c.l.b16 %v62
    %v161 = vunpack.c.h.b16 %v62
    %v162 = vunpack.c.l.b16 %v63
    %v163 = vunpack.c.h.b16 %v63
    %v164 = vunpack.c.l.b16 %v64
    %v165 = vunpack.c.h.b16 %v64
    %v166 = vunpack.c.l.b16 %v65
    %v167 = vunpack.c.h.b16 %v65
    %v168 = vunpack.c.l.b16 %v66
    %v169 = vunpack.c.h.b16 %v66
    %v170 = vunpack.c.l.b16 %v67
    %v171 = vunpack.c.h.b16 %v67
    %v172 = vunpack.c.l.b16 %v68
    %v173 = vunpack.c.h.b16 %v68
    %v174 = vunpack.c.l.b16 %v69
    %v175 = vunpack.c.h.b16 %v69
    %v176 = vunpack.c.l.b16 %v70
    %v177 = vunpack.c.h.b16 %v70
    %v178 = vunpack.c.l.b16 %v71
    %v179 = vunpack.c.h.b16 %v71
    %v180 = vunpack.c.l.b16 %v72
    %v181 = vunpack.c.h.b16 %v72
    %v182 = vunpack.c.l.b16 %v73
    %v183 = vunpack.c.h.b16 %v73
    %v184 = vunpack.c.l.b16 %v74
    %v185 = vunpack.c.h.b16 %v74
    %v186 = vunpack.c.l.b16 %v75
    %v187 = vunpack.c.h.b16 %v75
    %v188 = vpack.c.b16 %v128, %v124
    %v189 = vpack.c.b16 %v129, %v125
    %v190 = vpack.c.b16 %v130, %v126
    %v191 = vpack.c.b16 %v131, %v127
    %v192 = vpack.c.b16 %v136, %v132
    %v193 = vpack.c.b16 %v137, %v133
    %v194 = vpack.c.b16 %v138, %v134
    %v195 = vpack.c.b16 %v139, %v135
    %v196 = vpack.c.b16 %v144, %v140
    %v197 = vpack.c.b16 %v145, %v141
    %v198 = vpack.c.b16 %v146, %v142
    %v199 = vpack.c.b16 %v147, %v143
    %v200 = vpack.c.b16 %v152, %v148
    %v201 = vpack.c.b16 %v153, %v149
    %v202 = vpack.c.b16 %v154, %v150
    %v203 = vpack.c.b16 %v155, %v151
    %v204 = vpack.c.b16 %v160, %v156
    %v205 = vpack.c.b16 %v161, %v157
    %v206 = vpack.c.b16 %v162, %v158
    %v207 = vpack.c.b16 %v163, %v159
    %v208 = vpack.c.b16 %v168, %v164
    %v209 = vpack.c.b16 %v169, %v165
    %v210 = vpack.c.b16 %v170, %v166
    %v211 = vpack.c.b16 %v171, %v167
    %v212 = vpack.c.b16 %v176, %v172
    %v213 = vpack.c.b16 %v177, %v173
    %v214 = vpack.c.b16 %v178, %v174
    %v215 = vpack.c.b16 %v179, %v175
    %v216 = vpack.c.b16 %v184, %v180
    %v217 = vpack.c.b16 %v185, %v181
    %v218 = vpack.c.b16 %v186, %v182
    %v219 = vpack.c.b16 %v187, %v183
    %252 = vmatpush.bf16.msra.mxu0 %v216
    %253 = vmatpush.bf16.msra.mxu0 %v212
    %254 = vmatpush.bf16.msra.mxu0 %v208
    %255 = vmatpush.bf16.msra.mxu0 %v204
    %256 = vmatpush.bf16.msra.mxu0 %v200
    %257 = vmatpush.bf16.msra.mxu0 %v196
    %258 = vmatpush.bf16.msra.mxu0 %v192
    %259 = vmatpush.bf16.msra.mxu0 %v188
    %260 = vmatmul.bf16.gmra.mxu0 %v90
    %v261 = vpop.f32.mrf.mxu0
    %v262 = vadd.f32 %v78, %v261
    %v263 = vpop.f32.mrf.mxu0
    %v264 = vadd.f32 %v78, %v263
    %265 = vdwg.mxu0
    %266 = vmatpush.bf16.msra.mxu0 %v217
    %267 = vmatpush.bf16.msra.mxu0 %v213
    %268 = vmatpush.bf16.msra.mxu0 %v209
    %269 = vmatpush.bf16.msra.mxu0 %v205
    %270 = vmatpush.bf16.msra.mxu0 %v201
    %271 = vmatpush.bf16.msra.mxu0 %v197
    %272 = vmatpush.bf16.msra.mxu0 %v193
    %273 = vmatpush.bf16.msra.mxu0 %v189
    %274 = vmatmul.bf16.gmra.mxu0 %v90
    %v275 = vpop.f32.mrf.mxu0
    %v276 = vadd.f32 %v79, %v275
    %v277 = vpop.f32.mrf.mxu0
    %v278 = vadd.f32 %v79, %v277
    %279 = vdwg.mxu0
    %280 = vmatpush.bf16.msra.mxu0 %v218
    %281 = vmatpush.bf16.msra.mxu0 %v214
    %282 = vmatpush.bf16.msra.mxu0 %v210
    %283 = vmatpush.bf16.msra.mxu0 %v206
    %284 = vmatpush.bf16.msra.mxu0 %v202
    %285 = vmatpush.bf16.msra.mxu0 %v198
    %286 = vmatpush.bf16.msra.mxu0 %v194
    %287 = vmatpush.bf16.msra.mxu0 %v190
    %288 = vmatmul.bf16.gmra.mxu0 %v90
    %v289 = vpop.f32.mrf.mxu0
    %v290 = vadd.f32 %v80, %v289
    %v291 = vpop.f32.mrf.mxu0
    %v292 = vadd.f32 %v80, %v291
    %293 = vdwg.mxu0
    %294 = vmatpush.bf16.msra.mxu0 %v219
    %295 = vmatpush.bf16.msra.mxu0 %v215
    %296 = vmatpush.bf16.msra.mxu0 %v211
    %297 = vmatpush.bf16.msra.mxu0 %v207
    %298 = vmatpush.bf16.msra.mxu0 %v203
    %299 = vmatpush.bf16.msra.mxu0 %v199
    %300 = vmatpush.bf16.msra.mxu0 %v195
    %301 = vmatpush.bf16.msra.mxu0 %v191
    %302 = vmatmul.bf16.gmra.mxu0 %v90
    %v303 = vpop.f32.mrf.mxu0
    %v304 = vadd.f32 %v81, %v303
    %v305 = vpop.f32.mrf.mxu0
    %v306 = vadd.f32 %v81, %v305
    %307 = vdwg.mxu0
    %v308 = vmul.f32 %v262, %v262
    %v309 = vmul.f32 %v276, %v276
    %v310 = vmul.f32 %v290, %v290
    %v311 = vmul.f32 %v304, %v304
    %v312 = vmul.f32 %v264, %v264
    %v313 = vmul.f32 %v278, %v278
    %v314 = vmul.f32 %v292, %v292
    %v315 = vmul.f32 %v306, %v306
    %v316 = vmul.f32 %v262, %v308
    %v317 = vmul.f32 %v276, %v309
    %v318 = vmul.f32 %v290, %v310
    %v319 = vmul.f32 %v304, %v311
    %v320 = vmul.f32 %v264, %v312
    %v321 = vmul.f32 %v278, %v313
    %v322 = vmul.f32 %v292, %v314
    %v323 = vmul.f32 %v306, %v315
    %v324 = vmul.f32 %v316, 0.044715
    %v325 = vmul.f32 %v317, 0.044715
    %v326 = vmul.f32 %v318, 0.044715
    %v327 = vmul.f32 %v319, 0.044715
    %v328 = vmul.f32 %v320, 0.044715
    %v329 = vmul.f32 %v321, 0.044715
    %v330 = vmul.f32 %v322, 0.044715
    %v331 = vmul.f32 %v323, 0.044715
    %v332 = vadd.f32 %v262, %v324
    %v333 = vadd.f32 %v276, %v325
    %v334 = vadd.f32 %v290, %v326
    %v335 = vadd.f32 %v304, %v327
    %v336 = vadd.f32 %v264, %v328
    %v337 = vadd.f32 %v278, %v329
    %v338 = vadd.f32 %v292, %v330
    %v339 = vadd.f32 %v306, %v331
    %v340 = vmul.f32 %v332, 0.7978846
    %v341 = vmul.f32 %v333, 0.7978846
    %v342 = vmul.f32 %v334, 0.7978846
    %v343 = vmul.f32 %v335, 0.7978846
    %v344 = vmul.f32 %v336, 0.7978846
    %v345 = vmul.f32 %v337, 0.7978846
    %v346 = vmul.f32 %v338, 0.7978846
    %v347 = vmul.f32 %v339, 0.7978846
    %v348 = vtanh.pop %v340
    %v349 = vtanh.pop %v341
    %v350 = vtanh.pop %v342
    %v351 = vtanh.pop %v343
    %v352 = vtanh.pop %v344
    %v353 = vtanh.pop %v345
    %v354 = vtanh.pop %v346
    %v355 = vtanh.pop %v347
    %v356 = vadd.f32 %v348, 1.0
    %v357 = vadd.f32 %v349, 1.0
    %v358 = vadd.f32 %v350, 1.0
    %v359 = vadd.f32 %v351, 1.0
    %v360 = vadd.f32 %v352, 1.0
    %v361 = vadd.f32 %v353, 1.0
    %v362 = vadd.f32 %v354, 1.0
    %v363 = vadd.f32 %v355, 1.0
    %v364 = vmul.f32 %v356, 0.5
    %v365 = vmul.f32 %v357, 0.5
    %v366 = vmul.f32 %v358, 0.5
    %v367 = vmul.f32 %v359, 0.5
    %v368 = vmul.f32 %v360, 0.5
    %v369 = vmul.f32 %v361, 0.5
    %v370 = vmul.f32 %v362, 0.5
    %v371 = vmul.f32 %v363, 0.5
    %v372 = vmul.f32 %v262, %v364
    %v373 = vmul.f32 %v276, %v365
    %v374 = vmul.f32 %v290, %v366
    %v375 = vmul.f32 %v304, %v367
    %v376 = vmul.f32 %v264, %v368
    %v377 = vmul.f32 %v278, %v369
    %v378 = vmul.f32 %v292, %v370
    %v379 = vmul.f32 %v306, %v371
    %v380 = vpack.c.bf16 %v376, %v372
    %v381 = vpack.c.bf16 %v377, %v373
    %v382 = vpack.c.bf16 %v378, %v374
    %v383 = vpack.c.bf16 %v379, %v375
    %v384 = vld [vmem:[#allocation2] sm:$0xf]
    %v385 = vld [vmem:[#allocation2 + $0x4] sm:$0xf]
    %v386 = vld [vmem:[#allocation2 + $0x8] sm:$0xf]
    %v387 = vld [vmem:[#allocation2 + $0xc] sm:$0xf]
    %v388 = vld [vmem:[#allocation2 + $0x10] sm:$0xf]
    %v389 = vld [vmem:[#allocation2 + $0x14] sm:$0xf]
    %v390 = vld [vmem:[#allocation2 + $0x18] sm:$0xf]
    %v391 = vld [vmem:[#allocation2 + $0x1c] sm:$0xf]
    %v392 = vld [vmem:[#allocation2 + $0x20] sm:$0xf]
    %v393 = vld [vmem:[#allocation2 + $0x24] sm:$0xf]
    %v394 = vld [vmem:[#allocation2 + $0x28] sm:$0xf]
    %v395 = vld [vmem:[#allocation2 + $0x2c] sm:$0xf]
    %v396 = vld [vmem:[#allocation2 + $0x30] sm:$0xf]
    %v397 = vld [vmem:[#allocation2 + $0x34] sm:$0xf]
    %v398 = vld [vmem:[#allocation2 + $0x38] sm:$0xf]
    %v399 = vld [vmem:[#allocation2 + $0x3c] sm:$0xf]
    %v400 = vld [vmem:[#allocation2 + $0x40] sm:$0xf]
    %v401 = vld [vmem:[#allocation2 + $0x44] sm:$0xf]
    %v402 = vld [vmem:[#allocation2 + $0x48] sm:$0xf]
    %v403 = vld [vmem:[#allocation2 + $0x4c] sm:$0xf]
    %v404 = vld [vmem:[#allocation2 + $0x50] sm:$0xf]
    %v405 = vld [vmem:[#allocation2 + $0x54] sm:$0xf]
    %v406 = vld [vmem:[#allocation2 + $0x58] sm:$0xf]
    %v407 = vld [vmem:[#allocation2 + $0x5c] sm:$0xf]
    %v408 = vld [vmem:[#allocation2 + $0x60] sm:$0xf]
    %v409 = vld [vmem:[#allocation2 + $0x64] sm:$0xf]
    %v410 = vld [vmem:[#allocation2 + $0x68] sm:$0xf]
    %v411 = vld [vmem:[#allocation2 + $0x6c] sm:$0xf]
    %v412 = vld [vmem:[#allocation2 + $0x70] sm:$0xf]
    %v413 = vld [vmem:[#allocation2 + $0x74] sm:$0xf]
    %v414 = vld [vmem:[#allocation2 + $0x78] sm:$0xf]
    %v415 = vld [vmem:[#allocation2 + $0x7c] sm:$0xf]
    %v416 = vld [vmem:[#allocation2 + $0x80] sm:$0xf]
    %v417 = vld [vmem:[#allocation2 + $0x84] sm:$0xf]
    %v418 = vld [vmem:[#allocation2 + $0x88] sm:$0xf]
    %v419 = vld [vmem:[#allocation2 + $0x8c] sm:$0xf]
    %v420 = vld [vmem:[#allocation2 + $0x90] sm:$0xf]
    %v421 = vld [vmem:[#allocation2 + $0x94] sm:$0xf]
    %v422 = vld [vmem:[#allocation2 + $0x98] sm:$0xf]
    %v423 = vld [vmem:[#allocation2 + $0x9c] sm:$0xf]
    %v424 = vld [vmem:[#allocation2 + $0xa0] sm:$0xf]
    %v425 = vld [vmem:[#allocation2 + $0xa4] sm:$0xf]
    %v426 = vld [vmem:[#allocation2 + $0xa8] sm:$0xf]
    %v427 = vld [vmem:[#allocation2 + $0xac] sm:$0xf]
    %v428 = vld [vmem:[#allocation2 + $0xb0] sm:$0xf]
    %v429 = vld [vmem:[#allocation2 + $0xb4] sm:$0xf]
    %v430 = vld [vmem:[#allocation2 + $0xb8] sm:$0xf]
    %v431 = vld [vmem:[#allocation2 + $0xbc] sm:$0xf]
    %v432 = vld [vmem:[#allocation2 + $0xc0] sm:$0xf]
    %v433 = vld [vmem:[#allocation2 + $0xc4] sm:$0xf]
    %v434 = vld [vmem:[#allocation2 + $0xc8] sm:$0xf]
    %v435 = vld [vmem:[#allocation2 + $0xcc] sm:$0xf]
    %v436 = vld [vmem:[#allocation2 + $0xd0] sm:$0xf]
    %v437 = vld [vmem:[#allocation2 + $0xd4] sm:$0xf]
    %v438 = vld [vmem:[#allocation2 + $0xd8] sm:$0xf]
    %v439 = vld [vmem:[#allocation2 + $0xdc] sm:$0xf]
    %v440 = vld [vmem:[#allocation2 + $0xe0] sm:$0xf]
    %v441 = vld [vmem:[#allocation2 + $0xe4] sm:$0xf]
    %v442 = vld [vmem:[#allocation2 + $0xe8] sm:$0xf]
    %v443 = vld [vmem:[#allocation2 + $0xec] sm:$0xf]
    %v444 = vld [vmem:[#allocation2 + $0xf0] sm:$0xf]
    %v445 = vld [vmem:[#allocation2 + $0xf4] sm:$0xf]
    %v446 = vld [vmem:[#allocation2 + $0xf8] sm:$0xf]
    %v447 = vld [vmem:[#allocation2 + $0xfc] sm:$0xf]
    %v448 = vld [vmem:[%s4] sm:$0x1]
    %v450 = vperm.slane %v448, 0
    %v516 = vunpack.c.l.b16 %v384
    %v517 = vunpack.c.l.b16 %v385
    %v518 = vunpack.c.l.b16 %v386
    %v519 = vunpack.c.l.b16 %v387
    %v520 = vunpack.c.l.b16 %v388
    %v521 = vunpack.c.l.b16 %v389
    %v522 = vunpack.c.l.b16 %v390
    %v523 = vunpack.c.l.b16 %v391
    %v524 = vunpack.c.l.b16 %v392
    %v525 = vunpack.c.l.b16 %v393
    %v526 = vunpack.c.l.b16 %v394
    %v527 = vunpack.c.l.b16 %v395
    %v528 = vunpack.c.l.b16 %v396
    %v529 = vunpack.c.l.b16 %v397
    %v530 = vunpack.c.l.b16 %v398
    %v531 = vunpack.c.l.b16 %v399
    %v532 = vunpack.c.l.b16 %v400
    %v533 = vunpack.c.l.b16 %v401
    %v534 = vunpack.c.l.b16 %v402
    %v535 = vunpack.c.l.b16 %v403
    %v536 = vunpack.c.l.b16 %v404
    %v537 = vunpack.c.l.b16 %v405
    %v538 = vunpack.c.l.b16 %v406
    %v539 = vunpack.c.l.b16 %v407
    %v540 = vunpack.c.l.b16 %v408
    %v541 = vunpack.c.l.b16 %v409
    %v542 = vunpack.c.l.b16 %v410
    %v543 = vunpack.c.l.b16 %v411
    %v544 = vunpack.c.l.b16 %v412
    %v545 = vunpack.c.l.b16 %v413
    %v546 = vunpack.c.l.b16 %v414
    %v547 = vunpack.c.l.b16 %v415
    %v548 = vunpack.c.l.b16 %v416
    %v549 = vunpack.c.l.b16 %v417
    %v550 = vunpack.c.l.b16 %v418
    %v551 = vunpack.c.l.b16 %v419
    %v552 = vunpack.c.l.b16 %v420
    %v553 = vunpack.c.l.b16 %v421
    %v554 = vunpack.c.l.b16 %v422
    %v555 = vunpack.c.l.b16 %v423
    %v556 = vunpack.c.l.b16 %v424
    %v557 = vunpack.c.l.b16 %v425
    %v558 = vunpack.c.l.b16 %v426
    %v559 = vunpack.c.l.b16 %v427
    %v560 = vunpack.c.l.b16 %v428
    %v561 = vunpack.c.l.b16 %v429
    %v562 = vunpack.c.l.b16 %v430
    %v563 = vunpack.c.l.b16 %v431
    %v564 = vunpack.c.l.b16 %v432
    %v565 = vunpack.c.l.b16 %v433
    %v566 = vunpack.c.l.b16 %v434
    %v567 = vunpack.c.l.b16 %v435
    %v568 = vunpack.c.l.b16 %v436
    %v569 = vunpack.c.l.b16 %v437
    %v570 = vunpack.c.l.b16 %v438
    %v571 = vunpack.c.l.b16 %v439
    %v572 = vunpack.c.l.b16 %v440
    %v573 = vunpack.c.l.b16 %v441
    %v574 = vunpack.c.l.b16 %v442
    %v575 = vunpack.c.l.b16 %v443
    %v576 = vunpack.c.l.b16 %v444
    %v577 = vunpack.c.l.b16 %v445
    %v578 = vunpack.c.l.b16 %v446
    %v579 = vunpack.c.l.b16 %v447
    %v580 = vpack.c.b16 %v517, %v516
    %v581 = vpack.c.b16 %v519, %v518
    %v582 = vpack.c.b16 %v521, %v520
    %v583 = vpack.c.b16 %v523, %v522
    %v584 = vpack.c.b16 %v525, %v524
    %v585 = vpack.c.b16 %v527, %v526
    %v586 = vpack.c.b16 %v529, %v528
    %v587 = vpack.c.b16 %v531, %v530
    %v588 = vpack.c.b16 %v533, %v532
    %v589 = vpack.c.b16 %v535, %v534
    %v590 = vpack.c.b16 %v537, %v536
    %v591 = vpack.c.b16 %v539, %v538
    %v592 = vpack.c.b16 %v541, %v540
    %v593 = vpack.c.b16 %v543, %v542
    %v594 = vpack.c.b16 %v545, %v544
    %v595 = vpack.c.b16 %v547, %v546
    %v596 = vpack.c.b16 %v549, %v548
    %v597 = vpack.c.b16 %v551, %v550
    %v598 = vpack.c.b16 %v553, %v552
    %v599 = vpack.c.b16 %v555, %v554
    %v600 = vpack.c.b16 %v557, %v556
    %v601 = vpack.c.b16 %v559, %v558
    %v602 = vpack.c.b16 %v561, %v560
    %v603 = vpack.c.b16 %v563, %v562
    %v604 = vpack.c.b16 %v565, %v564
    %v605 = vpack.c.b16 %v567, %v566
    %v606 = vpack.c.b16 %v569, %v568
    %v607 = vpack.c.b16 %v571, %v570
    %v608 = vpack.c.b16 %v573, %v572
    %v609 = vpack.c.b16 %v575, %v574
    %v610 = vpack.c.b16 %v577, %v576
    %v611 = vpack.c.b16 %v579, %v578
    %644 = vmatpush.bf16.msra.mxu0 %v587
    %645 = vmatpush.bf16.msra.mxu0 %v586
    %646 = vmatpush.bf16.msra.mxu0 %v585
    %647 = vmatpush.bf16.msra.mxu0 %v584
    %648 = vmatpush.bf16.msra.mxu0 %v583
    %649 = vmatpush.bf16.msra.mxu0 %v582
    %650 = vmatpush.bf16.msra.mxu0 %v581
    %651 = vmatpush.bf16.msra.mxu0 %v580
    %652 = vmatmul.bf16.gmra.mxu0 %v380
    %v653 = vpop.f32.mrf.mxu0
    %v654 = vadd.f32 %v450, %v653
    %v655 = vpop.f32.mrf.mxu0
    %v656 = vadd.f32 %v450, %v655
    %657 = vdwg.mxu0
    %658 = vmatpush.bf16.msra.mxu0 %v595
    %659 = vmatpush.bf16.msra.mxu0 %v594
    %660 = vmatpush.bf16.msra.mxu0 %v593
    %661 = vmatpush.bf16.msra.mxu0 %v592
    %662 = vmatpush.bf16.msra.mxu0 %v591
    %663 = vmatpush.bf16.msra.mxu0 %v590
    %664 = vmatpush.bf16.msra.mxu0 %v589
    %665 = vmatpush.bf16.msra.mxu0 %v588
    %666 = vmatmul.bf16.gmra.mxu0 %v381
    %v667 = vpop.f32.mrf.mxu0
    %v668 = vadd.f32 %v654, %v667
    %v669 = vpop.f32.mrf.mxu0
    %v670 = vadd.f32 %v656, %v669
    %671 = vdwg.mxu0
    %672 = vmatpush.bf16.msra.mxu0 %v603
    %673 = vmatpush.bf16.msra.mxu0 %v602
    %674 = vmatpush.bf16.msra.mxu0 %v601
    %675 = vmatpush.bf16.msra.mxu0 %v600
    %676 = vmatpush.bf16.msra.mxu0 %v599
    %677 = vmatpush.bf16.msra.mxu0 %v598
    %678 = vmatpush.bf16.msra.mxu0 %v597
    %679 = vmatpush.bf16.msra.mxu0 %v596
    %680 = vmatmul.bf16.gmra.mxu0 %v382
    %v681 = vpop.f32.mrf.mxu0
    %v682 = vadd.f32 %v668, %v681
    %v683 = vpop.f32.mrf.mxu0
    %v684 = vadd.f32 %v670, %v683
    %685 = vdwg.mxu0
    %686 = vmatpush.bf16.msra.mxu0 %v611
    %687 = vmatpush.bf16.msra.mxu0 %v610
    %688 = vmatpush.bf16.msra.mxu0 %v609
    %689 = vmatpush.bf16.msra.mxu0 %v608
    %690 = vmatpush.bf16.msra.mxu0 %v607
    %691 = vmatpush.bf16.msra.mxu0 %v606
    %692 = vmatpush.bf16.msra.mxu0 %v605
    %693 = vmatpush.bf16.msra.mxu0 %v604
    %694 = vmatmul.bf16.gmra.mxu0 %v383
    %v695 = vpop.f32.mrf.mxu0
    %v696 = vadd.f32 %v682, %v695
    %v697 = vpop.f32.mrf.mxu0
    %v698 = vadd.f32 %v684, %v697
    %699 = vdwg.mxu0
    %v700 = vunpack.c.l.bf16 %v42
    %v701 = vunpack.c.l.bf16 %v43
    %v702 = vadd.f32 %v696, %v700
    %v703 = vadd.f32 %v698, %v701
    %704 = vadd.xlane.f32.xlu0 %v702
    %v705 = vpop.xlane.xlu0 %704
    %706 = vadd.xlane.f32.xlu0 %v703
    %v707 = vpop.xlane.xlu0 %706
    %v708 = vrcp.pop 128.0
    %v709 = vmul.f32 128.0, %v708
    %v710 = vsub.f32 1.0, %v709
    %v711 = vmul.f32 %v708, %v710
    %v712 = vadd.f32 %v708, %v711
    %vm713 = vweird.f32 %v708
    %v714 = vsel %vm713, %v708, %v712
    %v715 = vmul.f32 %v705, %v714
    %v716 = vmul.f32 %v707, %v714
    %v717 = vsub.f32 %v702, %v715
    %v718 = vsub.f32 %v703, %v716
    %v719 = vmul.f32 %v717, %v717
    %v720 = vmul.f32 %v718, %v718
    %721 = vadd.xlane.f32.xlu0 %v719
    %v722 = vpop.xlane.xlu0 %721
    %723 = vadd.xlane.f32.xlu0 %v720
    %v724 = vpop.xlane.xlu0 %723
    %v725 = vmul.f32 %v722, %v714
    %v726 = vmul.f32 %v724, %v714
    %v727 = vadd.f32 %v725, 1e-12
    %v728 = vadd.f32 %v726, 1e-12
    %v729 = vrsqrt.pop %v727
    %v730 = vmul.f32 %v729, %v727
    %v731 = vmul.f32 %v730, %v729
    %v732 = vmul.f32 0.5, %v731
    %v733 = vsub.f32 1.5, %v732
    %v734 = vmul.f32 %v729, %v733
    %vm735 = vweird.f32 %v727
    %vm736 = vweird.f32 %v729
    %vm737 = vmor %vm735, %vm736
    %v738 = vsel %vm737, %v729, %v734
    %v739 = vrsqrt.pop %v728
    %v740 = vmul.f32 %v739, %v728
    %v741 = vmul.f32 %v740, %v739
    %v742 = vmul.f32 0.5, %v741
    %v743 = vsub.f32 1.5, %v742
    %v744 = vmul.f32 %v739, %v743
    %vm745 = vweird.f32 %v728
    %vm746 = vweird.f32 %v739
    %vm747 = vmor %vm745, %vm746
    %v748 = vsel %vm747, %v739, %v744
    %v749 = vmul.f32 %v717, %v738
    %v750 = vmul.f32 %v718, %v748
    %v751 = vld [vmem:[%s5] sm:$0x1]
    %v753 = vperm.slane %v751, 0
    %v755 = vmul.f32 %v749, %v753
    %v756 = vmul.f32 %v750, %v753
    %v757 = vld [vmem:[%s6] sm:$0x1]
    %v759 = vperm.slane %v757, 0
    %v761 = vadd.f32 %v755, %v759
    %v762 = vadd.f32 %v756, %v759
    %v763 = vpack.c.bf16 %v761, %v761
    %v764 = vpack.c.bf16 %v762, %v762
    %765 = vst [vmem:[%s7] sm:$0xf] %v763
    %766 = vst [vmem:[%s7 + $0x4] sm:$0xf] %v764
    // Predicated region
    $region34: #{bert_classifier_forward.14} parent=1 // pred_check
      _
    $region35: #{bert_classifier_forward.14} parent=1 // pred_check_branch
      %768 = sbr.rel (0) target = $region37
    $region36: #{bert_classifier_forward.14} parent=1 // pred_region
      _
    $region37: #{bert_classifier_forward.14} parent=1 // pred_fallthru
      _
    // Predicated region
    $region38: #{bert_classifier_forward.14} parent=1 // pred_check
      _
    $region39: #{bert_classifier_forward.14} parent=1 // pred_check_branch
      %770 = sbr.rel (0) target = $region41
    $region40: #{bert_classifier_forward.14} parent=1 // pred_region
      _
    $region41: #{bert_classifier_forward.14} parent=1 // pred_fallthru
      _
    %771 = vsyncpa [#allocation3], 1

// kernel: bert_classifier_forward.18
$region0: #{bert_classifier_forward.18}
  #allocation0 [shape = 'u32[]', space=smem, size = 0x4, offset = 0x4, fixed_abs, tag = 'smem constant byte address 0x4 - core index']
  #allocation1 [shape = 'u32[72,128]{1,0:T(1,128)}', space=vmem, size = 0x9000, scoped, tag = 'internal scratch']
  %s0 = inlined_call_operand.vmem [shape: bf16[16,128], index: 0, kind: input, shape index: {}]
  %s1 = inlined_call_operand.hbm [shape: bf16[128,512], index: 1, kind: input, shape index: {}]
  %s2 = inlined_call_operand.vmem [shape: f32[1,512], index: 2, kind: input, shape index: {}]
  %s3 = inlined_call_operand.hbm [shape: bf16[512,128], index: 3, kind: input, shape index: {}]
  %s4 = inlined_call_operand.vmem [shape: f32[1,128], index: 4, kind: input, shape index: {}]
  %s5 = inlined_call_operand.vmem [shape: f32[1,128], index: 5, kind: input, shape index: {}]
  %s6 = inlined_call_operand.vmem [shape: f32[1,128], index: 6, kind: input, shape index: {}]
  %s7 = inlined_call_operand.vmem [shape: bf16[16,128], index: 7, kind: output, shape index: {}]
  %s8 = sld [smem:[#allocation0]]
  $region46: #{bert_classifier_forward.18} parent=0
    _
  %s10 = ssub.s32 1, %s8
  %s11 = scalar_select 0, %s10, %s8
  $region1: #{bert_classifier_forward.18} parent=0
    #allocation2 [shape = 'u8[131072]{0}', space=vmem, size = 0x20000, scoped, tag = 'input window, operand 1, single buffered']
    #allocation3 [shape = 's32[1]{0}', space=sflag, size = 0x4, scoped, tag = 'scoped memory for bert_classifier_forward.18']
    #allocation4 [shape = 'u8[131072]{0}', space=vmem, size = 0x20000, scoped, tag = 'input window, operand 3, single buffered']
    #allocation5 [shape = 's32[1]{0}', space=sflag, size = 0x4, scoped, tag = 'scoped memory for bert_classifier_forward.18']
    %12 = vsyncpa [#allocation3], 0
    %13 = vsyncpa [#allocation5], 0
    // Predicated region
    $region2: #{bert_classifier_forward.18} parent=1 // pred_check
      _
    $region3: #{bert_classifier_forward.18} parent=1 // pred_check_branch
      %15 = sbr.rel (0) target = $region5
    $region4: #{bert_classifier_forward.18} parent=1 // pred_region
      _
    $region5: #{bert_classifier_forward.18} parent=1 // pred_fallthru
      _
    // Predicated region
    $region6: #{bert_classifier_forward.18} parent=1 // pred_check
      _
    $region7: #{bert_classifier_forward.18} parent=1 // pred_check_branch
      %17 = sbr.rel (0) target = $region9
    $region8: #{bert_classifier_forward.18} parent=1 // pred_region
      %19 = vsyncadd [#allocation3], 0
      %s20 = sshll.u32 %s1, 4
      %s21 = int_to_ptr.hbm [resolvable:$true] %s20
      %s22 = sshll.u32 [#allocation2], 4
      %s23 = int_to_ptr.vmem [resolvable:$true] %s22
      %28 = dma.hbm_to_vmem [thread:$0]  %s21, 4096, %s23, [#allocation3], 256, 256, 16
    $region9: #{bert_classifier_forward.18} parent=1 // pred_fallthru
      _
    // Predicated region
    $region10: #{bert_classifier_forward.18} parent=1 // pred_check
      _
    $region11: #{bert_classifier_forward.18} parent=1 // pred_check_branch
      %30 = sbr.rel (0) target = $region13
    $region12: #{bert_classifier_forward.18} parent=1 // pred_region
      _
    $region13: #{bert_classifier_forward.18} parent=1 // pred_fallthru
      _
    // Predicated region
    $region14: #{bert_classifier_forward.18} parent=1 // pred_check
      _
    $region15: #{bert_classifier_forward.18} parent=1 // pred_check_branch
      %32 = sbr.rel (0) target = $region17
    $region16: #{bert_classifier_forward.18} parent=1 // pred_region
      %34 = vsyncadd [#allocation5], 0
      %s35 = sshll.u32 %s3, 4
      %s36 = int_to_ptr.hbm [resolvable:$true] %s35
      %s37 = sshll.u32 [#allocation4], 4
      %s38 = int_to_ptr.vmem [resolvable:$true] %s37
      %43 = dma.hbm_to_vmem [thread:$0]  %s36, 4096, %s38, [#allocation5], 64, 64, 4
    $region17: #{bert_classifier_forward.18} parent=1 // pred_fallthru
      _
    // Predicated region
    $region18: #{bert_classifier_forward.18} parent=1 // pred_check
      _
    $region19: #{bert_classifier_forward.18} parent=1 // pred_check_branch
      %45 = sbr.rel (0) target = $region21
    $region20: #{bert_classifier_forward.18} parent=1 // pred_region
      _
    $region21: #{bert_classifier_forward.18} parent=1 // pred_fallthru
      _
    // Predicated region
    $region22: #{bert_classifier_forward.18} parent=1 // pred_check
      _
    $region23: #{bert_classifier_forward.18} parent=1 // pred_check_branch
      %47 = sbr.rel (0) target = $region25
    $region24: #{bert_classifier_forward.18} parent=1 // pred_region
      _
    $region25: #{bert_classifier_forward.18} parent=1 // pred_fallthru
      _
    // Predicated region
    $region26: #{bert_classifier_forward.18} parent=1 // pred_check
      _
    $region27: #{bert_classifier_forward.18} parent=1 // pred_check_branch
      %49 = sbr.rel (0) target = $region29
    $region28: #{bert_classifier_forward.18} parent=1 // pred_region
      _
    $region29: #{bert_classifier_forward.18} parent=1 // pred_fallthru
      _
    // Predicated region
    $region30: #{bert_classifier_forward.18} parent=1 // pred_check
      _
    $region31: #{bert_classifier_forward.18} parent=1 // pred_check_branch
      %51 = sbr.rel (0) target = $region33
    $region32: #{bert_classifier_forward.18} parent=1 // pred_region
      %53 = dma.done [#allocation3], 4096
    $region33: #{bert_classifier_forward.18} parent=1 // pred_fallthru
      _
    // Predicated region
    $region34: #{bert_classifier_forward.18} parent=1 // pred_check
      _
    $region35: #{bert_classifier_forward.18} parent=1 // pred_check_branch
      %55 = sbr.rel (0) target = $region37
    $region36: #{bert_classifier_forward.18} parent=1 // pred_region
      %57 = dma.done [#allocation5], 4096
    $region37: #{bert_classifier_forward.18} parent=1 // pred_fallthru
      _
    %v58 = vld [vmem:[%s0] sm:$0xf]
    %v59 = vld [vmem:[%s0 + $0x4] sm:$0xf]
    %v60 = vld [vmem:[#allocation2] sm:$0xff]
    %v61 = vld [vmem:[#allocation2 + $0x8] sm:$0xff]
    %v62 = vld [vmem:[#allocation2 + $0x10] sm:$0xff]
    %v63 = vld [vmem:[#allocation2 + $0x18] sm:$0xff]
    %v64 = vld [vmem:[#allocation2 + $0x20] sm:$0xff]
    %v65 = vld [vmem:[#allocation2 + $0x28] sm:$0xff]
    %v66 = vld [vmem:[#allocation2 + $0x30] sm:$0xff]
    %v67 = vld [vmem:[#allocation2 + $0x38] sm:$0xff]
    %v68 = vld [vmem:[#allocation2 + $0x40] sm:$0xff]
    %v69 = vld [vmem:[#allocation2 + $0x48] sm:$0xff]
    %v70 = vld [vmem:[#allocation2 + $0x50] sm:$0xff]
    %v71 = vld [vmem:[#allocation2 + $0x58] sm:$0xff]
    %v72 = vld [vmem:[#allocation2 + $0x60] sm:$0xff]
    %v73 = vld [vmem:[#allocation2 + $0x68] sm:$0xff]
    %v74 = vld [vmem:[#allocation2 + $0x70] sm:$0xff]
    %v75 = vld [vmem:[#allocation2 + $0x78] sm:$0xff]
    %v76 = vld [vmem:[#allocation2 + $0x80] sm:$0xff]
    %v77 = vld [vmem:[#allocation2 + $0x88] sm:$0xff]
    %v78 = vld [vmem:[#allocation2 + $0x90] sm:$0xff]
    %v79 = vld [vmem:[#allocation2 + $0x98] sm:$0xff]
    %v80 = vld [vmem:[#allocation2 + $0xa0] sm:$0xff]
    %v81 = vld [vmem:[#allocation2 + $0xa8] sm:$0xff]
    %v82 = vld [vmem:[#allocation2 + $0xb0] sm:$0xff]
    %v83 = vld [vmem:[#allocation2 + $0xb8] sm:$0xff]
    %v84 = vld [vmem:[#allocation2 + $0xc0] sm:$0xff]
    %v85 = vld [vmem:[#allocation2 + $0xc8] sm:$0xff]
    %v86 = vld [vmem:[#allocation2 + $0xd0] sm:$0xff]
    %v87 = vld [vmem:[#allocation2 + $0xd8] sm:$0xff]
    %v88 = vld [vmem:[#allocation2 + $0xe0] sm:$0xff]
    %v89 = vld [vmem:[#allocation2 + $0xe8] sm:$0xff]
    %v90 = vld [vmem:[#allocation2 + $0xf0] sm:$0xff]
    %v91 = vld [vmem:[#allocation2 + $0xf8] sm:$0xff]
    %v92 = vld [vmem:[%s2] sm:$0xf]
    %v94 = vperm.slane %v92, 0
    %v95 = vperm.slane %v92, 1
    %v96 = vperm.slane %v92, 2
    %v97 = vperm.slane %v92, 3
    %v104 = vunpack.c.l.b16 %v58
    %v105 = vunpack.c.l.b16 %v59
    %v106 = vpack.c.b16 %v105, %v104
    %v140 = vunpack.c.l.b16 %v60
    %v141 = vunpack.c.h.b16 %v60
    %v142 = vunpack.c.l.b16 %v61
    %v143 = vunpack.c.h.b16 %v61
    %v144 = vunpack.c.l.b16 %v62
    %v145 = vunpack.c.h.b16 %v62
    %v146 = vunpack.c.l.b16 %v63
    %v147 = vunpack.c.h.b16 %v63
    %v148 = vunpack.c.l.b16 %v64
    %v149 = vunpack.c.h.b16 %v64
    %v150 = vunpack.c.l.b16 %v65
    %v151 = vunpack.c.h.b16 %v65
    %v152 = vunpack.c.l.b16 %v66
    %v153 = vunpack.c.h.b16 %v66
    %v154 = vunpack.c.l.b16 %v67
    %v155 = vunpack.c.h.b16 %v67
    %v156 = vunpack.c.l.b16 %v68
    %v157 = vunpack.c.h.b16 %v68
    %v158 = vunpack.c.l.b16 %v69
    %v159 = vunpack.c.h.b16 %v69
    %v160 = vunpack.c.l.b16 %v70
    %v161 = vunpack.c.h.b16 %v70
    %v162 = vunpack.c.l.b16 %v71
    %v163 = vunpack.c.h.b16 %v71
    %v164 = vunpack.c.l.b16 %v72
    %v165 = vunpack.c.h.b16 %v72
    %v166 = vunpack.c.l.b16 %v73
    %v167 = vunpack.c.h.b16 %v73
    %v168 = vunpack.c.l.b16 %v74
    %v169 = vunpack.c.h.b16 %v74
    %v170 = vunpack.c.l.b16 %v75
    %v171 = vunpack.c.h.b16 %v75
    %v172 = vunpack.c.l.b16 %v76
    %v173 = vunpack.c.h.b16 %v76
    %v174 = vunpack.c.l.b16 %v77
    %v175 = vunpack.c.h.b16 %v77
    %v176 = vunpack.c.l.b16 %v78
    %v177 = vunpack.c.h.b16 %v78
    %v178 = vunpack.c.l.b16 %v79
    %v179 = vunpack.c.h.b16 %v79
    %v180 = vunpack.c.l.b16 %v80
    %v181 = vunpack.c.h.b16 %v80
    %v182 = vunpack.c.l.b16 %v81
    %v183 = vunpack.c.h.b16 %v81
    %v184 = vunpack.c.l.b16 %v82
    %v185 = vunpack.c.h.b16 %v82
    %v186 = vunpack.c.l.b16 %v83
    %v187 = vunpack.c.h.b16 %v83
    %v188 = vunpack.c.l.b16 %v84
    %v189 = vunpack.c.h.b16 %v84
    %v190 = vunpack.c.l.b16 %v85
    %v191 = vunpack.c.h.b16 %v85
    %v192 = vunpack.c.l.b16 %v86
    %v193 = vunpack.c.h.b16 %v86
    %v194 = vunpack.c.l.b16 %v87
    %v195 = vunpack.c.h.b16 %v87
    %v196 = vunpack.c.l.b16 %v88
    %v197 = vunpack.c.h.b16 %v88
    %v198 = vunpack.c.l.b16 %v89
    %v199 = vunpack.c.h.b16 %v89
    %v200 = vunpack.c.l.b16 %v90
    %v201 = vunpack.c.h.b16 %v90
    %v202 = vunpack.c.l.b16 %v91
    %v203 = vunpack.c.h.b16 %v91
    %v204 = vpack.c.b16 %v144, %v140
    %v205 = vpack.c.b16 %v145, %v141
    %v206 = vpack.c.b16 %v146, %v142
    %v207 = vpack.c.b16 %v147, %v143
    %v208 = vpack.c.b16 %v152, %v148
    %v209 = vpack.c.b16 %v153, %v149
    %v210 = vpack.c.b16 %v154, %v150
    %v211 = vpack.c.b16 %v155, %v151
    %v212 = vpack.c.b16 %v160, %v156
    %v213 = vpack.c.b16 %v161, %v157
    %v214 = vpack.c.b16 %v162, %v158
    %v215 = vpack.c.b16 %v163, %v159
    %v216 = vpack.c.b16 %v168, %v164
    %v217 = vpack.c.b16 %v169, %v165
    %v218 = vpack.c.b16 %v170, %v166
    %v219 = vpack.c.b16 %v171, %v167
    %v220 = vpack.c.b16 %v176, %v172
    %v221 = vpack.c.b16 %v177, %v173
    %v222 = vpack.c.b16 %v178, %v174
    %v223 = vpack.c.b16 %v179, %v175
    %v224 = vpack.c.b16 %v184, %v180
    %v225 = vpack.c.b16 %v185, %v181
    %v226 = vpack.c.b16 %v186, %v182
    %v227 = vpack.c.b16 %v187, %v183
    %v228 = vpack.c.b16 %v192, %v188
    %v229 = vpack.c.b16 %v193, %v189
    %v230 = vpack.c.b16 %v194, %v190
    %v231 = vpack.c.b16 %v195, %v191
    %v232 = vpack.c.b16 %v200, %v196
    %v233 = vpack.c.b16 %v201, %v197
    %v234 = vpack.c.b16 %v202, %v198
    %v235 = vpack.c.b16 %v203, %v199
    %268 = vmatpush.bf16.msra.mxu0 %v232
    %269 = vmatpush.bf16.msra.mxu0 %v228
    %270 = vmatpush.bf16.msra.mxu0 %v224
    %271 = vmatpush.bf16.msra.mxu0 %v220
    %272 = vmatpush.bf16.msra.mxu0 %v216
    %273 = vmatpush.bf16.msra.mxu0 %v212
    %274 = vmatpush.bf16.msra.mxu0 %v208
    %275 = vmatpush.bf16.msra.mxu0 %v204
    %276 = vmatmul.bf16.gmra.mxu0 %v106
    %v277 = vpop.f32.mrf.mxu0
    %v278 = vadd.f32 %v94, %v277
    %v279 = vpop.f32.mrf.mxu0
    %v280 = vadd.f32 %v94, %v279
    %281 = vdwg.mxu0
    %282 = vmatpush.bf16.msra.mxu0 %v233
    %283 = vmatpush.bf16.msra.mxu0 %v229
    %284 = vmatpush.bf16.msra.mxu0 %v225
    %285 = vmatpush.bf16.msra.mxu0 %v221
    %286 = vmatpush.bf16.msra.mxu0 %v217
    %287 = vmatpush.bf16.msra.mxu0 %v213
    %288 = vmatpush.bf16.msra.mxu0 %v209
    %289 = vmatpush.bf16.msra.mxu0 %v205
    %290 = vmatmul.bf16.gmra.mxu0 %v106
    %v291 = vpop.f32.mrf.mxu0
    %v292 = vadd.f32 %v95, %v291
    %v293 = vpop.f32.mrf.mxu0
    %v294 = vadd.f32 %v95, %v293
    %295 = vdwg.mxu0
    %296 = vmatpush.bf16.msra.mxu0 %v234
    %297 = vmatpush.bf16.msra.mxu0 %v230
    %298 = vmatpush.bf16.msra.mxu0 %v226
    %299 = vmatpush.bf16.msra.mxu0 %v222
    %300 = vmatpush.bf16.msra.mxu0 %v218
    %301 = vmatpush.bf16.msra.mxu0 %v214
    %302 = vmatpush.bf16.msra.mxu0 %v210
    %303 = vmatpush.bf16.msra.mxu0 %v206
    %304 = vmatmul.bf16.gmra.mxu0 %v106
    %v305 = vpop.f32.mrf.mxu0
    %v306 = vadd.f32 %v96, %v305
    %v307 = vpop.f32.mrf.mxu0
    %v308 = vadd.f32 %v96, %v307
    %309 = vdwg.mxu0
    %310 = vmatpush.bf16.msra.mxu0 %v235
    %311 = vmatpush.bf16.msra.mxu0 %v231
    %312 = vmatpush.bf16.msra.mxu0 %v227
    %313 = vmatpush.bf16.msra.mxu0 %v223
    %314 = vmatpush.bf16.msra.mxu0 %v219
    %315 = vmatpush.bf16.msra.mxu0 %v215
    %316 = vmatpush.bf16.msra.mxu0 %v211
    %317 = vmatpush.bf16.msra.mxu0 %v207
    %318 = vmatmul.bf16.gmra.mxu0 %v106
    %v319 = vpop.f32.mrf.mxu0
    %v320 = vadd.f32 %v97, %v319
    %v321 = vpop.f32.mrf.mxu0
    %v322 = vadd.f32 %v97, %v321
    %323 = vdwg.mxu0
    %v324 = vmul.f32 %v278, %v278
    %v325 = vmul.f32 %v292, %v292
    %v326 = vmul.f32 %v306, %v306
    %v327 = vmul.f32 %v320, %v320
    %v328 = vmul.f32 %v280, %v280
    %v329 = vmul.f32 %v294, %v294
    %v330 = vmul.f32 %v308, %v308
    %v331 = vmul.f32 %v322, %v322
    %v332 = vmul.f32 %v278, %v324
    %v333 = vmul.f32 %v292, %v325
    %v334 = vmul.f32 %v306, %v326
    %v335 = vmul.f32 %v320, %v327
    %v336 = vmul.f32 %v280, %v328
    %v337 = vmul.f32 %v294, %v329
    %v338 = vmul.f32 %v308, %v330
    %v339 = vmul.f32 %v322, %v331
    %v340 = vmul.f32 %v332, 0.044715
    %v341 = vmul.f32 %v333, 0.044715
    %v342 = vmul.f32 %v334, 0.044715
    %v343 = vmul.f32 %v335, 0.044715
    %v344 = vmul.f32 %v336, 0.044715
    %v345 = vmul.f32 %v337, 0.044715
    %v346 = vmul.f32 %v338, 0.044715
    %v347 = vmul.f32 %v339, 0.044715
    %v348 = vadd.f32 %v278, %v340
    %v349 = vadd.f32 %v292, %v341
    %v350 = vadd.f32 %v306, %v342
    %v351 = vadd.f32 %v320, %v343
    %v352 = vadd.f32 %v280, %v344
    %v353 = vadd.f32 %v294, %v345
    %v354 = vadd.f32 %v308, %v346
    %v355 = vadd.f32 %v322, %v347
    %v356 = vmul.f32 %v348, 0.7978846
    %v357 = vmul.f32 %v349, 0.7978846
    %v358 = vmul.f32 %v350, 0.7978846
    %v359 = vmul.f32 %v351, 0.7978846
    %v360 = vmul.f32 %v352, 0.7978846
    %v361 = vmul.f32 %v353, 0.7978846
    %v362 = vmul.f32 %v354, 0.7978846
    %v363 = vmul.f32 %v355, 0.7978846
    %v364 = vtanh.pop %v356
    %v365 = vtanh.pop %v357
    %v366 = vtanh.pop %v358
    %v367 = vtanh.pop %v359
    %v368 = vtanh.pop %v360
    %v369 = vtanh.pop %v361
    %v370 = vtanh.pop %v362
    %v371 = vtanh.pop %v363
    %v372 = vadd.f32 %v364, 1.0
    %v373 = vadd.f32 %v365, 1.0
    %v374 = vadd.f32 %v366, 1.0
    %v375 = vadd.f32 %v367, 1.0
    %v376 = vadd.f32 %v368, 1.0
    %v377 = vadd.f32 %v369, 1.0
    %v378 = vadd.f32 %v370, 1.0
    %v379 = vadd.f32 %v371, 1.0
    %v380 = vmul.f32 %v372, 0.5
    %v381 = vmul.f32 %v373, 0.5
    %v382 = vmul.f32 %v374, 0.5
    %v383 = vmul.f32 %v375, 0.5
    %v384 = vmul.f32 %v376, 0.5
    %v385 = vmul.f32 %v377, 0.5
    %v386 = vmul.f32 %v378, 0.5
    %v387 = vmul.f32 %v379, 0.5
    %v388 = vmul.f32 %v278, %v380
    %v389 = vmul.f32 %v292, %v381
    %v390 = vmul.f32 %v306, %v382
    %v391 = vmul.f32 %v320, %v383
    %v392 = vmul.f32 %v280, %v384
    %v393 = vmul.f32 %v294, %v385
    %v394 = vmul.f32 %v308, %v386
    %v395 = vmul.f32 %v322, %v387
    %v396 = vpack.c.bf16 %v392, %v388
    %v397 = vpack.c.bf16 %v393, %v389
    %v398 = vpack.c.bf16 %v394, %v390
    %v399 = vpack.c.bf16 %v395, %v391
    %v400 = vld [vmem:[#allocation4] sm:$0xf]
    %v401 = vld [vmem:[#allocation4 + $0x4] sm:$0xf]
    %v402 = vld [vmem:[#allocation4 + $0x8] sm:$0xf]
    %v403 = vld [vmem:[#allocation4 + $0xc] sm:$0xf]
    %v404 = vld [vmem:[#allocation4 + $0x10] sm:$0xf]
    %v405 = vld [vmem:[#allocation4 + $0x14] sm:$0xf]
    %v406 = vld [vmem:[#allocation4 + $0x18] sm:$0xf]
    %v407 = vld [vmem:[#allocation4 + $0x1c] sm:$0xf]
    %v408 = vld [vmem:[#allocation4 + $0x20] sm:$0xf]
    %v409 = vld [vmem:[#allocation4 + $0x24] sm:$0xf]
    %v410 = vld [vmem:[#allocation4 + $0x28] sm:$0xf]
    %v411 = vld [vmem:[#allocation4 + $0x2c] sm:$0xf]
    %v412 = vld [vmem:[#allocation4 + $0x30] sm:$0xf]
    %v413 = vld [vmem:[#allocation4 + $0x34] sm:$0xf]
    %v414 = vld [vmem:[#allocation4 + $0x38] sm:$0xf]
    %v415 = vld [vmem:[#allocation4 + $0x3c] sm:$0xf]
    %v416 = vld [vmem:[#allocation4 + $0x40] sm:$0xf]
    %v417 = vld [vmem:[#allocation4 + $0x44] sm:$0xf]
    %v418 = vld [vmem:[#allocation4 + $0x48] sm:$0xf]
    %v419 = vld [vmem:[#allocation4 + $0x4c] sm:$0xf]
    %v420 = vld [vmem:[#allocation4 + $0x50] sm:$0xf]
    %v421 = vld [vmem:[#allocation4 + $0x54] sm:$0xf]
    %v422 = vld [vmem:[#allocation4 + $0x58] sm:$0xf]
    %v423 = vld [vmem:[#allocation4 + $0x5c] sm:$0xf]
    %v424 = vld [vmem:[#allocation4 + $0x60] sm:$0xf]
    %v425 = vld [vmem:[#allocation4 + $0x64] sm:$0xf]
    %v426 = vld [vmem:[#allocation4 + $0x68] sm:$0xf]
    %v427 = vld [vmem:[#allocation4 + $0x6c] sm:$0xf]
    %v428 = vld [vmem:[#allocation4 + $0x70] sm:$0xf]
    %v429 = vld [vmem:[#allocation4 + $0x74] sm:$0xf]
    %v430 = vld [vmem:[#allocation4 + $0x78] sm:$0xf]
    %v431 = vld [vmem:[#allocation4 + $0x7c] sm:$0xf]
    %v432 = vld [vmem:[#allocation4 + $0x80] sm:$0xf]
    %v433 = vld [vmem:[#allocation4 + $0x84] sm:$0xf]
    %v434 = vld [vmem:[#allocation4 + $0x88] sm:$0xf]
    %v435 = vld [vmem:[#allocation4 + $0x8c] sm:$0xf]
    %v436 = vld [vmem:[#allocation4 + $0x90] sm:$0xf]
    %v437 = vld [vmem:[#allocation4 + $0x94] sm:$0xf]
    %v438 = vld [vmem:[#allocation4 + $0x98] sm:$0xf]
    %v439 = vld [vmem:[#allocation4 + $0x9c] sm:$0xf]
    %v440 = vld [vmem:[#allocation4 + $0xa0] sm:$0xf]
    %v441 = vld [vmem:[#allocation4 + $0xa4] sm:$0xf]
    %v442 = vld [vmem:[#allocation4 + $0xa8] sm:$0xf]
    %v443 = vld [vmem:[#allocation4 + $0xac] sm:$0xf]
    %v444 = vld [vmem:[#allocation4 + $0xb0] sm:$0xf]
    %v445 = vld [vmem:[#allocation4 + $0xb4] sm:$0xf]
    %v446 = vld [vmem:[#allocation4 + $0xb8] sm:$0xf]
    %v447 = vld [vmem:[#allocation4 + $0xbc] sm:$0xf]
    %v448 = vld [vmem:[#allocation4 + $0xc0] sm:$0xf]
    %v449 = vld [vmem:[#allocation4 + $0xc4] sm:$0xf]
    %v450 = vld [vmem:[#allocation4 + $0xc8] sm:$0xf]
    %v451 = vld [vmem:[#allocation4 + $0xcc] sm:$0xf]
    %v452 = vld [vmem:[#allocation4 + $0xd0] sm:$0xf]
    %v453 = vld [vmem:[#allocation4 + $0xd4] sm:$0xf]
    %v454 = vld [vmem:[#allocation4 + $0xd8] sm:$0xf]
    %v455 = vld [vmem:[#allocation4 + $0xdc] sm:$0xf]
    %v456 = vld [vmem:[#allocation4 + $0xe0] sm:$0xf]
    %v457 = vld [vmem:[#allocation4 + $0xe4] sm:$0xf]
    %v458 = vld [vmem:[#allocation4 + $0xe8] sm:$0xf]
    %v459 = vld [vmem:[#allocation4 + $0xec] sm:$0xf]
    %v460 = vld [vmem:[#allocation4 + $0xf0] sm:$0xf]
    %v461 = vld [vmem:[#allocation4 + $0xf4] sm:$0xf]
    %v462 = vld [vmem:[#allocation4 + $0xf8] sm:$0xf]
    %v463 = vld [vmem:[#allocation4 + $0xfc] sm:$0xf]
    %v464 = vld [vmem:[%s4] sm:$0x1]
    %v466 = vperm.slane %v464, 0
    %v532 = vunpack.c.l.b16 %v400
    %v533 = vunpack.c.l.b16 %v401
    %v534 = vunpack.c.l.b16 %v402
    %v535 = vunpack.c.l.b16 %v403
    %v536 = vunpack.c.l.b16 %v404
    %v537 = vunpack.c.l.b16 %v405
    %v538 = vunpack.c.l.b16 %v406
    %v539 = vunpack.c.l.b16 %v407
    %v540 = vunpack.c.l.b16 %v408
    %v541 = vunpack.c.l.b16 %v409
    %v542 = vunpack.c.l.b16 %v410
    %v543 = vunpack.c.l.b16 %v411
    %v544 = vunpack.c.l.b16 %v412
    %v545 = vunpack.c.l.b16 %v413
    %v546 = vunpack.c.l.b16 %v414
    %v547 = vunpack.c.l.b16 %v415
    %v548 = vunpack.c.l.b16 %v416
    %v549 = vunpack.c.l.b16 %v417
    %v550 = vunpack.c.l.b16 %v418
    %v551 = vunpack.c.l.b16 %v419
    %v552 = vunpack.c.l.b16 %v420
    %v553 = vunpack.c.l.b16 %v421
    %v554 = vunpack.c.l.b16 %v422
    %v555 = vunpack.c.l.b16 %v423
    %v556 = vunpack.c.l.b16 %v424
    %v557 = vunpack.c.l.b16 %v425
    %v558 = vunpack.c.l.b16 %v426
    %v559 = vunpack.c.l.b16 %v427
    %v560 = vunpack.c.l.b16 %v428
    %v561 = vunpack.c.l.b16 %v429
    %v562 = vunpack.c.l.b16 %v430
    %v563 = vunpack.c.l.b16 %v431
    %v564 = vunpack.c.l.b16 %v432
    %v565 = vunpack.c.l.b16 %v433
    %v566 = vunpack.c.l.b16 %v434
    %v567 = vunpack.c.l.b16 %v435
    %v568 = vunpack.c.l.b16 %v436
    %v569 = vunpack.c.l.b16 %v437
    %v570 = vunpack.c.l.b16 %v438
    %v571 = vunpack.c.l.b16 %v439
    %v572 = vunpack.c.l.b16 %v440
    %v573 = vunpack.c.l.b16 %v441
    %v574 = vunpack.c.l.b16 %v442
    %v575 = vunpack.c.l.b16 %v443
    %v576 = vunpack.c.l.b16 %v444
    %v577 = vunpack.c.l.b16 %v445
    %v578 = vunpack.c.l.b16 %v446
    %v579 = vunpack.c.l.b16 %v447
    %v580 = vunpack.c.l.b16 %v448
    %v581 = vunpack.c.l.b16 %v449
    %v582 = vunpack.c.l.b16 %v450
    %v583 = vunpack.c.l.b16 %v451
    %v584 = vunpack.c.l.b16 %v452
    %v585 = vunpack.c.l.b16 %v453
    %v586 = vunpack.c.l.b16 %v454
    %v587 = vunpack.c.l.b16 %v455
    %v588 = vunpack.c.l.b16 %v456
    %v589 = vunpack.c.l.b16 %v457
    %v590 = vunpack.c.l.b16 %v458
    %v591 = vunpack.c.l.b16 %v459
    %v592 = vunpack.c.l.b16 %v460
    %v593 = vunpack.c.l.b16 %v461
    %v594 = vunpack.c.l.b16 %v462
    %v595 = vunpack.c.l.b16 %v463
    %v596 = vpack.c.b16 %v533, %v532
    %v597 = vpack.c.b16 %v535, %v534
    %v598 = vpack.c.b16 %v537, %v536
    %v599 = vpack.c.b16 %v539, %v538
    %v600 = vpack.c.b16 %v541, %v540
    %v601 = vpack.c.b16 %v543, %v542
    %v602 = vpack.c.b16 %v545, %v544
    %v603 = vpack.c.b16 %v547, %v546
    %v604 = vpack.c.b16 %v549, %v548
    %v605 = vpack.c.b16 %v551, %v550
    %v606 = vpack.c.b16 %v553, %v552
    %v607 = vpack.c.b16 %v555, %v554
    %v608 = vpack.c.b16 %v557, %v556
    %v609 = vpack.c.b16 %v559, %v558
    %v610 = vpack.c.b16 %v561, %v560
    %v611 = vpack.c.b16 %v563, %v562
    %v612 = vpack.c.b16 %v565, %v564
    %v613 = vpack.c.b16 %v567, %v566
    %v614 = vpack.c.b16 %v569, %v568
    %v615 = vpack.c.b16 %v571, %v570
    %v616 = vpack.c.b16 %v573, %v572
    %v617 = vpack.c.b16 %v575, %v574
    %v618 = vpack.c.b16 %v577, %v576
    %v619 = vpack.c.b16 %v579, %v578
    %v620 = vpack.c.b16 %v581, %v580
    %v621 = vpack.c.b16 %v583, %v582
    %v622 = vpack.c.b16 %v585, %v584
    %v623 = vpack.c.b16 %v587, %v586
    %v624 = vpack.c.b16 %v589, %v588
    %v625 = vpack.c.b16 %v591, %v590
    %v626 = vpack.c.b16 %v593, %v592
    %v627 = vpack.c.b16 %v595, %v594
    %660 = vmatpush.bf16.msra.mxu0 %v603
    %661 = vmatpush.bf16.msra.mxu0 %v602
    %662 = vmatpush.bf16.msra.mxu0 %v601
    %663 = vmatpush.bf16.msra.mxu0 %v600
    %664 = vmatpush.bf16.msra.mxu0 %v599
    %665 = vmatpush.bf16.msra.mxu0 %v598
    %666 = vmatpush.bf16.msra.mxu0 %v597
    %667 = vmatpush.bf16.msra.mxu0 %v596
    %668 = vmatmul.bf16.gmra.mxu0 %v396
    %v669 = vpop.f32.mrf.mxu0
    %v670 = vadd.f32 %v466, %v669
    %v671 = vpop.f32.mrf.mxu0
    %v672 = vadd.f32 %v466, %v671
    %673 = vdwg.mxu0
    %674 = vmatpush.bf16.msra.mxu0 %v611
    %675 = vmatpush.bf16.msra.mxu0 %v610
    %676 = vmatpush.bf16.msra.mxu0 %v609
    %677 = vmatpush.bf16.msra.mxu0 %v608
    %678 = vmatpush.bf16.msra.mxu0 %v607
    %679 = vmatpush.bf16.msra.mxu0 %v606
    %680 = vmatpush.bf16.msra.mxu0 %v605
    %681 = vmatpush.bf16.msra.mxu0 %v604
    %682 = vmatmul.bf16.gmra.mxu0 %v397
    %v683 = vpop.f32.mrf.mxu0
    %v684 = vadd.f32 %v670, %v683
    %v685 = vpop.f32.mrf.mxu0
    %v686 = vadd.f32 %v672, %v685
    %687 = vdwg.mxu0
    %688 = vmatpush.bf16.msra.mxu0 %v619
    %689 = vmatpush.bf16.msra.mxu0 %v618
    %690 = vmatpush.bf16.msra.mxu0 %v617
    %691 = vmatpush.bf16.msra.mxu0 %v616
    %692 = vmatpush.bf16.msra.mxu0 %v615
    %693 = vmatpush.bf16.msra.mxu0 %v614
    %694 = vmatpush.bf16.msra.mxu0 %v613
    %695 = vmatpush.bf16.msra.mxu0 %v612
    %696 = vmatmul.bf16.gmra.mxu0 %v398
    %v697 = vpop.f32.mrf.mxu0
    %v698 = vadd.f32 %v684, %v697
    %v699 = vpop.f32.mrf.mxu0
    %v700 = vadd.f32 %v686, %v699
    %701 = vdwg.mxu0
    %702 = vmatpush.bf16.msra.mxu0 %v627
    %703 = vmatpush.bf16.msra.mxu0 %v626
    %704 = vmatpush.bf16.msra.mxu0 %v625
    %705 = vmatpush.bf16.msra.mxu0 %v624
    %706 = vmatpush.bf16.msra.mxu0 %v623
    %707 = vmatpush.bf16.msra.mxu0 %v622
    %708 = vmatpush.bf16.msra.mxu0 %v621
    %709 = vmatpush.bf16.msra.mxu0 %v620
    %710 = vmatmul.bf16.gmra.mxu0 %v399
    %v711 = vpop.f32.mrf.mxu0
    %v712 = vadd.f32 %v698, %v711
    %v713 = vpop.f32.mrf.mxu0
    %v714 = vadd.f32 %v700, %v713
    %715 = vdwg.mxu0
    %v716 = vunpack.c.l.bf16 %v58
    %v717 = vunpack.c.l.bf16 %v59
    %v718 = vadd.f32 %v712, %v716
    %v719 = vadd.f32 %v714, %v717
    %720 = vadd.xlane.f32.xlu0 %v718
    %v721 = vpop.xlane.xlu0 %720
    %722 = vadd.xlane.f32.xlu0 %v719
    %v723 = vpop.xlane.xlu0 %722
    %v724 = vrcp.pop 128.0
    %v725 = vmul.f32 128.0, %v724
    %v726 = vsub.f32 1.0, %v725
    %v727 = vmul.f32 %v724, %v726
    %v728 = vadd.f32 %v724, %v727
    %vm729 = vweird.f32 %v724
    %v730 = vsel %vm729, %v724, %v728
    %v731 = vmul.f32 %v721, %v730
    %v732 = vmul.f32 %v723, %v730
    %v733 = vsub.f32 %v718, %v731
    %v734 = vsub.f32 %v719, %v732
    %v735 = vmul.f32 %v733, %v733
    %v736 = vmul.f32 %v734, %v734
    %737 = vadd.xlane.f32.xlu0 %v735
    %v738 = vpop.xlane.xlu0 %737
    %739 = vadd.xlane.f32.xlu0 %v736
    %v740 = vpop.xlane.xlu0 %739
    %v741 = vmul.f32 %v738, %v730
    %v742 = vmul.f32 %v740, %v730
    %v743 = vadd.f32 %v741, 1e-12
    %v744 = vadd.f32 %v742, 1e-12
    %v745 = vrsqrt.pop %v743
    %v746 = vmul.f32 %v745, %v743
    %v747 = vmul.f32 %v746, %v745
    %v748 = vmul.f32 0.5, %v747
    %v749 = vsub.f32 1.5, %v748
    %v750 = vmul.f32 %v745, %v749
    %vm751 = vweird.f32 %v743
    %vm752 = vweird.f32 %v745
    %vm753 = vmor %vm751, %vm752
    %v754 = vsel %vm753, %v745, %v750
    %v755 = vrsqrt.pop %v744
    %v756 = vmul.f32 %v755, %v744
    %v757 = vmul.f32 %v756, %v755
    %v758 = vmul.f32 0.5, %v757
    %v759 = vsub.f32 1.5, %v758
    %v760 = vmul.f32 %v755, %v759
    %vm761 = vweird.f32 %v744
    %vm762 = vweird.f32 %v755
    %vm763 = vmor %vm761, %vm762
    %v764 = vsel %vm763, %v755, %v760
    %v765 = vmul.f32 %v733, %v754
    %v766 = vmul.f32 %v734, %v764
    %v767 = vld [vmem:[%s5] sm:$0x1]
    %v769 = vperm.slane %v767, 0
    %v771 = vmul.f32 %v765, %v769
    %v772 = vmul.f32 %v766, %v769
    %v773 = vld [vmem:[%s6] sm:$0x1]
    %v775 = vperm.slane %v773, 0
    %v777 = vadd.f32 %v771, %v775
    %v778 = vadd.f32 %v772, %v775
    %v779 = vpack.c.bf16 %v777, %v777
    %v780 = vpack.c.bf16 %v778, %v778
    %781 = vst [vmem:[%s7] sm:$0xf] %v779
    %782 = vst [vmem:[%s7 + $0x4] sm:$0xf] %v780
    // Predicated region
    $region38: #{bert_classifier_forward.18} parent=1 // pred_check
      _
    $region39: #{bert_classifier_forward.18} parent=1 // pred_check_branch
      %784 = sbr.rel (0) target = $region41
    $region40: #{bert_classifier_forward.18} parent=1 // pred_region
      _
    $region41: #{bert_classifier_forward.18} parent=1 // pred_fallthru
      _
    // Predicated region
    $region42: #{bert_classifier_forward.18} parent=1 // pred_check
      _
    $region43: #{bert_classifier_forward.18} parent=1 // pred_check_branch
      %786 = sbr.rel (0) target = $region45
    $region44: #{bert_classifier_forward.18} parent=1 // pred_region
      _
    $region45: #{bert_classifier_forward.18} parent=1 // pred_fallthru
      _
    %787 = vsyncpa [#allocation3], 1
    %788 = vsyncpa [#allocation5], 1

</llo_original>
